<compile_context>
chip_gen: v5e
topology: v5e:2x2
jax: 0.10.0
libtpu: 0.0.40
codegen_flags: <defaults>
</compile_context>

<pallas_src>
import functools

import jax
import jax.numpy as jnp
from jax import lax
from jax.experimental import pallas as pl
from jax.experimental.pallas import tpu as pltpu


def encoder_layer_kernel(x_ref, ln_w_ref, ln_b_ref,
                         wqkv_ref, bqkv_ref, wproj_ref, bproj_ref,
                         w1_ref, b1_ref, w2_ref, b2_ref,
                         o_ref, *, num_heads, head_dims, eps, inv_n):
    _, N, Dp = x_ref.shape
    H, hd = num_heads, head_dims           # H includes zero "dummy" heads from padding

    x = x_ref[0]                            # (N, Dp) f32 (padded lanes are zero)

    def layer_norm(y):
        # nn.LayerNorm((N, D)): joint normalization over all TRUE N*D elements.
        # Padded lanes of y are zero and the padded ln_w/ln_b entries are zero, so
        # single-pass sums over the padded block equal the true sums; inv_n = 1/(N*D).
        s = jnp.sum(y)
        ss = jnp.sum(y * y)
        mu = s * inv_n
        var = ss * inv_n - mu * mu
        return (y - mu) * lax.rsqrt(var + eps) * ln_w_ref[...] + ln_b_ref[...]

    # ---------------- MSA branch ----------------
    x_norm = layer_norm(x)                                              # (N, Dp) f32

    # Standard-layout QKV projection (lane-dense bias row), one MXU dispatch.
    qkv = jnp.dot(x_norm.astype(jnp.bfloat16), wqkv_ref[...],
                  preferred_element_type=jnp.float32) + bqkv_ref[...]   # (N, 3*Dp) f32

    # One transpose, then the head axis peels off the sublane dim for free (hd == 8).
    qkv_t = qkv.T                                                       # (3*Dp, N) f32
    q_t = qkv_t[0 * Dp:1 * Dp].reshape(H, hd, N).astype(jnp.bfloat16)   # (H, hd, N)
    k = jnp.swapaxes(qkv_t[1 * Dp:2 * Dp].reshape(H, hd, N), 1, 2)      # (H, N, hd)
    k = k.astype(jnp.bfloat16)
    v_t = qkv_t[2 * Dp:3 * Dp].reshape(H, hd, N).astype(jnp.bfloat16)   # (H, hd, N)

    # scores[h, i, j] = k_h[i] . q_h[j]   (single head-batched matmul)
    sc = jnp.einsum('hid,hdj->hij', k, q_t,
                    preferred_element_type=jnp.float32)                 # (H, N, N) f32
    sc = sc - jnp.max(sc, axis=-1, keepdims=True)
    e = jnp.exp(sc)
    p = e * pl.reciprocal(jnp.sum(e, axis=-1, keepdims=True), approx=True)

    # out^T[h, d, i] = sum_j v_h[j, d] * attn_h[i, j]   (head-batched)
    out_t = jnp.einsum('hdj,hij->hdi', v_t, p.astype(jnp.bfloat16),
                       preferred_element_type=jnp.float32)              # (H, hd, N) f32

    msa = out_t.reshape(Dp, N).T                                        # (N, Dp)
    # The module's softmax(...) * scale is folded into wproj (scalar, exact).
    msa = jnp.dot(msa.astype(jnp.bfloat16), wproj_ref[...],
                  preferred_element_type=jnp.float32) + bproj_ref[...]
    out_msa = msa + x

    # ---------------- MLP branch ----------------
    y = layer_norm(out_msa)
    h1 = jnp.maximum(
        jnp.dot(y.astype(jnp.bfloat16), w1_ref[...],
                preferred_element_type=jnp.float32) + b1_ref[...], 0.0)
    # nn.Dropout() == identity in eval-mode forward.
    h2 = jnp.maximum(
        jnp.dot(h1.astype(jnp.bfloat16), w2_ref[...],
                preferred_element_type=jnp.float32) + b2_ref[...], 0.0)

    o_ref[0] = (h2 + out_msa).astype(o_ref.dtype)


def _round_up(v, m):
    return (v + m - 1) // m * m


def transformer_encoder_layer(x, params, *, num_heads, eps=1e-5):
    ln_w, ln_b, wqkv, bqkv, wproj, bproj, w1, b1, w2, b2 = params
    B, N, D = x.shape
    assert D % num_heads == 0
    hd = D // num_heads
    scale = hd ** (-0.5)

    LANE = 128
    Dp = _round_up(D, LANE)          # 96 -> 128 (lane-dense)
    assert Dp % hd == 0
    Hp = Dp // hd                    # 12 real heads + 4 all-zero dummy heads
    Dm = w1.shape[1]                 # MLP hidden (= 4*D = 384, already lane-aligned)
    Dmp = _round_up(Dm, LANE)

    f32, bf16 = jnp.float32, jnp.bfloat16

    # -------- zero-padded, lane-dense parameters (padded entries are exactly zero) --------
    x_p = jnp.zeros((B, N, Dp), f32).at[:, :, :D].set(x.astype(f32))
    ln_w_p = jnp.zeros((N, Dp), f32).at[:, :D].set(ln_w.astype(f32))
    ln_b_p = jnp.zeros((N, Dp), f32).at[:, :D].set(ln_b.astype(f32))

    # qkv weight/bias: each of the q | k | v column sections padded D -> Dp separately,
    # so the padded feature slots become whole zero "dummy" heads.
    wqkv_p = jnp.zeros((Dp, 3 * Dp), f32)
    bqkv_p = jnp.zeros((1, 3 * Dp), f32)
    for s in range(3):
        wqkv_p = wqkv_p.at[:D, s * Dp:s * Dp + D].set(wqkv[:, s * D:(s + 1) * D])
        bqkv_p = bqkv_p.at[:, s * Dp:s * Dp + D].set(bqkv[:, s * D:(s + 1) * D])

    wproj_p = jnp.zeros((Dp, Dp), f32).at[:D, :D].set(wproj * scale)   # scale folded in
    bproj_p = jnp.zeros((1, Dp), f32).at[:, :D].set(bproj)
    w1_p = jnp.zeros((Dp, Dmp), f32).at[:D, :Dm].set(w1)
    b1_p = jnp.zeros((1, Dmp), f32).at[:, :Dm].set(b1)
    w2_p = jnp.zeros((Dmp, Dp), f32).at[:Dm, :D].set(w2)
    b2_p = jnp.zeros((1, Dp), f32).at[:, :D].set(b2)

    kernel = functools.partial(encoder_layer_kernel, num_heads=Hp, head_dims=hd,
                               eps=eps, inv_n=1.0 / float(N * D))

    def whole(shape):
        return pl.BlockSpec(shape, lambda g, _n=len(shape): (0,) * _n)

    # One batch row per grid step: the grid software-pipeline overlaps the (1,N,Dp)
    # x / out DMAs with compute, and the "parallel" axis shards rows across TensorCores
    # on megacore chips.  Weights are constant-index blocks (fetched once).
    out_p = pl.pallas_call(
        kernel,
        out_shape=jax.ShapeDtypeStruct((B, N, Dp), f32),
        grid=(B,),
        in_specs=[
            pl.BlockSpec((1, N, Dp), lambda g: (g, 0, 0)),   # x row
            whole((N, Dp)), whole((N, Dp)),                  # shared LN weight / bias
            whole((Dp, 3 * Dp)), whole((1, 3 * Dp)),         # qkv W / b
            whole((Dp, Dp)), whole((1, Dp)),                 # proj W (scale folded) / b
            whole((Dp, Dmp)), whole((1, Dmp)),               # mlp W1 / b1
            whole((Dmp, Dp)), whole((1, Dp)),                # mlp W2 / b2
        ],
        out_specs=pl.BlockSpec((1, N, Dp), lambda g: (g, 0, 0)),
        compiler_params=pltpu.CompilerParams(
            dimension_semantics=("parallel",)),
    )(x_p, ln_w_p, ln_b_p, wqkv_p.astype(bf16), bqkv_p,
      wproj_p.astype(bf16), bproj_p, w1_p.astype(bf16), b1_p,
      w2_p.astype(bf16), b2_p)

    return out_p[:, :, :D].astype(x.dtype)


def reference_forward(x, params, *, num_heads):
    """Pure-JAX f32 reference with the PyTorch module's semantics."""
    ln_w, ln_b, wqkv, bqkv, wproj, bproj, w1, b1, w2, b2 = params
    B, N, D = x.shape
    hd = D // num_heads
    scale = hd ** (-0.5)

    def ln(y):
        mu = jnp.mean(y, axis=(1, 2), keepdims=True)
        var = jnp.mean((y - mu) ** 2, axis=(1, 2), keepdims=True)
        return (y - mu) / jnp.sqrt(var + 1e-5) * ln_w + ln_b

    xn = ln(x)
    qkv = xn @ wqkv + bqkv[0]
    qkv = qkv.reshape(B, N, 3, num_heads, hd).transpose(2, 0, 3, 1, 4)
    q, k, v = qkv[0], qkv[1], qkv[2]
    attn = jax.nn.softmax(jnp.einsum('bhid,bhjd->bhij', k, q), axis=-1) * scale
    out = jnp.einsum('bhij,bhjd->bhid', attn, v)
    out = out.transpose(0, 2, 1, 3).reshape(B, N, D)
    out = out @ wproj + bproj[0]
    out_msa = out + x
    y = ln(out_msa)
    h1 = jax.nn.relu(y @ w1 + b1[0])
    h2 = jax.nn.relu(h1 @ w2 + b2[0])
    return h2 + out_msa


if __name__ == "__main__":
    # Small config consistent with the module constructor math.
    B = 2
    img_shape, patch_size = 32, 8
    num_patch = (img_shape // patch_size) ** 2       # 16
    N = 1 + num_patch                                # 17
    D = 96                                           # hidden_dims
    num_heads = 12                                   # head_dims = 8
    ratio = 4

    key = jax.random.PRNGKey(0)
    ks = jax.random.split(key, 11)

    x = jax.random.normal(ks[0], (B, N, D), dtype=jnp.float32)

    ln_w  = 1.0 + 0.1 * jax.random.normal(ks[1], (N, D), dtype=jnp.float32)
    ln_b  = 0.1 * jax.random.normal(ks[2], (N, D), dtype=jnp.float32)
    wqkv  = 0.02 * jax.random.normal(ks[3], (D, 3 * D), dtype=jnp.float32)
    bqkv  = 0.01 * jax.random.normal(ks[4], (1, 3 * D), dtype=jnp.float32)
    wproj = 0.02 * jax.random.normal(ks[5], (D, D), dtype=jnp.float32)
    bproj = 0.01 * jax.random.normal(ks[6], (1, D), dtype=jnp.float32)
    w1    = 0.02 * jax.random.normal(ks[7], (D, ratio * D), dtype=jnp.float32)
    b1    = 0.01 * jax.random.normal(ks[8], (1, ratio * D), dtype=jnp.float32)
    w2    = 0.02 * jax.random.normal(ks[9], (ratio * D, D), dtype=jnp.float32)
    b2    = 0.01 * jax.random.normal(ks[10], (1, D), dtype=jnp.float32)

    params = (ln_w, ln_b, wqkv, bqkv, wproj, bproj, w1, b1, w2, b2)

    out = jax.block_until_ready(
        transformer_encoder_layer(x, params, num_heads=num_heads))
    ref = jax.block_until_ready(
        reference_forward(x, params, num_heads=num_heads))

    assert out.shape == (B, N, D)
    # Tolerance sized for bf16 matmul operands (~2^-8 relative) vs. the f32 reference;
    # LN / softmax / accumulation are f32 in both.
    assert jnp.allclose(out, ref, atol=5e-3, rtol=5e-3), (
        f"max abs diff {jnp.max(jnp.abs(out - ref))}")

    print("KERNEL_OK")
</pallas_src>

<mosaic_0001>
module attributes {stable_mosaic.version = 11 : i64} {
  func.func @encoder_layer_kernel(%arg0: i32, %arg1: memref<1x17x128xf32, #tpu.memory_space<vmem>>, %arg2: memref<17x128xf32, #tpu.memory_space<vmem>>, %arg3: memref<17x128xf32, #tpu.memory_space<vmem>>, %arg4: memref<128x384xbf16, #tpu.memory_space<vmem>>, %arg5: memref<1x384xf32, #tpu.memory_space<vmem>>, %arg6: memref<128x128xbf16, #tpu.memory_space<vmem>>, %arg7: memref<1x128xf32, #tpu.memory_space<vmem>>, %arg8: memref<128x384xbf16, #tpu.memory_space<vmem>>, %arg9: memref<1x384xf32, #tpu.memory_space<vmem>>, %arg10: memref<384x128xbf16, #tpu.memory_space<vmem>>, %arg11: memref<1x128xf32, #tpu.memory_space<vmem>>, %arg12: memref<1x17x128xf32, #tpu.memory_space<vmem>>) attributes {dimension_semantics = [#tpu.dimension_semantics<parallel>], iteration_bounds = array<i64: 2>, scalar_prefetch = 0 : i64, scratch_operands = 0 : i64, tpu.core_type = #tpu.core_type<tc>, window_params = [{transform_indices = @transform_0, window_bounds = array<i64: 1, 17, 128>}, {pipeline_mode = #tpu.pipeline_mode<synchronous>, transform_indices = @transform_1, window_bounds = array<i64: 17, 128>}, {pipeline_mode = #tpu.pipeline_mode<synchronous>, transform_indices = @transform_2, window_bounds = array<i64: 17, 128>}, {pipeline_mode = #tpu.pipeline_mode<synchronous>, transform_indices = @transform_3, window_bounds = array<i64: 128, 384>}, {pipeline_mode = #tpu.pipeline_mode<synchronous>, transform_indices = @transform_4, window_bounds = array<i64: 1, 384>}, {pipeline_mode = #tpu.pipeline_mode<synchronous>, transform_indices = @transform_5, window_bounds = array<i64: 128, 128>}, {pipeline_mode = #tpu.pipeline_mode<synchronous>, transform_indices = @transform_6, window_bounds = array<i64: 1, 128>}, {pipeline_mode = #tpu.pipeline_mode<synchronous>, transform_indices = @transform_7, window_bounds = array<i64: 128, 384>}, {pipeline_mode = #tpu.pipeline_mode<synchronous>, transform_indices = @transform_8, window_bounds = array<i64: 1, 384>}, {pipeline_mode = #tpu.pipeline_mode<synchronous>, transform_indices = @transform_9, window_bounds = array<i64: 384, 128>}, {pipeline_mode = #tpu.pipeline_mode<synchronous>, transform_indices = @transform_10, window_bounds = array<i64: 1, 128>}, {transform_indices = @transform_11, window_bounds = array<i64: 1, 17, 128>}]} {
    %c0 = arith.constant 0 : index
    %c0_0 = arith.constant 0 : index
    %c0_1 = arith.constant 0 : index
    %0 = vector.load %arg1[%c0, %c0_0, %c0_1] : memref<1x17x128xf32, #tpu.memory_space<vmem>>, vector<1x17x128xf32>
    %1 = vector.shape_cast %0 : vector<1x17x128xf32> to vector<17x128xf32>
    %2 = vector.shape_cast %1 : vector<17x128xf32> to vector<1x17x128xf32>
    %cst = arith.constant dense<0.000000e+00> : vector<1xf32>
    %3 = vector.multi_reduction <add>, %2, %cst [1, 2] : vector<1x17x128xf32> to vector<1xf32>
    %4 = vector.shape_cast %3 : vector<1xf32> to vector<1x1x1xf32>
    %5 = vector.extract %4[0, 0, 0] : f32 from vector<1x1x1xf32>
    %6 = arith.mulf %1, %1 : vector<17x128xf32>
    %7 = vector.shape_cast %6 : vector<17x128xf32> to vector<1x17x128xf32>
    %cst_2 = arith.constant dense<0.000000e+00> : vector<1xf32>
    %8 = vector.multi_reduction <add>, %7, %cst_2 [1, 2] : vector<1x17x128xf32> to vector<1xf32>
    %9 = vector.shape_cast %8 : vector<1xf32> to vector<1x1x1xf32>
    %10 = vector.extract %9[0, 0, 0] : f32 from vector<1x1x1xf32>
    %cst_3 = arith.constant 6.1274512E-4 : f32
    %11 = arith.mulf %5, %cst_3 : f32
    %cst_4 = arith.constant 6.1274512E-4 : f32
    %12 = arith.mulf %10, %cst_4 : f32
    %13 = arith.mulf %11, %11 : f32
    %14 = arith.subf %12, %13 : f32
    %15 = vector.broadcast %11 : f32 to vector<17x128xf32>
    %16 = arith.subf %1, %15 : vector<17x128xf32>
    %cst_5 = arith.constant 9.99999974E-6 : f32
    %17 = arith.addf %14, %cst_5 : f32
    %18 = math.rsqrt %17 : f32
    %19 = vector.broadcast %18 : f32 to vector<17x128xf32>
    %20 = arith.mulf %16, %19 : vector<17x128xf32>
    %c0_6 = arith.constant 0 : index
    %c0_7 = arith.constant 0 : index
    %21 = vector.load %arg2[%c0_6, %c0_7] : memref<17x128xf32, #tpu.memory_space<vmem>>, vector<17x128xf32>
    %22 = arith.mulf %20, %21 : vector<17x128xf32>
    %c0_8 = arith.constant 0 : index
    %c0_9 = arith.constant 0 : index
    %23 = vector.load %arg3[%c0_8, %c0_9] : memref<17x128xf32, #tpu.memory_space<vmem>>, vector<17x128xf32>
    %24 = arith.addf %22, %23 : vector<17x128xf32>
    %25 = arith.truncf %24 : vector<17x128xf32> to vector<17x128xbf16>
    %c0_10 = arith.constant 0 : index
    %c0_11 = arith.constant 0 : index
    %26 = vector.load %arg4[%c0_10, %c0_11] : memref<128x384xbf16, #tpu.memory_space<vmem>>, vector<128x384xbf16>
    %cst_12 = arith.constant dense<0.000000e+00> : vector<17x384xf32>
    %27 = tpu.matmul %25, %26, %cst_12 {dimension_numbers = #tpu.dot_dimension_numbers<[1], [0], [0], [1], [0, 0, 1, 1], [], []>} : vector<17x128xbf16>, vector<128x384xbf16>, vector<17x384xf32> -> vector<17x384xf32>
    %c0_13 = arith.constant 0 : index
    %c0_14 = arith.constant 0 : index
    %28 = vector.load %arg5[%c0_13, %c0_14] : memref<1x384xf32, #tpu.memory_space<vmem>>, vector<1x384xf32>
    %29 = vector.broadcast %28 : vector<1x384xf32> to vector<17x384xf32>
    %30 = arith.addf %27, %29 : vector<17x384xf32>
    %31 = tpu.transpose %30, [1, 0] : vector<17x384xf32> -> vector<384x17xf32>
    %32 = vector.extract_strided_slice %31 {offsets = [0, 0], sizes = [128, 17], strides = [1, 1]} : vector<384x17xf32> to vector<128x17xf32>
    %33 = vector.shape_cast %32 : vector<128x17xf32> to vector<16x8x17xf32>
    %34 = arith.truncf %33 : vector<16x8x17xf32> to vector<16x8x17xbf16>
    %35 = vector.extract_strided_slice %31 {offsets = [128, 0], sizes = [128, 17], strides = [1, 1]} : vector<384x17xf32> to vector<128x17xf32>
    %36 = vector.shape_cast %35 : vector<128x17xf32> to vector<16x8x17xf32>
    %37 = tpu.transpose %36, [0, 2, 1] : vector<16x8x17xf32> -> vector<16x17x8xf32>
    %38 = arith.truncf %37 : vector<16x17x8xf32> to vector<16x17x8xbf16>
    %39 = vector.extract_strided_slice %31 {offsets = [256, 0], sizes = [128, 17], strides = [1, 1]} : vector<384x17xf32> to vector<128x17xf32>
    %40 = vector.shape_cast %39 : vector<128x17xf32> to vector<16x8x17xf32>
    %41 = arith.truncf %40 : vector<16x8x17xf32> to vector<16x8x17xbf16>
    "tpu.trace_start"() <{level = 10 : i32, message = "hid,hdj->hij"}> : () -> ()
    %cst_15 = arith.constant dense<0.000000e+00> : vector<16x17x17xf32>
    %42 = tpu.matmul %38, %34, %cst_15 {dimension_numbers = #tpu.dot_dimension_numbers<[2], [1], [1], [2], [0, 0, 0, 1, 1, 2], [0], [0]>} : vector<16x17x8xbf16>, vector<16x8x17xbf16>, vector<16x17x17xf32> -> vector<16x17x17xf32>
    "tpu.trace_stop"() : () -> ()
    %cst_16 = arith.constant dense<0xFF800000> : vector<16x17xf32>
    %43 = vector.multi_reduction <maximumf>, %42, %cst_16 [2] : vector<16x17x17xf32> to vector<16x17xf32>
    %44 = vector.shape_cast %43 : vector<16x17xf32> to vector<16x17x1xf32>
    %45 = vector.broadcast %44 : vector<16x17x1xf32> to vector<16x17x17xf32>
    %46 = arith.subf %42, %45 : vector<16x17x17xf32>
    %47 = math.exp %46 : vector<16x17x17xf32>
    %cst_17 = arith.constant dense<0.000000e+00> : vector<16x17xf32>
    %48 = vector.multi_reduction <add>, %47, %cst_17 [2] : vector<16x17x17xf32> to vector<16x17xf32>
    %49 = vector.shape_cast %48 : vector<16x17xf32> to vector<16x17x1xf32>
    %50 = tpu.reciprocal %49 {approx = true} : vector<16x17x1xf32> -> vector<16x17x1xf32>
    %51 = vector.broadcast %50 : vector<16x17x1xf32> to vector<16x17x17xf32>
    %52 = arith.mulf %47, %51 : vector<16x17x17xf32>
    %53 = arith.truncf %52 : vector<16x17x17xf32> to vector<16x17x17xbf16>
    "tpu.trace_start"() <{level = 10 : i32, message = "hdj,hij->hdi"}> : () -> ()
    %cst_18 = arith.constant dense<0.000000e+00> : vector<16x8x17xf32>
    %54 = tpu.matmul %41, %53, %cst_18 {dimension_numbers = #tpu.dot_dimension_numbers<[2], [2], [1], [1], [0, 0, 0, 1, 1, 1], [0], [0]>} : vector<16x8x17xbf16>, vector<16x17x17xbf16>, vector<16x8x17xf32> -> vector<16x8x17xf32>
    "tpu.trace_stop"() : () -> ()
    %55 = vector.shape_cast %54 : vector<16x8x17xf32> to vector<128x17xf32>
    %56 = tpu.transpose %55, [1, 0] : vector<128x17xf32> -> vector<17x128xf32>
    %57 = arith.truncf %56 : vector<17x128xf32> to vector<17x128xbf16>
    %c0_19 = arith.constant 0 : index
    %c0_20 = arith.constant 0 : index
    %58 = vector.load %arg6[%c0_19, %c0_20] : memref<128x128xbf16, #tpu.memory_space<vmem>>, vector<128x128xbf16>
    %cst_21 = arith.constant dense<0.000000e+00> : vector<17x128xf32>
    %59 = tpu.matmul %57, %58, %cst_21 {dimension_numbers = #tpu.dot_dimension_numbers<[1], [0], [0], [1], [0, 0, 1, 1], [], []>} : vector<17x128xbf16>, vector<128x128xbf16>, vector<17x128xf32> -> vector<17x128xf32>
    %c0_22 = arith.constant 0 : index
    %c0_23 = arith.constant 0 : index
    %60 = vector.load %arg7[%c0_22, %c0_23] : memref<1x128xf32, #tpu.memory_space<vmem>>, vector<1x128xf32>
    %61 = vector.broadcast %60 : vector<1x128xf32> to vector<17x128xf32>
    %62 = arith.addf %59, %61 : vector<17x128xf32>
    %63 = arith.addf %62, %1 : vector<17x128xf32>
    %64 = vector.shape_cast %63 : vector<17x128xf32> to vector<1x17x128xf32>
    %cst_24 = arith.constant dense<0.000000e+00> : vector<1xf32>
    %65 = vector.multi_reduction <add>, %64, %cst_24 [1, 2] : vector<1x17x128xf32> to vector<1xf32>
    %66 = vector.shape_cast %65 : vector<1xf32> to vector<1x1x1xf32>
    %67 = vector.extract %66[0, 0, 0] : f32 from vector<1x1x1xf32>
    %68 = arith.mulf %63, %63 : vector<17x128xf32>
    %69 = vector.shape_cast %68 : vector<17x128xf32> to vector<1x17x128xf32>
    %cst_25 = arith.constant dense<0.000000e+00> : vector<1xf32>
    %70 = vector.multi_reduction <add>, %69, %cst_25 [1, 2] : vector<1x17x128xf32> to vector<1xf32>
    %71 = vector.shape_cast %70 : vector<1xf32> to vector<1x1x1xf32>
    %72 = vector.extract %71[0, 0, 0] : f32 from vector<1x1x1xf32>
    %cst_26 = arith.constant 6.1274512E-4 : f32
    %73 = arith.mulf %67, %cst_26 : f32
    %cst_27 = arith.constant 6.1274512E-4 : f32
    %74 = arith.mulf %72, %cst_27 : f32
    %75 = arith.mulf %73, %73 : f32
    %76 = arith.subf %74, %75 : f32
    %77 = vector.broadcast %73 : f32 to vector<17x128xf32>
    %78 = arith.subf %63, %77 : vector<17x128xf32>
    %cst_28 = arith.constant 9.99999974E-6 : f32
    %79 = arith.addf %76, %cst_28 : f32
    %80 = math.rsqrt %79 : f32
    %81 = vector.broadcast %80 : f32 to vector<17x128xf32>
    %82 = arith.mulf %78, %81 : vector<17x128xf32>
    %c0_29 = arith.constant 0 : index
    %c0_30 = arith.constant 0 : index
    %83 = vector.load %arg2[%c0_29, %c0_30] : memref<17x128xf32, #tpu.memory_space<vmem>>, vector<17x128xf32>
    %84 = arith.mulf %82, %83 : vector<17x128xf32>
    %c0_31 = arith.constant 0 : index
    %c0_32 = arith.constant 0 : index
    %85 = vector.load %arg3[%c0_31, %c0_32] : memref<17x128xf32, #tpu.memory_space<vmem>>, vector<17x128xf32>
    %86 = arith.addf %84, %85 : vector<17x128xf32>
    %87 = arith.truncf %86 : vector<17x128xf32> to vector<17x128xbf16>
    %c0_33 = arith.constant 0 : index
    %c0_34 = arith.constant 0 : index
    %88 = vector.load %arg8[%c0_33, %c0_34] : memref<128x384xbf16, #tpu.memory_space<vmem>>, vector<128x384xbf16>
    %cst_35 = arith.constant dense<0.000000e+00> : vector<17x384xf32>
    %89 = tpu.matmul %87, %88, %cst_35 {dimension_numbers = #tpu.dot_dimension_numbers<[1], [0], [0], [1], [0, 0, 1, 1], [], []>} : vector<17x128xbf16>, vector<128x384xbf16>, vector<17x384xf32> -> vector<17x384xf32>
    %c0_36 = arith.constant 0 : index
    %c0_37 = arith.constant 0 : index
    %90 = vector.load %arg9[%c0_36, %c0_37] : memref<1x384xf32, #tpu.memory_space<vmem>>, vector<1x384xf32>
    %91 = vector.broadcast %90 : vector<1x384xf32> to vector<17x384xf32>
    %92 = arith.addf %89, %91 : vector<17x384xf32>
    %cst_38 = arith.constant 0.000000e+00 : f32
    %93 = vector.broadcast %cst_38 : f32 to vector<17x384xf32>
    %94 = arith.maximumf %92, %93 : vector<17x384xf32>
    %95 = arith.truncf %94 : vector<17x384xf32> to vector<17x384xbf16>
    %c0_39 = arith.constant 0 : index
    %c0_40 = arith.constant 0 : index
    %96 = vector.load %arg10[%c0_39, %c0_40] : memref<384x128xbf16, #tpu.memory_space<vmem>>, vector<384x128xbf16>
    %cst_41 = arith.constant dense<0.000000e+00> : vector<17x128xf32>
    %97 = tpu.matmul %95, %96, %cst_41 {dimension_numbers = #tpu.dot_dimension_numbers<[1], [0], [0], [1], [0, 0, 1, 1], [], []>} : vector<17x384xbf16>, vector<384x128xbf16>, vector<17x128xf32> -> vector<17x128xf32>
    %c0_42 = arith.constant 0 : index
    %c0_43 = arith.constant 0 : index
    %98 = vector.load %arg11[%c0_42, %c0_43] : memref<1x128xf32, #tpu.memory_space<vmem>>, vector<1x128xf32>
    %99 = vector.broadcast %98 : vector<1x128xf32> to vector<17x128xf32>
    %100 = arith.addf %97, %99 : vector<17x128xf32>
    %cst_44 = arith.constant 0.000000e+00 : f32
    %101 = vector.broadcast %cst_44 : f32 to vector<17x128xf32>
    %102 = arith.maximumf %100, %101 : vector<17x128xf32>
    %103 = arith.addf %102, %63 : vector<17x128xf32>
    %c0_45 = arith.constant 0 : index
    %c0_46 = arith.constant 0 : index
    %c0_47 = arith.constant 0 : index
    %104 = vector.load %arg12[%c0_45, %c0_46, %c0_47] : memref<1x17x128xf32, #tpu.memory_space<vmem>>, vector<1x17x128xf32>
    %105 = vector.shape_cast %104 : vector<1x17x128xf32> to vector<17x128xf32>
    %106 = vector.shape_cast %103 : vector<17x128xf32> to vector<1x17x128xf32>
    tpu.vector_store %arg12[%c0_45, %c0_46, %c0_47], %106 {strides = array<i32>} : memref<1x17x128xf32, #tpu.memory_space<vmem>>, vector<1x17x128xf32>,
    return
  }
  func.func @transform_0(%arg0: i32) -> (i32, i32, i32) {
    %c0_i32 = arith.constant 0 : i32
    %c0_i32_0 = arith.constant 0 : i32
    %c0_i32_1 = arith.constant 0 : i32
    return %arg0, %c0_i32, %c0_i32_0 : i32, i32, i32
  }
  func.func @transform_1(%arg0: i32) -> (i32, i32) {
    %c0_i32 = arith.constant 0 : i32
    %c0_i32_0 = arith.constant 0 : i32
    %c0_i32_1 = arith.constant 0 : i32
    return %c0_i32, %c0_i32_0 : i32, i32
  }
  func.func @transform_2(%arg0: i32) -> (i32, i32) {
    %c0_i32 = arith.constant 0 : i32
    %c0_i32_0 = arith.constant 0 : i32
    %c0_i32_1 = arith.constant 0 : i32
    return %c0_i32, %c0_i32_0 : i32, i32
  }
  func.func @transform_3(%arg0: i32) -> (i32, i32) {
    %c0_i32 = arith.constant 0 : i32
    %c0_i32_0 = arith.constant 0 : i32
    %c0_i32_1 = arith.constant 0 : i32
    return %c0_i32, %c0_i32_0 : i32, i32
  }
  func.func @transform_4(%arg0: i32) -> (i32, i32) {
    %c0_i32 = arith.constant 0 : i32
    %c0_i32_0 = arith.constant 0 : i32
    %c0_i32_1 = arith.constant 0 : i32
    return %c0_i32, %c0_i32_0 : i32, i32
  }
  func.func @transform_5(%arg0: i32) -> (i32, i32) {
    %c0_i32 = arith.constant 0 : i32
    %c0_i32_0 = arith.constant 0 : i32
    %c0_i32_1 = arith.constant 0 : i32
    return %c0_i32, %c0_i32_0 : i32, i32
  }
  func.func @transform_6(%arg0: i32) -> (i32, i32) {
    %c0_i32 = arith.constant 0 : i32
    %c0_i32_0 = arith.constant 0 : i32
    %c0_i32_1 = arith.constant 0 : i32
    return %c0_i32, %c0_i32_0 : i32, i32
  }
  func.func @transform_7(%arg0: i32) -> (i32, i32) {
    %c0_i32 = arith.constant 0 : i32
    %c0_i32_0 = arith.constant 0 : i32
    %c0_i32_1 = arith.constant 0 : i32
    return %c0_i32, %c0_i32_0 : i32, i32
  }
  func.func @transform_8(%arg0: i32) -> (i32, i32) {
    %c0_i32 = arith.constant 0 : i32
    %c0_i32_0 = arith.constant 0 : i32
    %c0_i32_1 = arith.constant 0 : i32
    return %c0_i32, %c0_i32_0 : i32, i32
  }
  func.func @transform_9(%arg0: i32) -> (i32, i32) {
    %c0_i32 = arith.constant 0 : i32
    %c0_i32_0 = arith.constant 0 : i32
    %c0_i32_1 = arith.constant 0 : i32
    return %c0_i32, %c0_i32_0 : i32, i32
  }
  func.func @transform_10(%arg0: i32) -> (i32, i32) {
    %c0_i32 = arith.constant 0 : i32
    %c0_i32_0 = arith.constant 0 : i32
    %c0_i32_1 = arith.constant 0 : i32
    return %c0_i32, %c0_i32_0 : i32, i32
  }
  func.func @transform_11(%arg0: i32) -> (i32, i32, i32) {
    %c0_i32 = arith.constant 0 : i32
    %c0_i32_0 = arith.constant 0 : i32
    %c0_i32_1 = arith.constant 0 : i32
    return %arg0, %c0_i32, %c0_i32_0 : i32, i32, i32
  }
}

</mosaic_0001>

<llo_original>
// kernel: tpu_custom_call.1
$region0: #{tpu_custom_call.1}
  #allocation0 [shape = 'u32[]', space=smem, size = 0x4, offset = 0x4, fixed_abs, tag = 'smem constant byte address 0x4 - core index']
  #allocation1 [shape = 'u32[72,128]{1,0:T(1,128)}', space=vmem, size = 0x9000, scoped, tag = 'internal scratch']
  %s0 = inlined_call_operand.vmem [shape: f32[2,17,128], index: 0, kind: input, shape index: {}]
  %s1 = inlined_call_operand.hbm [shape: f32[17,128], index: 1, kind: input, shape index: {}]
  %s2 = inlined_call_operand.hbm [shape: f32[17,128], index: 2, kind: input, shape index: {}]
  %s3 = inlined_call_operand.hbm [shape: bf16[128,384], index: 3, kind: input, shape index: {}]
  %s4 = inlined_call_operand.vmem [shape: f32[1,384], index: 4, kind: input, shape index: {}]
  %s5 = inlined_call_operand.vmem [shape: bf16[128,128], index: 5, kind: input, shape index: {}]
  %s6 = inlined_call_operand.vmem [shape: f32[1,128], index: 6, kind: input, shape index: {}]
  %s7 = inlined_call_operand.hbm [shape: bf16[128,384], index: 7, kind: input, shape index: {}]
  %s8 = inlined_call_operand.vmem [shape: f32[1,384], index: 8, kind: input, shape index: {}]
  %s9 = inlined_call_operand.hbm [shape: bf16[384,128], index: 9, kind: input, shape index: {}]
  %s10 = inlined_call_operand.vmem [shape: f32[1,128], index: 10, kind: input, shape index: {}]
  %s11 = inlined_call_operand.vmem [shape: f32[2,17,128], index: 11, kind: output, shape index: {}]
  %s12 = sld [smem:[#allocation0]]
  $region97: #{tpu_custom_call.1} parent=0
    _
  %s14 = ssub.s32 1, %s12
  %s15 = scalar_select 0, %s14, %s12
  $region1: #{tpu_custom_call.1} parent=0
    #allocation2 [shape = 'u8[12288]{0}', space=vmem, size = 0x3000, scoped, tag = 'input window, operand 1, single buffered']
    #allocation3 [shape = 's32[2]{0}', space=sflag, size = 0x8, scoped, tag = 'scoped memory for tpu_custom_call.1']
    #allocation4 [shape = 'u8[12288]{0}', space=vmem, size = 0x3000, scoped, tag = 'input window, operand 2, single buffered']
    #allocation5 [shape = 's32[1]{0}', space=sflag, size = 0x4, scoped, tag = 'scoped memory for tpu_custom_call.1']
    #allocation6 [shape = 'u8[98304]{0}', space=vmem, size = 0x18000, scoped, tag = 'input window, operand 3, single buffered']
    #allocation7 [shape = 'u8[98304]{0}', space=vmem, size = 0x18000, scoped, tag = 'input window, operand 7, single buffered']
    #allocation8 [shape = 's32[1]{0}', space=sflag, size = 0x4, scoped, tag = 'scoped memory for tpu_custom_call.1']
    #allocation9 [shape = 'u8[98304]{0}', space=vmem, size = 0x18000, scoped, tag = 'input window, operand 9, single buffered']
    %16 = vsyncpa [#allocation3], 0
    %17 = vsyncpa [#allocation5], 0
    %18 = vsyncpa [#allocation8], 0
    loop: start=0, step=1, limit=4
    $region2: #{tpu_custom_call.1} parent=1 // loop_pre_header
      _
    $region3: #{tpu_custom_call.1} parent=1 // loop_header
      %s20 = sphi 0, %s24
      %p21 = scmp.ge.s32.totalorder %s20, 4
      %s30 = sphi 0, %s32
      %s33 = sphi 0, %s30
      %s34 = sphi 0, %s33
      %s50 = sphi 0, %s34
      %s54 = sphi 0, %s54
      %s56 = sphi 0, %s54
      %s57 = sphi 0, %s56
      %s71 = sphi 0, %s57
      %s75 = sphi 0, %s75
      %s77 = sphi 0, %s75
      %s78 = sphi 0, %s77
      %s92 = sphi 0, %s78
      %s96 = sphi 0, %s96
      %s98 = sphi 0, %s96
      %s99 = sphi 0, %s98
      %s113 = sphi 0, %s99
      %s117 = sphi 0, %s117
      %s119 = sphi 0, %s117
      %s120 = sphi 0, %s119
      %s134 = sphi 0, %s120
      %s138 = sphi 0, %s138
      %s140 = sphi 0, %s138
      %s141 = sphi 0, %s140
      %s155 = sphi 0, %s141
      %s159 = sphi 0, %s159
      %s161 = sphi 0, %s159
      %s162 = sphi 0, %s161
      %s176 = sphi 0, %s162
      %s180 = sphi 0, %s180
      %s182 = sphi 0, %s180
      %s183 = sphi 0, %s182
      %s197 = sphi 0, %s183
      %s201 = sphi 0, %s201
      %s203 = sphi 0, %s201
      %s204 = sphi 0, %s203
      %s218 = sphi 0, %s204
      %s222 = sphi 0, %s222
      %s224 = sphi 0, %s222
      %s225 = sphi 0, %s224
      %s239 = sphi 0, %s225
      %s243 = sphi 0, %s243
      %s245 = sphi 0, %s243
      %s246 = sphi 0, %s245
      %s260 = sphi 0, %s246
      %s266 = sphi 0, %s268
      %s269 = sphi 0, %s266
      %s270 = sphi 0, %s269
      %s286 = sphi 0, %s270
    $region4: #{tpu_custom_call.1} parent=1 // loop_header_branch
      %23 = sbr.rel (%p21) target = $region8
    $region5: #{tpu_custom_call.1} parent=1 // loop_body
      %s25 = ssub.s32 %s20, 1
      %s26 = ssub.s32 %s20, 2
      %s27 = sadd.s32 %s20, 1
      %s28 = ssub.s32 %s20, %s27
      %p29 = scmp.eq.s32.totalorder %s28, 0
      %s31 = sadd.s32 %s30, 1
      %s32 = scalar_select %p29, %s30, %s31
      %p35 = pneg %p29
      %p36 = scmp.eq.s32.totalorder %s20, 1
      %p37 = por %p35, %p36
      %p38 = scmp.ne.s32.totalorder %s30, %s33
      %p39 = scmp.eq.s32.totalorder %s20, 0
      %p40 = por %p38, %p39
      %p41 = scmp.ne.s32.totalorder %s30, %s33
      %p42 = scmp.eq.s32.totalorder %s25, 1
      %p43 = por %p41, %p42
      %p44 = scmp.ne.s32.totalorder %s33, %s34
      %p45 = scmp.eq.s32.totalorder %s25, 0
      %p46 = por %p44, %p45
      %p47 = scmp.ne.s32.totalorder %s33, %s34
      %p48 = scmp.eq.s32.totalorder %s26, 1
      %p49 = por %p47, %p48
      %p51 = scmp.ne.s32.totalorder %s34, %s50
      %p52 = scmp.eq.s32.totalorder %s26, 0
      %p53 = por %p51, %p52
      %s55 = sadd.s32 %s54, 1
      %p58 = scmp.eq.s32.totalorder %s20, 1
      %p59 = scmp.ne.s32.totalorder %s54, %s56
      %p60 = scmp.eq.s32.totalorder %s20, 0
      %p61 = por %p59, %p60
      %p62 = scmp.ne.s32.totalorder %s54, %s56
      %p63 = scmp.eq.s32.totalorder %s25, 1
      %p64 = por %p62, %p63
      %p65 = scmp.ne.s32.totalorder %s56, %s57
      %p66 = scmp.eq.s32.totalorder %s25, 0
      %p67 = por %p65, %p66
      %p68 = scmp.ne.s32.totalorder %s56, %s57
      %p69 = scmp.eq.s32.totalorder %s26, 1
      %p70 = por %p68, %p69
      %p72 = scmp.ne.s32.totalorder %s57, %s71
      %p73 = scmp.eq.s32.totalorder %s26, 0
      %p74 = por %p72, %p73
      %s76 = sadd.s32 %s75, 1
      %p79 = scmp.eq.s32.totalorder %s20, 1
      %p80 = scmp.ne.s32.totalorder %s75, %s77
      %p81 = scmp.eq.s32.totalorder %s20, 0
      %p82 = por %p80, %p81
      %p83 = scmp.ne.s32.totalorder %s75, %s77
      %p84 = scmp.eq.s32.totalorder %s25, 1
      %p85 = por %p83, %p84
      %p86 = scmp.ne.s32.totalorder %s77, %s78
      %p87 = scmp.eq.s32.totalorder %s25, 0
      %p88 = por %p86, %p87
      %p89 = scmp.ne.s32.totalorder %s77, %s78
      %p90 = scmp.eq.s32.totalorder %s26, 1
      %p91 = por %p89, %p90
      %p93 = scmp.ne.s32.totalorder %s78, %s92
      %p94 = scmp.eq.s32.totalorder %s26, 0
      %p95 = por %p93, %p94
      %s97 = sadd.s32 %s96, 1
      %p100 = scmp.eq.s32.totalorder %s20, 1
      %p101 = scmp.ne.s32.totalorder %s96, %s98
      %p102 = scmp.eq.s32.totalorder %s20, 0
      %p103 = por %p101, %p102
      %p104 = scmp.ne.s32.totalorder %s96, %s98
      %p105 = scmp.eq.s32.totalorder %s25, 1
      %p106 = por %p104, %p105
      %p107 = scmp.ne.s32.totalorder %s98, %s99
      %p108 = scmp.eq.s32.totalorder %s25, 0
      %p109 = por %p107, %p108
      %p110 = scmp.ne.s32.totalorder %s98, %s99
      %p111 = scmp.eq.s32.totalorder %s26, 1
      %p112 = por %p110, %p111
      %p114 = scmp.ne.s32.totalorder %s99, %s113
      %p115 = scmp.eq.s32.totalorder %s26, 0
      %p116 = por %p114, %p115
      %s118 = sadd.s32 %s117, 1
      %p121 = scmp.eq.s32.totalorder %s20, 1
      %p122 = scmp.ne.s32.totalorder %s117, %s119
      %p123 = scmp.eq.s32.totalorder %s20, 0
      %p124 = por %p122, %p123
      %p125 = scmp.ne.s32.totalorder %s117, %s119
      %p126 = scmp.eq.s32.totalorder %s25, 1
      %p127 = por %p125, %p126
      %p128 = scmp.ne.s32.totalorder %s119, %s120
      %p129 = scmp.eq.s32.totalorder %s25, 0
      %p130 = por %p128, %p129
      %p131 = scmp.ne.s32.totalorder %s119, %s120
      %p132 = scmp.eq.s32.totalorder %s26, 1
      %p133 = por %p131, %p132
      %p135 = scmp.ne.s32.totalorder %s120, %s134
      %p136 = scmp.eq.s32.totalorder %s26, 0
      %p137 = por %p135, %p136
      %s139 = sadd.s32 %s138, 1
      %p142 = scmp.eq.s32.totalorder %s20, 1
      %p143 = scmp.ne.s32.totalorder %s138, %s140
      %p144 = scmp.eq.s32.totalorder %s20, 0
      %p145 = por %p143, %p144
      %p146 = scmp.ne.s32.totalorder %s138, %s140
      %p147 = scmp.eq.s32.totalorder %s25, 1
      %p148 = por %p146, %p147
      %p149 = scmp.ne.s32.totalorder %s140, %s141
      %p150 = scmp.eq.s32.totalorder %s25, 0
      %p151 = por %p149, %p150
      %p152 = scmp.ne.s32.totalorder %s140, %s141
      %p153 = scmp.eq.s32.totalorder %s26, 1
      %p154 = por %p152, %p153
      %p156 = scmp.ne.s32.totalorder %s141, %s155
      %p157 = scmp.eq.s32.totalorder %s26, 0
      %p158 = por %p156, %p157
      %s160 = sadd.s32 %s159, 1
      %p163 = scmp.eq.s32.totalorder %s20, 1
      %p164 = scmp.ne.s32.totalorder %s159, %s161
      %p165 = scmp.eq.s32.totalorder %s20, 0
      %p166 = por %p164, %p165
      %p167 = scmp.ne.s32.totalorder %s159, %s161
      %p168 = scmp.eq.s32.totalorder %s25, 1
      %p169 = por %p167, %p168
      %p170 = scmp.ne.s32.totalorder %s161, %s162
      %p171 = scmp.eq.s32.totalorder %s25, 0
      %p172 = por %p170, %p171
      %p173 = scmp.ne.s32.totalorder %s161, %s162
      %p174 = scmp.eq.s32.totalorder %s26, 1
      %p175 = por %p173, %p174
      %p177 = scmp.ne.s32.totalorder %s162, %s176
      %p178 = scmp.eq.s32.totalorder %s26, 0
      %p179 = por %p177, %p178
      %s181 = sadd.s32 %s180, 1
      %p184 = scmp.eq.s32.totalorder %s20, 1
      %p185 = scmp.ne.s32.totalorder %s180, %s182
      %p186 = scmp.eq.s32.totalorder %s20, 0
      %p187 = por %p185, %p186
      %p188 = scmp.ne.s32.totalorder %s180, %s182
      %p189 = scmp.eq.s32.totalorder %s25, 1
      %p190 = por %p188, %p189
      %p191 = scmp.ne.s32.totalorder %s182, %s183
      %p192 = scmp.eq.s32.totalorder %s25, 0
      %p193 = por %p191, %p192
      %p194 = scmp.ne.s32.totalorder %s182, %s183
      %p195 = scmp.eq.s32.totalorder %s26, 1
      %p196 = por %p194, %p195
      %p198 = scmp.ne.s32.totalorder %s183, %s197
      %p199 = scmp.eq.s32.totalorder %s26, 0
      %p200 = por %p198, %p199
      %s202 = sadd.s32 %s201, 1
      %p205 = scmp.eq.s32.totalorder %s20, 1
      %p206 = scmp.ne.s32.totalorder %s201, %s203
      %p207 = scmp.eq.s32.totalorder %s20, 0
      %p208 = por %p206, %p207
      %p209 = scmp.ne.s32.totalorder %s201, %s203
      %p210 = scmp.eq.s32.totalorder %s25, 1
      %p211 = por %p209, %p210
      %p212 = scmp.ne.s32.totalorder %s203, %s204
      %p213 = scmp.eq.s32.totalorder %s25, 0
      %p214 = por %p212, %p213
      %p215 = scmp.ne.s32.totalorder %s203, %s204
      %p216 = scmp.eq.s32.totalorder %s26, 1
      %p217 = por %p215, %p216
      %p219 = scmp.ne.s32.totalorder %s204, %s218
      %p220 = scmp.eq.s32.totalorder %s26, 0
      %p221 = por %p219, %p220
      %s223 = sadd.s32 %s222, 1
      %p226 = scmp.eq.s32.totalorder %s20, 1
      %p227 = scmp.ne.s32.totalorder %s222, %s224
      %p228 = scmp.eq.s32.totalorder %s20, 0
      %p229 = por %p227, %p228
      %p230 = scmp.ne.s32.totalorder %s222, %s224
      %p231 = scmp.eq.s32.totalorder %s25, 1
      %p232 = por %p230, %p231
      %p233 = scmp.ne.s32.totalorder %s224, %s225
      %p234 = scmp.eq.s32.totalorder %s25, 0
      %p235 = por %p233, %p234
      %p236 = scmp.ne.s32.totalorder %s224, %s225
      %p237 = scmp.eq.s32.totalorder %s26, 1
      %p238 = por %p236, %p237
      %p240 = scmp.ne.s32.totalorder %s225, %s239
      %p241 = scmp.eq.s32.totalorder %s26, 0
      %p242 = por %p240, %p241
      %s244 = sadd.s32 %s243, 1
      %p247 = scmp.eq.s32.totalorder %s20, 1
      %p248 = scmp.ne.s32.totalorder %s243, %s245
      %p249 = scmp.eq.s32.totalorder %s20, 0
      %p250 = por %p248, %p249
      %p251 = scmp.ne.s32.totalorder %s243, %s245
      %p252 = scmp.eq.s32.totalorder %s25, 1
      %p253 = por %p251, %p252
      %p254 = scmp.ne.s32.totalorder %s245, %s246
      %p255 = scmp.eq.s32.totalorder %s25, 0
      %p256 = por %p254, %p255
      %p257 = scmp.ne.s32.totalorder %s245, %s246
      %p258 = scmp.eq.s32.totalorder %s26, 1
      %p259 = por %p257, %p258
      %p261 = scmp.ne.s32.totalorder %s246, %s260
      %p262 = scmp.eq.s32.totalorder %s26, 0
      %p263 = por %p261, %p262
      %s264 = ssub.s32 %s20, %s27
      %p265 = scmp.eq.s32.totalorder %s264, 0
      %s267 = sadd.s32 %s266, 1
      %s268 = scalar_select %p265, %s266, %s267
      %p271 = pneg %p265
      %p272 = scmp.eq.s32.totalorder %s20, 1
      %p273 = por %p271, %p272
      %p274 = scmp.ne.s32.totalorder %s266, %s269
      %p275 = scmp.eq.s32.totalorder %s20, 0
      %p276 = por %p274, %p275
      %p277 = scmp.ne.s32.totalorder %s266, %s269
      %p278 = scmp.eq.s32.totalorder %s25, 1
      %p279 = por %p277, %p278
      %p280 = scmp.ne.s32.totalorder %s269, %s270
      %p281 = scmp.eq.s32.totalorder %s25, 0
      %p282 = por %p280, %p281
      %p283 = scmp.ne.s32.totalorder %s269, %s270
      %p284 = scmp.eq.s32.totalorder %s26, 1
      %p285 = por %p283, %p284
      %p287 = scmp.ne.s32.totalorder %s270, %s286
      %p288 = scmp.eq.s32.totalorder %s26, 0
      %p289 = por %p287, %p288
      %p290 = scmp.le.s32.totalorder 1, %s20
      %p291 = scmp.lt.s32.totalorder %s20, 3
      %p292 = pnand %p290, %p291
      %p293 = pneg %p292
      // Predicated region
      $region9: #{tpu_custom_call.1} parent=5 // pred_check
        _
      $region10: #{tpu_custom_call.1} parent=5 // pred_check_branch
        %295 = sbr.rel (%p292) target = $region12
      $region11: #{tpu_custom_call.1} parent=5 // pred_region
        %s296 = ssub.s32 %s20, 1
        // Predicated region
        $region13: #{tpu_custom_call.1} parent=11 // pred_check
          %p297 = pneg %p67
        $region14: #{tpu_custom_call.1} parent=11 // pred_check_branch
          %299 = sbr.rel (%p297) target = $region16
        $region15: #{tpu_custom_call.1} parent=11 // pred_region
          %301 = vsyncadd [#allocation3], 0
          %s302 = sshll.u32 %s1, 4
          %s303 = int_to_ptr.hbm [resolvable:$true] %s302
          %s304 = sshll.u32 [#allocation2], 4
          %s305 = int_to_ptr.vmem [resolvable:$true] %s304
          %310 = dma.hbm_to_vmem [thread:$0]  %s303, 384, %s305, [#allocation3], 128, 128, 8
        $region16: #{tpu_custom_call.1} parent=11 // pred_fallthru
          _
        // Predicated region
        $region17: #{tpu_custom_call.1} parent=11 // pred_check
          %p311 = pneg %p88
        $region18: #{tpu_custom_call.1} parent=11 // pred_check_branch
          %313 = sbr.rel (%p311) target = $region20
        $region19: #{tpu_custom_call.1} parent=11 // pred_region
          %315 = vsyncadd [#allocation5], 0
          %s316 = sshll.u32 %s2, 4
          %s317 = int_to_ptr.hbm [resolvable:$true] %s316
          %s318 = sshll.u32 [#allocation4], 4
          %s319 = int_to_ptr.vmem [resolvable:$true] %s318
          %324 = dma.hbm_to_vmem [thread:$0]  %s317, 384, %s319, [#allocation5], 128, 128, 8
        $region20: #{tpu_custom_call.1} parent=11 // pred_fallthru
          _
        // Predicated region
        $region21: #{tpu_custom_call.1} parent=11 // pred_check
          %p325 = pneg %p109
        $region22: #{tpu_custom_call.1} parent=11 // pred_check_branch
          %327 = sbr.rel (%p325) target = $region24
        $region23: #{tpu_custom_call.1} parent=11 // pred_region
          %329 = vsyncadd [#allocation5], 0
          %s330 = sshll.u32 %s3, 4
          %s331 = int_to_ptr.hbm [resolvable:$true] %s330
          %s332 = sshll.u32 [#allocation6], 4
          %s333 = int_to_ptr.vmem [resolvable:$true] %s332
          %338 = dma.hbm_to_vmem [thread:$0]  %s331, 3072, %s333, [#allocation5], 192, 192, 12
        $region24: #{tpu_custom_call.1} parent=11 // pred_fallthru
          _
        // Predicated region
        $region25: #{tpu_custom_call.1} parent=11 // pred_check
          %p339 = pneg %p130
        $region26: #{tpu_custom_call.1} parent=11 // pred_check_branch
          %341 = sbr.rel (%p339) target = $region28
        $region27: #{tpu_custom_call.1} parent=11 // pred_region
          _
        $region28: #{tpu_custom_call.1} parent=11 // pred_fallthru
          _
        // Predicated region
        $region29: #{tpu_custom_call.1} parent=11 // pred_check
          %p342 = pneg %p151
        $region30: #{tpu_custom_call.1} parent=11 // pred_check_branch
          %344 = sbr.rel (%p342) target = $region32
        $region31: #{tpu_custom_call.1} parent=11 // pred_region
          _
        $region32: #{tpu_custom_call.1} parent=11 // pred_fallthru
          _
        // Predicated region
        $region33: #{tpu_custom_call.1} parent=11 // pred_check
          %p345 = pneg %p172
        $region34: #{tpu_custom_call.1} parent=11 // pred_check_branch
          %347 = sbr.rel (%p345) target = $region36
        $region35: #{tpu_custom_call.1} parent=11 // pred_region
          _
        $region36: #{tpu_custom_call.1} parent=11 // pred_fallthru
          _
        // Predicated region
        $region37: #{tpu_custom_call.1} parent=11 // pred_check
          %p348 = pneg %p193
        $region38: #{tpu_custom_call.1} parent=11 // pred_check_branch
          %350 = sbr.rel (%p348) target = $region40
        $region39: #{tpu_custom_call.1} parent=11 // pred_region
          %352 = vsyncadd [#allocation8], 0
          %s353 = sshll.u32 %s7, 4
          %s354 = int_to_ptr.hbm [resolvable:$true] %s353
          %s355 = sshll.u32 [#allocation7], 4
          %s356 = int_to_ptr.vmem [resolvable:$true] %s355
          %361 = dma.hbm_to_vmem [thread:$0]  %s354, 3072, %s356, [#allocation8], 192, 192, 12
        $region40: #{tpu_custom_call.1} parent=11 // pred_fallthru
          _
        // Predicated region
        $region41: #{tpu_custom_call.1} parent=11 // pred_check
          %p362 = pneg %p214
        $region42: #{tpu_custom_call.1} parent=11 // pred_check_branch
          %364 = sbr.rel (%p362) target = $region44
        $region43: #{tpu_custom_call.1} parent=11 // pred_region
          _
        $region44: #{tpu_custom_call.1} parent=11 // pred_fallthru
          _
        // Predicated region
        $region45: #{tpu_custom_call.1} parent=11 // pred_check
          %p365 = pneg %p235
        $region46: #{tpu_custom_call.1} parent=11 // pred_check_branch
          %367 = sbr.rel (%p365) target = $region48
        $region47: #{tpu_custom_call.1} parent=11 // pred_region
          %369 = vsyncadd [#allocation8], 0
          %s370 = sshll.u32 %s9, 4
          %s371 = int_to_ptr.hbm [resolvable:$true] %s370
          %s372 = sshll.u32 [#allocation9], 4
          %s373 = int_to_ptr.vmem [resolvable:$true] %s372
          %378 = dma.hbm_to_vmem [thread:$0]  %s371, 3072, %s373, [#allocation8], 64, 64, 4
        $region48: #{tpu_custom_call.1} parent=11 // pred_fallthru
          _
        // Predicated region
        $region49: #{tpu_custom_call.1} parent=11 // pred_check
          %p379 = pneg %p256
        $region50: #{tpu_custom_call.1} parent=11 // pred_check_branch
          %381 = sbr.rel (%p379) target = $region52
        $region51: #{tpu_custom_call.1} parent=11 // pred_region
          _
        $region52: #{tpu_custom_call.1} parent=11 // pred_fallthru
          _
      $region12: #{tpu_custom_call.1} parent=5 // pred_fallthru
        _
      %p382 = scmp.lt.s32.totalorder %s20, 2
      // Predicated region
      $region53: #{tpu_custom_call.1} parent=5 // pred_check
        %p383 = pneg %p382
      $region54: #{tpu_custom_call.1} parent=5 // pred_check_branch
        %385 = sbr.rel (%p383) target = $region56
      $region55: #{tpu_custom_call.1} parent=5 // pred_region
        // Predicated region
        $region57: #{tpu_custom_call.1} parent=55 // pred_check
          %p386 = pneg %p40
        $region58: #{tpu_custom_call.1} parent=55 // pred_check_branch
          %388 = sbr.rel (%p386) target = $region60
        $region59: #{tpu_custom_call.1} parent=55 // pred_region
          %p389 = scmp.lt.s32.totalorder %s20, 1
          %s390 = scalar_select %p389, %s20, 1
          %s391 = smul.addr %s390, 3
          %s392 = smul.addr %s391, 8
          %s393 = scalar_lea.vmem %s0, %s392
        $region60: #{tpu_custom_call.1} parent=55 // pred_fallthru
          _
      $region56: #{tpu_custom_call.1} parent=5 // pred_fallthru
        _
      %p394 = scmp.le.s32.totalorder 1, %s20
      %p395 = scmp.lt.s32.totalorder %s20, 3
      %p396 = pnand %p394, %p395
      %p397 = pneg %p396
      // Predicated region
      $region61: #{tpu_custom_call.1} parent=5 // pred_check
        _
      $region62: #{tpu_custom_call.1} parent=5 // pred_check_branch
        %399 = sbr.rel (%p396) target = $region64
      $region63: #{tpu_custom_call.1} parent=5 // pred_region
        %s400 = ssub.s32 %s20, 1
        // Predicated region
        $region65: #{tpu_custom_call.1} parent=63 // pred_check
          %p401 = pneg %p67
        $region66: #{tpu_custom_call.1} parent=63 // pred_check_branch
          %403 = sbr.rel (%p401) target = $region68
        $region67: #{tpu_custom_call.1} parent=63 // pred_region
          %405 = dma.done [#allocation3], 384
        $region68: #{tpu_custom_call.1} parent=63 // pred_fallthru
          _
        // Predicated region
        $region69: #{tpu_custom_call.1} parent=63 // pred_check
          %p406 = pneg %p88
        $region70: #{tpu_custom_call.1} parent=63 // pred_check_branch
          %408 = sbr.rel (%p406) target = $region72
        $region71: #{tpu_custom_call.1} parent=63 // pred_region
          %410 = dma.done [#allocation5], 384
        $region72: #{tpu_custom_call.1} parent=63 // pred_fallthru
          _
        // Predicated region
        $region73: #{tpu_custom_call.1} parent=63 // pred_check
          %p411 = pneg %p109
        $region74: #{tpu_custom_call.1} parent=63 // pred_check_branch
          %413 = sbr.rel (%p411) target = $region76
        $region75: #{tpu_custom_call.1} parent=63 // pred_region
          %415 = dma.done [#allocation5], 3072
        $region76: #{tpu_custom_call.1} parent=63 // pred_fallthru
          _
        // Predicated region
        $region77: #{tpu_custom_call.1} parent=63 // pred_check
          %p416 = pneg %p193
        $region78: #{tpu_custom_call.1} parent=63 // pred_check_branch
          %418 = sbr.rel (%p416) target = $region80
        $region79: #{tpu_custom_call.1} parent=63 // pred_region
          %420 = dma.done [#allocation8], 3072
        $region80: #{tpu_custom_call.1} parent=63 // pred_fallthru
          _
        // Predicated region
        $region81: #{tpu_custom_call.1} parent=63 // pred_check
          %p421 = pneg %p235
        $region82: #{tpu_custom_call.1} parent=63 // pred_check_branch
          %423 = sbr.rel (%p421) target = $region84
        $region83: #{tpu_custom_call.1} parent=63 // pred_region
          %425 = dma.done [#allocation8], 3072
        $region84: #{tpu_custom_call.1} parent=63 // pred_fallthru
          _
        %p426 = scmp.lt.s32.totalorder %s25, 1
        %s427 = scalar_select %p426, %s25, 1
        %s428 = smul.addr %s427, 3
        %s429 = smul.addr %s428, 8
        %s430 = scalar_lea.vmem %s0, %s429
        %p431 = pneg %p46
        %p432 = pneg %p43
        %p433 = pneg %p67
        %p434 = pneg %p64
        %p435 = pneg %p88
        %p436 = pneg %p85
        %p437 = pneg %p109
        %p438 = pneg %p106
        %p439 = pneg %p130
        %p440 = pneg %p127
        %p441 = pneg %p151
        %p442 = pneg %p148
        %p443 = pneg %p172
        %p444 = pneg %p169
        %p445 = pneg %p193
        %p446 = pneg %p190
        %p447 = pneg %p214
        %p448 = pneg %p211
        %p449 = pneg %p235
        %p450 = pneg %p232
        %p451 = pneg %p256
        %p452 = pneg %p253
        %p453 = pneg %p282
        %p454 = pneg %p279
        %p455 = scmp.lt.s32.totalorder %s25, 1
        %s456 = scalar_select %p455, %s25, 1
        %s457 = smul.addr %s456, 3
        %s458 = smul.addr %s457, 8
        %s459 = scalar_lea.vmem %s11, %s458
        %p460 = scmp.lt.s32.totalorder %s25, 1
        %s461 = scalar_select %p460, %s25, 1
        %s462 = smul.addr %s461, 3
        %s463 = smul.addr %s462, 8
        %s464 = scalar_lea.vmem %s0, %s463
        %p465 = scmp.lt.s32.totalorder %s25, 1
        %s466 = scalar_select %p465, %s25, 1
        %s467 = smul.addr %s466, 3
        %s468 = smul.addr %s467, 8
        %s469 = scalar_lea.vmem %s11, %s468
        %v471 = vld [vmem:[%s464] sm:$0xff]
        %v472 = vld [vmem:[%s464 + $0x8] sm:$0xff]
        %v473 = vld [vmem:[%s464 + $0x10] sm:$0x1]
        %v474 = vadd.f32 %v471, %v472
        %vm475 = vcmask 1040384
        %v476 = vsel %vm475, %v473, 0.0
        %v477 = vadd.f32 %v474, %v476
        %478 = vadd.xlane.f32.xlu0 %v477
        %v479 = vpop.xlane.xlu0 %478
        %v480 = vrot.slane %v479, 4
        %v481 = vadd.f32 %v479, %v480
        %v482 = vrot.slane %v481, 2
        %v483 = vadd.f32 %v481, %v482
        %v484 = vrot.slane %v483, 1
        %v485 = vadd.f32 %v483, %v484
        %s486 = vtos %v485
        %v487 = vmul.f32 %v471, %v471
        %v488 = vmul.f32 %v472, %v472
        %v489 = vmul.f32 %v473, %v473
        %v490 = vadd.f32 %v487, %v488
        %v491 = vsel %vm475, %v489, 0.0
        %v492 = vadd.f32 %v490, %v491
        %493 = vadd.xlane.f32.xlu0 %v492
        %v494 = vpop.xlane.xlu0 %493
        %v495 = vrot.slane %v494, 4
        %v496 = vadd.f32 %v494, %v495
        %v497 = vrot.slane %v496, 2
        %v498 = vadd.f32 %v496, %v497
        %v499 = vrot.slane %v498, 1
        %v500 = vadd.f32 %v498, %v499
        %s501 = vtos %v500
        %s502 = smul.f32 %s486, 0.0006127451
        %s503 = smul.f32 %s501, 0.0006127451
        %s504 = smul.f32 %s502, %s502
        %s505 = ssub.f32 %s503, %s504
        %v506 = vstv %s502
        %v507 = vsub.f32 %v471, %v506
        %v508 = vsub.f32 %v472, %v506
        %v509 = vsub.f32 %v473, %v506
        %s510 = sadd.f32 %s505, 1e-05
        %v511 = vstv %s510
        %v512 = vrsqrt.pop %v511
        %v513 = vmul.f32 %v512, %v511
        %v514 = vmul.f32 %v513, %v512
        %v515 = vmul.f32 0.5, %v514
        %v516 = vsub.f32 1.5, %v515
        %v517 = vmul.f32 %v512, %v516
        %vm518 = vweird.f32 %v511
        %vm519 = vweird.f32 %v512
        %vm520 = vmor %vm518, %vm519
        %v521 = vsel %vm520, %v512, %v517
        %s522 = vtos %v521
        %v523 = vstv %s522
        %v524 = vmul.f32 %v507, %v523
        %v525 = vmul.f32 %v508, %v523
        %v526 = vmul.f32 %v509, %v523
        %v527 = vld [vmem:[#allocation2] sm:$0xff]
        %v528 = vld [vmem:[#allocation2 + $0x8] sm:$0xff]
        %v529 = vld [vmem:[#allocation2 + $0x10] sm:$0x1]
        %v530 = vmul.f32 %v524, %v527
        %v531 = vmul.f32 %v525, %v528
        %v532 = vmul.f32 %v526, %v529
        %v533 = vld [vmem:[#allocation4] sm:$0xff]
        %v534 = vld [vmem:[#allocation4 + $0x8] sm:$0xff]
        %v535 = vld [vmem:[#allocation4 + $0x10] sm:$0x1]
        %v536 = vadd.f32 %v530, %v533
        %v537 = vadd.f32 %v531, %v534
        %v538 = vadd.f32 %v532, %v535
        %v539 = vpack.c.bf16 %v537, %v536
        %v540 = vpack.c.bf16 %v538, %v538
        %v541 = vld [vmem:[#allocation6] sm:$0xff]
        %v542 = vld [vmem:[#allocation6 + $0x8] sm:$0xf]
        %v543 = vld [vmem:[#allocation6 + $0xc] sm:$0xff]
        %v544 = vld [vmem:[#allocation6 + $0x14] sm:$0xf]
        %v545 = vld [vmem:[#allocation6 + $0x18] sm:$0xff]
        %v546 = vld [vmem:[#allocation6 + $0x20] sm:$0xf]
        %v547 = vld [vmem:[#allocation6 + $0x24] sm:$0xff]
        %v548 = vld [vmem:[#allocation6 + $0x2c] sm:$0xf]
        %v549 = vld [vmem:[#allocation6 + $0x30] sm:$0xff]
        %v550 = vld [vmem:[#allocation6 + $0x38] sm:$0xf]
        %v551 = vld [vmem:[#allocation6 + $0x3c] sm:$0xff]
        %v552 = vld [vmem:[#allocation6 + $0x44] sm:$0xf]
        %v553 = vld [vmem:[#allocation6 + $0x48] sm:$0xff]
        %v554 = vld [vmem:[#allocation6 + $0x50] sm:$0xf]
        %v555 = vld [vmem:[#allocation6 + $0x54] sm:$0xff]
        %v556 = vld [vmem:[#allocation6 + $0x5c] sm:$0xf]
        %v557 = vld [vmem:[#allocation6 + $0x60] sm:$0xff]
        %v558 = vld [vmem:[#allocation6 + $0x68] sm:$0xf]
        %v559 = vld [vmem:[#allocation6 + $0x6c] sm:$0xff]
        %v560 = vld [vmem:[#allocation6 + $0x74] sm:$0xf]
        %v561 = vld [vmem:[#allocation6 + $0x78] sm:$0xff]
        %v562 = vld [vmem:[#allocation6 + $0x80] sm:$0xf]
        %v563 = vld [vmem:[#allocation6 + $0x84] sm:$0xff]
        %v564 = vld [vmem:[#allocation6 + $0x8c] sm:$0xf]
        %v565 = vld [vmem:[#allocation6 + $0x90] sm:$0xff]
        %v566 = vld [vmem:[#allocation6 + $0x98] sm:$0xf]
        %v567 = vld [vmem:[#allocation6 + $0x9c] sm:$0xff]
        %v568 = vld [vmem:[#allocation6 + $0xa4] sm:$0xf]
        %v569 = vld [vmem:[#allocation6 + $0xa8] sm:$0xff]
        %v570 = vld [vmem:[#allocation6 + $0xb0] sm:$0xf]
        %v571 = vld [vmem:[#allocation6 + $0xb4] sm:$0xff]
        %v572 = vld [vmem:[#allocation6 + $0xbc] sm:$0xf]
        %v573 = vld [vmem:[%s4] sm:$0x7]
        %v575 = vperm.slane %v573, 0
        %v576 = vperm.slane %v573, 1
        %v577 = vperm.slane %v573, 2
        %v613 = vunpack.c.l.b16 %v541
        %v614 = vunpack.c.h.b16 %v541
        %v615 = vunpack.c.l.b16 %v542
        %v616 = vunpack.c.l.b16 %v543
        %v617 = vunpack.c.h.b16 %v543
        %v618 = vunpack.c.l.b16 %v544
        %v619 = vunpack.c.l.b16 %v545
        %v620 = vunpack.c.h.b16 %v545
        %v621 = vunpack.c.l.b16 %v546
        %v622 = vunpack.c.l.b16 %v547
        %v623 = vunpack.c.h.b16 %v547
        %v624 = vunpack.c.l.b16 %v548
        %v625 = vunpack.c.l.b16 %v549
        %v626 = vunpack.c.h.b16 %v549
        %v627 = vunpack.c.l.b16 %v550
        %v628 = vunpack.c.l.b16 %v551
        %v629 = vunpack.c.h.b16 %v551
        %v630 = vunpack.c.l.b16 %v552
        %v631 = vunpack.c.l.b16 %v553
        %v632 = vunpack.c.h.b16 %v553
        %v633 = vunpack.c.l.b16 %v554
        %v634 = vunpack.c.l.b16 %v555
        %v635 = vunpack.c.h.b16 %v555
        %v636 = vunpack.c.l.b16 %v556
        %v637 = vunpack.c.l.b16 %v557
        %v638 = vunpack.c.h.b16 %v557
        %v639 = vunpack.c.l.b16 %v558
        %v640 = vunpack.c.l.b16 %v559
        %v641 = vunpack.c.h.b16 %v559
        %v642 = vunpack.c.l.b16 %v560
        %v643 = vunpack.c.l.b16 %v561
        %v644 = vunpack.c.h.b16 %v561
        %v645 = vunpack.c.l.b16 %v562
        %v646 = vunpack.c.l.b16 %v563
        %v647 = vunpack.c.h.b16 %v563
        %v648 = vunpack.c.l.b16 %v564
        %v649 = vunpack.c.l.b16 %v565
        %v650 = vunpack.c.h.b16 %v565
        %v651 = vunpack.c.l.b16 %v566
        %v652 = vunpack.c.l.b16 %v567
        %v653 = vunpack.c.h.b16 %v567
        %v654 = vunpack.c.l.b16 %v568
        %v655 = vunpack.c.l.b16 %v569
        %v656 = vunpack.c.h.b16 %v569
        %v657 = vunpack.c.l.b16 %v570
        %v658 = vunpack.c.l.b16 %v571
        %v659 = vunpack.c.h.b16 %v571
        %v660 = vunpack.c.l.b16 %v572
        %v661 = vpack.c.b16 %v616, %v613
        %v662 = vpack.c.b16 %v617, %v614
        %v663 = vpack.c.b16 %v618, %v615
        %v664 = vpack.c.b16 %v622, %v619
        %v665 = vpack.c.b16 %v623, %v620
        %v666 = vpack.c.b16 %v624, %v621
        %v667 = vpack.c.b16 %v628, %v625
        %v668 = vpack.c.b16 %v629, %v626
        %v669 = vpack.c.b16 %v630, %v627
        %v670 = vpack.c.b16 %v634, %v631
        %v671 = vpack.c.b16 %v635, %v632
        %v672 = vpack.c.b16 %v636, %v633
        %v673 = vpack.c.b16 %v640, %v637
        %v674 = vpack.c.b16 %v641, %v638
        %v675 = vpack.c.b16 %v642, %v639
        %v676 = vpack.c.b16 %v646, %v643
        %v677 = vpack.c.b16 %v647, %v644
        %v678 = vpack.c.b16 %v648, %v645
        %v679 = vpack.c.b16 %v652, %v649
        %v680 = vpack.c.b16 %v653, %v650
        %v681 = vpack.c.b16 %v654, %v651
        %v682 = vpack.c.b16 %v658, %v655
        %v683 = vpack.c.b16 %v659, %v656
        %v684 = vpack.c.b16 %v660, %v657
        %709 = vmatpush.bf16.msra.mxu0 %v682
        %710 = vmatpush.bf16.msra.mxu0 %v679
        %711 = vmatpush.bf16.msra.mxu0 %v676
        %712 = vmatpush.bf16.msra.mxu0 %v673
        %713 = vmatpush.bf16.msra.mxu0 %v670
        %714 = vmatpush.bf16.msra.mxu0 %v667
        %715 = vmatpush.bf16.msra.mxu0 %v664
        %716 = vmatpush.bf16.msra.mxu0 %v661
        %717 = vmatmul.bf16.gmra.mxu0 %v539
        %v718 = vpop.f32.mrf.mxu0
        %v719 = vadd.f32 %v575, %v718
        %v720 = vpop.f32.mrf.mxu0
        %v721 = vadd.f32 %v575, %v720
        %722 = vmatmul.bf16.gmra.mxu0 %v540
        %v723 = vpop.f32.mrf.mxu0
        %v724 = vadd.f32 %v575, %v723
        %v725 = vpop.f32.mrf.mxu0
        %726 = vdwg.mxu0
        %727 = vmatpush.bf16.msra.mxu0 %v683
        %728 = vmatpush.bf16.msra.mxu0 %v680
        %729 = vmatpush.bf16.msra.mxu0 %v677
        %730 = vmatpush.bf16.msra.mxu0 %v674
        %731 = vmatpush.bf16.msra.mxu0 %v671
        %732 = vmatpush.bf16.msra.mxu0 %v668
        %733 = vmatpush.bf16.msra.mxu0 %v665
        %734 = vmatpush.bf16.msra.mxu0 %v662
        %735 = vmatmul.bf16.gmra.mxu0 %v539
        %v736 = vpop.f32.mrf.mxu0
        %v737 = vadd.f32 %v576, %v736
        %v738 = vpop.f32.mrf.mxu0
        %v739 = vadd.f32 %v576, %v738
        %740 = vmatmul.bf16.gmra.mxu0 %v540
        %v741 = vpop.f32.mrf.mxu0
        %v742 = vadd.f32 %v576, %v741
        %v743 = vpop.f32.mrf.mxu0
        %744 = vdwg.mxu0
        %745 = vmatpush.bf16.msra.mxu0 %v684
        %746 = vmatpush.bf16.msra.mxu0 %v681
        %747 = vmatpush.bf16.msra.mxu0 %v678
        %748 = vmatpush.bf16.msra.mxu0 %v675
        %749 = vmatpush.bf16.msra.mxu0 %v672
        %750 = vmatpush.bf16.msra.mxu0 %v669
        %751 = vmatpush.bf16.msra.mxu0 %v666
        %752 = vmatpush.bf16.msra.mxu0 %v663
        %753 = vmatmul.bf16.gmra.mxu0 %v539
        %v754 = vpop.f32.mrf.mxu0
        %v755 = vadd.f32 %v577, %v754
        %v756 = vpop.f32.mrf.mxu0
        %v757 = vadd.f32 %v577, %v756
        %758 = vmatmul.bf16.gmra.mxu0 %v540
        %v759 = vpop.f32.mrf.mxu0
        %v760 = vadd.f32 %v577, %v759
        %v761 = vpop.f32.mrf.mxu0
        %762 = vdwg.mxu0
        %763 = vxpose.xlu0.b32.start [1/16] %v719, 128
        %764 = vxpose.xlu0.b32.cont [2/16] %v721, 128
        %765 = vxpose.xlu0.b32.cont [3/16] %v724, 128
        %766 = vxpose.xlu0.b32.cont [4/16] 0.0, 128
        %767 = vxpose.xlu0.b32.cont [5/16] 0.0, 128
        %768 = vxpose.xlu0.b32.cont [6/16] 0.0, 128
        %769 = vxpose.xlu0.b32.cont [7/16] 0.0, 128
        %770 = vxpose.xlu0.b32.cont [8/16] 0.0, 128
        %771 = vxpose.xlu0.b32.cont [9/16] 0.0, 128
        %772 = vxpose.xlu0.b32.cont [10/16] 0.0, 128
        %773 = vxpose.xlu0.b32.cont [11/16] 0.0, 128
        %774 = vxpose.xlu0.b32.cont [12/16] 0.0, 128
        %775 = vxpose.xlu0.b32.cont [13/16] 0.0, 128
        %776 = vxpose.xlu0.b32.cont [14/16] 0.0, 128
        %777 = vxpose.xlu0.b32.cont [15/16] 0.0, 128
        %778 = vxpose.xlu0.b32.end [16/16] 0.0, 128
        %v779 = vpop.trf.xlu0
        %v780 = vpop.trf.xlu0
        %v781 = vpop.trf.xlu0
        %v782 = vpop.trf.xlu0
        %v783 = vpop.trf.xlu0
        %v784 = vpop.trf.xlu0
        %v785 = vpop.trf.xlu0
        %v786 = vpop.trf.xlu0
        %v787 = vpop.trf.xlu0
        %v788 = vpop.trf.xlu0
        %v789 = vpop.trf.xlu0
        %v790 = vpop.trf.xlu0
        %v791 = vpop.trf.xlu0
        %v792 = vpop.trf.xlu0
        %v793 = vpop.trf.xlu0
        %v794 = vpop.trf.xlu0
        %795 = vxpose.xlu0.b32.start [1/16] %v737, 128
        %796 = vxpose.xlu0.b32.cont [2/16] %v739, 128
        %797 = vxpose.xlu0.b32.cont [3/16] %v742, 128
        %798 = vxpose.xlu0.b32.cont [4/16] 0.0, 128
        %799 = vxpose.xlu0.b32.cont [5/16] 0.0, 128
        %800 = vxpose.xlu0.b32.cont [6/16] 0.0, 128
        %801 = vxpose.xlu0.b32.cont [7/16] 0.0, 128
        %802 = vxpose.xlu0.b32.cont [8/16] 0.0, 128
        %803 = vxpose.xlu0.b32.cont [9/16] 0.0, 128
        %804 = vxpose.xlu0.b32.cont [10/16] 0.0, 128
        %805 = vxpose.xlu0.b32.cont [11/16] 0.0, 128
        %806 = vxpose.xlu0.b32.cont [12/16] 0.0, 128
        %807 = vxpose.xlu0.b32.cont [13/16] 0.0, 128
        %808 = vxpose.xlu0.b32.cont [14/16] 0.0, 128
        %809 = vxpose.xlu0.b32.cont [15/16] 0.0, 128
        %810 = vxpose.xlu0.b32.end [16/16] 0.0, 128
        %v811 = vpop.trf.xlu0
        %v812 = vpop.trf.xlu0
        %v813 = vpop.trf.xlu0
        %v814 = vpop.trf.xlu0
        %v815 = vpop.trf.xlu0
        %v816 = vpop.trf.xlu0
        %v817 = vpop.trf.xlu0
        %v818 = vpop.trf.xlu0
        %v819 = vpop.trf.xlu0
        %v820 = vpop.trf.xlu0
        %v821 = vpop.trf.xlu0
        %v822 = vpop.trf.xlu0
        %v823 = vpop.trf.xlu0
        %v824 = vpop.trf.xlu0
        %v825 = vpop.trf.xlu0
        %v826 = vpop.trf.xlu0
        %827 = vxpose.xlu0.b32.start [1/16] %v755, 128
        %828 = vxpose.xlu0.b32.cont [2/16] %v757, 128
        %829 = vxpose.xlu0.b32.cont [3/16] %v760, 128
        %830 = vxpose.xlu0.b32.cont [4/16] 0.0, 128
        %831 = vxpose.xlu0.b32.cont [5/16] 0.0, 128
        %832 = vxpose.xlu0.b32.cont [6/16] 0.0, 128
        %833 = vxpose.xlu0.b32.cont [7/16] 0.0, 128
        %834 = vxpose.xlu0.b32.cont [8/16] 0.0, 128
        %835 = vxpose.xlu0.b32.cont [9/16] 0.0, 128
        %836 = vxpose.xlu0.b32.cont [10/16] 0.0, 128
        %837 = vxpose.xlu0.b32.cont [11/16] 0.0, 128
        %838 = vxpose.xlu0.b32.cont [12/16] 0.0, 128
        %839 = vxpose.xlu0.b32.cont [13/16] 0.0, 128
        %840 = vxpose.xlu0.b32.cont [14/16] 0.0, 128
        %841 = vxpose.xlu0.b32.cont [15/16] 0.0, 128
        %842 = vxpose.xlu0.b32.end [16/16] 0.0, 128
        %v843 = vpop.trf.xlu0
        %v844 = vpop.trf.xlu0
        %v845 = vpop.trf.xlu0
        %v846 = vpop.trf.xlu0
        %v847 = vpop.trf.xlu0
        %v848 = vpop.trf.xlu0
        %v849 = vpop.trf.xlu0
        %v850 = vpop.trf.xlu0
        %v851 = vpop.trf.xlu0
        %v852 = vpop.trf.xlu0
        %v853 = vpop.trf.xlu0
        %v854 = vpop.trf.xlu0
        %v855 = vpop.trf.xlu0
        %v856 = vpop.trf.xlu0
        %v857 = vpop.trf.xlu0
        %v858 = vpop.trf.xlu0
        %v859 = vpack.c.bf16 %v779, %v779
        %v860 = vpack.c.bf16 %v780, %v780
        %v861 = vpack.c.bf16 %v781, %v781
        %v862 = vpack.c.bf16 %v782, %v782
        %v863 = vpack.c.bf16 %v783, %v783
        %v864 = vpack.c.bf16 %v784, %v784
        %v865 = vpack.c.bf16 %v785, %v785
        %v866 = vpack.c.bf16 %v786, %v786
        %v867 = vpack.c.bf16 %v787, %v787
        %v868 = vpack.c.bf16 %v788, %v788
        %v869 = vpack.c.bf16 %v789, %v789
        %v870 = vpack.c.bf16 %v790, %v790
        %v871 = vpack.c.bf16 %v791, %v791
        %v872 = vpack.c.bf16 %v792, %v792
        %v873 = vpack.c.bf16 %v793, %v793
        %v874 = vpack.c.bf16 %v794, %v794
        %875 = vxpose.xlu0.b32.start [1/16] %v811, 128
        %876 = vxpose.xlu0.b32.cont [2/16] 0.0, 128
        %877 = vxpose.xlu0.b32.cont [3/16] 0.0, 128
        %878 = vxpose.xlu0.b32.cont [4/16] 0.0, 128
        %879 = vxpose.xlu0.b32.cont [5/16] 0.0, 128
        %880 = vxpose.xlu0.b32.cont [6/16] 0.0, 128
        %881 = vxpose.xlu0.b32.cont [7/16] 0.0, 128
        %882 = vxpose.xlu0.b32.cont [8/16] 0.0, 128
        %883 = vxpose.xlu0.b32.cont [9/16] 0.0, 128
        %884 = vxpose.xlu0.b32.cont [10/16] 0.0, 128
        %885 = vxpose.xlu0.b32.cont [11/16] 0.0, 128
        %886 = vxpose.xlu0.b32.cont [12/16] 0.0, 128
        %887 = vxpose.xlu0.b32.cont [13/16] 0.0, 128
        %888 = vxpose.xlu0.b32.cont [14/16] 0.0, 128
        %889 = vxpose.xlu0.b32.cont [15/16] 0.0, 128
        %890 = vxpose.xlu0.b32.end [16/16] 0.0, 128
        %v891 = vpop.trf.xlu0
        %v892 = vpop.trf.xlu0
        %v893 = vpop.trf.xlu0
        %v894 = vpop.trf.xlu0
        %v895 = vpop.trf.xlu0
        %v896 = vpop.trf.xlu0
        %v897 = vpop.trf.xlu0
        %v898 = vpop.trf.xlu0
        %v899 = vpop.trf.xlu0
        %v900 = vpop.trf.xlu0
        %v901 = vpop.trf.xlu0
        %v902 = vpop.trf.xlu0
        %v903 = vpop.trf.xlu0
        %v904 = vpop.trf.xlu0
        %v905 = vpop.trf.xlu0
        %v906 = vpop.trf.xlu0
        %907 = vxpose.xlu0.b32.start [1/16] %v812, 128
        %908 = vxpose.xlu0.b32.cont [2/16] 0.0, 128
        %909 = vxpose.xlu0.b32.cont [3/16] 0.0, 128
        %910 = vxpose.xlu0.b32.cont [4/16] 0.0, 128
        %911 = vxpose.xlu0.b32.cont [5/16] 0.0, 128
        %912 = vxpose.xlu0.b32.cont [6/16] 0.0, 128
        %913 = vxpose.xlu0.b32.cont [7/16] 0.0, 128
        %914 = vxpose.xlu0.b32.cont [8/16] 0.0, 128
        %915 = vxpose.xlu0.b32.cont [9/16] 0.0, 128
        %916 = vxpose.xlu0.b32.cont [10/16] 0.0, 128
        %917 = vxpose.xlu0.b32.cont [11/16] 0.0, 128
        %918 = vxpose.xlu0.b32.cont [12/16] 0.0, 128
        %919 = vxpose.xlu0.b32.cont [13/16] 0.0, 128
        %920 = vxpose.xlu0.b32.cont [14/16] 0.0, 128
        %921 = vxpose.xlu0.b32.cont [15/16] 0.0, 128
        %922 = vxpose.xlu0.b32.end [16/16] 0.0, 128
        %v923 = vpop.trf.xlu0
        %v924 = vpop.trf.xlu0
        %v925 = vpop.trf.xlu0
        %v926 = vpop.trf.xlu0
        %v927 = vpop.trf.xlu0
        %v928 = vpop.trf.xlu0
        %v929 = vpop.trf.xlu0
        %v930 = vpop.trf.xlu0
        %v931 = vpop.trf.xlu0
        %v932 = vpop.trf.xlu0
        %v933 = vpop.trf.xlu0
        %v934 = vpop.trf.xlu0
        %v935 = vpop.trf.xlu0
        %v936 = vpop.trf.xlu0
        %v937 = vpop.trf.xlu0
        %v938 = vpop.trf.xlu0
        %939 = vxpose.xlu0.b32.start [1/16] %v813, 128
        %940 = vxpose.xlu0.b32.cont [2/16] 0.0, 128
        %941 = vxpose.xlu0.b32.cont [3/16] 0.0, 128
        %942 = vxpose.xlu0.b32.cont [4/16] 0.0, 128
        %943 = vxpose.xlu0.b32.cont [5/16] 0.0, 128
        %944 = vxpose.xlu0.b32.cont [6/16] 0.0, 128
        %945 = vxpose.xlu0.b32.cont [7/16] 0.0, 128
        %946 = vxpose.xlu0.b32.cont [8/16] 0.0, 128
        %947 = vxpose.xlu0.b32.cont [9/16] 0.0, 128
        %948 = vxpose.xlu0.b32.cont [10/16] 0.0, 128
        %949 = vxpose.xlu0.b32.cont [11/16] 0.0, 128
        %950 = vxpose.xlu0.b32.cont [12/16] 0.0, 128
        %951 = vxpose.xlu0.b32.cont [13/16] 0.0, 128
        %952 = vxpose.xlu0.b32.cont [14/16] 0.0, 128
        %953 = vxpose.xlu0.b32.cont [15/16] 0.0, 128
        %954 = vxpose.xlu0.b32.end [16/16] 0.0, 128
        %v955 = vpop.trf.xlu0
        %v956 = vpop.trf.xlu0
        %v957 = vpop.trf.xlu0
        %v958 = vpop.trf.xlu0
        %v959 = vpop.trf.xlu0
        %v960 = vpop.trf.xlu0
        %v961 = vpop.trf.xlu0
        %v962 = vpop.trf.xlu0
        %v963 = vpop.trf.xlu0
        %v964 = vpop.trf.xlu0
        %v965 = vpop.trf.xlu0
        %v966 = vpop.trf.xlu0
        %v967 = vpop.trf.xlu0
        %v968 = vpop.trf.xlu0
        %v969 = vpop.trf.xlu0
        %v970 = vpop.trf.xlu0
        %971 = vxpose.xlu0.b32.start [1/16] %v814, 128
        %972 = vxpose.xlu0.b32.cont [2/16] 0.0, 128
        %973 = vxpose.xlu0.b32.cont [3/16] 0.0, 128
        %974 = vxpose.xlu0.b32.cont [4/16] 0.0, 128
        %975 = vxpose.xlu0.b32.cont [5/16] 0.0, 128
        %976 = vxpose.xlu0.b32.cont [6/16] 0.0, 128
        %977 = vxpose.xlu0.b32.cont [7/16] 0.0, 128
        %978 = vxpose.xlu0.b32.cont [8/16] 0.0, 128
        %979 = vxpose.xlu0.b32.cont [9/16] 0.0, 128
        %980 = vxpose.xlu0.b32.cont [10/16] 0.0, 128
        %981 = vxpose.xlu0.b32.cont [11/16] 0.0, 128
        %982 = vxpose.xlu0.b32.cont [12/16] 0.0, 128
        %983 = vxpose.xlu0.b32.cont [13/16] 0.0, 128
        %984 = vxpose.xlu0.b32.cont [14/16] 0.0, 128
        %985 = vxpose.xlu0.b32.cont [15/16] 0.0, 128
        %986 = vxpose.xlu0.b32.end [16/16] 0.0, 128
        %v987 = vpop.trf.xlu0
        %v988 = vpop.trf.xlu0
        %v989 = vpop.trf.xlu0
        %v990 = vpop.trf.xlu0
        %v991 = vpop.trf.xlu0
        %v992 = vpop.trf.xlu0
        %v993 = vpop.trf.xlu0
        %v994 = vpop.trf.xlu0
        %v995 = vpop.trf.xlu0
        %v996 = vpop.trf.xlu0
        %v997 = vpop.trf.xlu0
        %v998 = vpop.trf.xlu0
        %v999 = vpop.trf.xlu0
        %v1000 = vpop.trf.xlu0
        %v1001 = vpop.trf.xlu0
        %v1002 = vpop.trf.xlu0
        %1003 = vxpose.xlu0.b32.start [1/16] %v815, 128
        %1004 = vxpose.xlu0.b32.cont [2/16] 0.0, 128
        %1005 = vxpose.xlu0.b32.cont [3/16] 0.0, 128
        %1006 = vxpose.xlu0.b32.cont [4/16] 0.0, 128
        %1007 = vxpose.xlu0.b32.cont [5/16] 0.0, 128
        %1008 = vxpose.xlu0.b32.cont [6/16] 0.0, 128
        %1009 = vxpose.xlu0.b32.cont [7/16] 0.0, 128
        %1010 = vxpose.xlu0.b32.cont [8/16] 0.0, 128
        %1011 = vxpose.xlu0.b32.cont [9/16] 0.0, 128
        %1012 = vxpose.xlu0.b32.cont [10/16] 0.0, 128
        %1013 = vxpose.xlu0.b32.cont [11/16] 0.0, 128
        %1014 = vxpose.xlu0.b32.cont [12/16] 0.0, 128
        %1015 = vxpose.xlu0.b32.cont [13/16] 0.0, 128
        %1016 = vxpose.xlu0.b32.cont [14/16] 0.0, 128
        %1017 = vxpose.xlu0.b32.cont [15/16] 0.0, 128
        %1018 = vxpose.xlu0.b32.end [16/16] 0.0, 128
        %v1019 = vpop.trf.xlu0
        %v1020 = vpop.trf.xlu0
        %v1021 = vpop.trf.xlu0
        %v1022 = vpop.trf.xlu0
        %v1023 = vpop.trf.xlu0
        %v1024 = vpop.trf.xlu0
        %v1025 = vpop.trf.xlu0
        %v1026 = vpop.trf.xlu0
        %v1027 = vpop.trf.xlu0
        %v1028 = vpop.trf.xlu0
        %v1029 = vpop.trf.xlu0
        %v1030 = vpop.trf.xlu0
        %v1031 = vpop.trf.xlu0
        %v1032 = vpop.trf.xlu0
        %v1033 = vpop.trf.xlu0
        %v1034 = vpop.trf.xlu0
        %1035 = vxpose.xlu0.b32.start [1/16] %v816, 128
        %1036 = vxpose.xlu0.b32.cont [2/16] 0.0, 128
        %1037 = vxpose.xlu0.b32.cont [3/16] 0.0, 128
        %1038 = vxpose.xlu0.b32.cont [4/16] 0.0, 128
        %1039 = vxpose.xlu0.b32.cont [5/16] 0.0, 128
        %1040 = vxpose.xlu0.b32.cont [6/16] 0.0, 128
        %1041 = vxpose.xlu0.b32.cont [7/16] 0.0, 128
        %1042 = vxpose.xlu0.b32.cont [8/16] 0.0, 128
        %1043 = vxpose.xlu0.b32.cont [9/16] 0.0, 128
        %1044 = vxpose.xlu0.b32.cont [10/16] 0.0, 128
        %1045 = vxpose.xlu0.b32.cont [11/16] 0.0, 128
        %1046 = vxpose.xlu0.b32.cont [12/16] 0.0, 128
        %1047 = vxpose.xlu0.b32.cont [13/16] 0.0, 128
        %1048 = vxpose.xlu0.b32.cont [14/16] 0.0, 128
        %1049 = vxpose.xlu0.b32.cont [15/16] 0.0, 128
        %1050 = vxpose.xlu0.b32.end [16/16] 0.0, 128
        %v1051 = vpop.trf.xlu0
        %v1052 = vpop.trf.xlu0
        %v1053 = vpop.trf.xlu0
        %v1054 = vpop.trf.xlu0
        %v1055 = vpop.trf.xlu0
        %v1056 = vpop.trf.xlu0
        %v1057 = vpop.trf.xlu0
        %v1058 = vpop.trf.xlu0
        %v1059 = vpop.trf.xlu0
        %v1060 = vpop.trf.xlu0
        %v1061 = vpop.trf.xlu0
        %v1062 = vpop.trf.xlu0
        %v1063 = vpop.trf.xlu0
        %v1064 = vpop.trf.xlu0
        %v1065 = vpop.trf.xlu0
        %v1066 = vpop.trf.xlu0
        %1067 = vxpose.xlu0.b32.start [1/16] %v817, 128
        %1068 = vxpose.xlu0.b32.cont [2/16] 0.0, 128
        %1069 = vxpose.xlu0.b32.cont [3/16] 0.0, 128
        %1070 = vxpose.xlu0.b32.cont [4/16] 0.0, 128
        %1071 = vxpose.xlu0.b32.cont [5/16] 0.0, 128
        %1072 = vxpose.xlu0.b32.cont [6/16] 0.0, 128
        %1073 = vxpose.xlu0.b32.cont [7/16] 0.0, 128
        %1074 = vxpose.xlu0.b32.cont [8/16] 0.0, 128
        %1075 = vxpose.xlu0.b32.cont [9/16] 0.0, 128
        %1076 = vxpose.xlu0.b32.cont [10/16] 0.0, 128
        %1077 = vxpose.xlu0.b32.cont [11/16] 0.0, 128
        %1078 = vxpose.xlu0.b32.cont [12/16] 0.0, 128
        %1079 = vxpose.xlu0.b32.cont [13/16] 0.0, 128
        %1080 = vxpose.xlu0.b32.cont [14/16] 0.0, 128
        %1081 = vxpose.xlu0.b32.cont [15/16] 0.0, 128
        %1082 = vxpose.xlu0.b32.end [16/16] 0.0, 128
        %v1083 = vpop.trf.xlu0
        %v1084 = vpop.trf.xlu0
        %v1085 = vpop.trf.xlu0
        %v1086 = vpop.trf.xlu0
        %v1087 = vpop.trf.xlu0
        %v1088 = vpop.trf.xlu0
        %v1089 = vpop.trf.xlu0
        %v1090 = vpop.trf.xlu0
        %v1091 = vpop.trf.xlu0
        %v1092 = vpop.trf.xlu0
        %v1093 = vpop.trf.xlu0
        %v1094 = vpop.trf.xlu0
        %v1095 = vpop.trf.xlu0
        %v1096 = vpop.trf.xlu0
        %v1097 = vpop.trf.xlu0
        %v1098 = vpop.trf.xlu0
        %1099 = vxpose.xlu0.b32.start [1/16] %v818, 128
        %1100 = vxpose.xlu0.b32.cont [2/16] 0.0, 128
        %1101 = vxpose.xlu0.b32.cont [3/16] 0.0, 128
        %1102 = vxpose.xlu0.b32.cont [4/16] 0.0, 128
        %1103 = vxpose.xlu0.b32.cont [5/16] 0.0, 128
        %1104 = vxpose.xlu0.b32.cont [6/16] 0.0, 128
        %1105 = vxpose.xlu0.b32.cont [7/16] 0.0, 128
        %1106 = vxpose.xlu0.b32.cont [8/16] 0.0, 128
        %1107 = vxpose.xlu0.b32.cont [9/16] 0.0, 128
        %1108 = vxpose.xlu0.b32.cont [10/16] 0.0, 128
        %1109 = vxpose.xlu0.b32.cont [11/16] 0.0, 128
        %1110 = vxpose.xlu0.b32.cont [12/16] 0.0, 128
        %1111 = vxpose.xlu0.b32.cont [13/16] 0.0, 128
        %1112 = vxpose.xlu0.b32.cont [14/16] 0.0, 128
        %1113 = vxpose.xlu0.b32.cont [15/16] 0.0, 128
        %1114 = vxpose.xlu0.b32.end [16/16] 0.0, 128
        %v1115 = vpop.trf.xlu0
        %v1116 = vpop.trf.xlu0
        %v1117 = vpop.trf.xlu0
        %v1118 = vpop.trf.xlu0
        %v1119 = vpop.trf.xlu0
        %v1120 = vpop.trf.xlu0
        %v1121 = vpop.trf.xlu0
        %v1122 = vpop.trf.xlu0
        %v1123 = vpop.trf.xlu0
        %v1124 = vpop.trf.xlu0
        %v1125 = vpop.trf.xlu0
        %v1126 = vpop.trf.xlu0
        %v1127 = vpop.trf.xlu0
        %v1128 = vpop.trf.xlu0
        %v1129 = vpop.trf.xlu0
        %v1130 = vpop.trf.xlu0
        %1131 = vxpose.xlu0.b32.start [1/16] %v819, 128
        %1132 = vxpose.xlu0.b32.cont [2/16] 0.0, 128
        %1133 = vxpose.xlu0.b32.cont [3/16] 0.0, 128
        %1134 = vxpose.xlu0.b32.cont [4/16] 0.0, 128
        %1135 = vxpose.xlu0.b32.cont [5/16] 0.0, 128
        %1136 = vxpose.xlu0.b32.cont [6/16] 0.0, 128
        %1137 = vxpose.xlu0.b32.cont [7/16] 0.0, 128
        %1138 = vxpose.xlu0.b32.cont [8/16] 0.0, 128
        %1139 = vxpose.xlu0.b32.cont [9/16] 0.0, 128
        %1140 = vxpose.xlu0.b32.cont [10/16] 0.0, 128
        %1141 = vxpose.xlu0.b32.cont [11/16] 0.0, 128
        %1142 = vxpose.xlu0.b32.cont [12/16] 0.0, 128
        %1143 = vxpose.xlu0.b32.cont [13/16] 0.0, 128
        %1144 = vxpose.xlu0.b32.cont [14/16] 0.0, 128
        %1145 = vxpose.xlu0.b32.cont [15/16] 0.0, 128
        %1146 = vxpose.xlu0.b32.end [16/16] 0.0, 128
        %v1147 = vpop.trf.xlu0
        %v1148 = vpop.trf.xlu0
        %v1149 = vpop.trf.xlu0
        %v1150 = vpop.trf.xlu0
        %v1151 = vpop.trf.xlu0
        %v1152 = vpop.trf.xlu0
        %v1153 = vpop.trf.xlu0
        %v1154 = vpop.trf.xlu0
        %v1155 = vpop.trf.xlu0
        %v1156 = vpop.trf.xlu0
        %v1157 = vpop.trf.xlu0
        %v1158 = vpop.trf.xlu0
        %v1159 = vpop.trf.xlu0
        %v1160 = vpop.trf.xlu0
        %v1161 = vpop.trf.xlu0
        %v1162 = vpop.trf.xlu0
        %1163 = vxpose.xlu0.b32.start [1/16] %v820, 128
        %1164 = vxpose.xlu0.b32.cont [2/16] 0.0, 128
        %1165 = vxpose.xlu0.b32.cont [3/16] 0.0, 128
        %1166 = vxpose.xlu0.b32.cont [4/16] 0.0, 128
        %1167 = vxpose.xlu0.b32.cont [5/16] 0.0, 128
        %1168 = vxpose.xlu0.b32.cont [6/16] 0.0, 128
        %1169 = vxpose.xlu0.b32.cont [7/16] 0.0, 128
        %1170 = vxpose.xlu0.b32.cont [8/16] 0.0, 128
        %1171 = vxpose.xlu0.b32.cont [9/16] 0.0, 128
        %1172 = vxpose.xlu0.b32.cont [10/16] 0.0, 128
        %1173 = vxpose.xlu0.b32.cont [11/16] 0.0, 128
        %1174 = vxpose.xlu0.b32.cont [12/16] 0.0, 128
        %1175 = vxpose.xlu0.b32.cont [13/16] 0.0, 128
        %1176 = vxpose.xlu0.b32.cont [14/16] 0.0, 128
        %1177 = vxpose.xlu0.b32.cont [15/16] 0.0, 128
        %1178 = vxpose.xlu0.b32.end [16/16] 0.0, 128
        %v1179 = vpop.trf.xlu0
        %v1180 = vpop.trf.xlu0
        %v1181 = vpop.trf.xlu0
        %v1182 = vpop.trf.xlu0
        %v1183 = vpop.trf.xlu0
        %v1184 = vpop.trf.xlu0
        %v1185 = vpop.trf.xlu0
        %v1186 = vpop.trf.xlu0
        %v1187 = vpop.trf.xlu0
        %v1188 = vpop.trf.xlu0
        %v1189 = vpop.trf.xlu0
        %v1190 = vpop.trf.xlu0
        %v1191 = vpop.trf.xlu0
        %v1192 = vpop.trf.xlu0
        %v1193 = vpop.trf.xlu0
        %v1194 = vpop.trf.xlu0
        %1195 = vxpose.xlu0.b32.start [1/16] %v821, 128
        %1196 = vxpose.xlu0.b32.cont [2/16] 0.0, 128
        %1197 = vxpose.xlu0.b32.cont [3/16] 0.0, 128
        %1198 = vxpose.xlu0.b32.cont [4/16] 0.0, 128
        %1199 = vxpose.xlu0.b32.cont [5/16] 0.0, 128
        %1200 = vxpose.xlu0.b32.cont [6/16] 0.0, 128
        %1201 = vxpose.xlu0.b32.cont [7/16] 0.0, 128
        %1202 = vxpose.xlu0.b32.cont [8/16] 0.0, 128
        %1203 = vxpose.xlu0.b32.cont [9/16] 0.0, 128
        %1204 = vxpose.xlu0.b32.cont [10/16] 0.0, 128
        %1205 = vxpose.xlu0.b32.cont [11/16] 0.0, 128
        %1206 = vxpose.xlu0.b32.cont [12/16] 0.0, 128
        %1207 = vxpose.xlu0.b32.cont [13/16] 0.0, 128
        %1208 = vxpose.xlu0.b32.cont [14/16] 0.0, 128
        %1209 = vxpose.xlu0.b32.cont [15/16] 0.0, 128
        %1210 = vxpose.xlu0.b32.end [16/16] 0.0, 128
        %v1211 = vpop.trf.xlu0
        %v1212 = vpop.trf.xlu0
        %v1213 = vpop.trf.xlu0
        %v1214 = vpop.trf.xlu0
        %v1215 = vpop.trf.xlu0
        %v1216 = vpop.trf.xlu0
        %v1217 = vpop.trf.xlu0
        %v1218 = vpop.trf.xlu0
        %v1219 = vpop.trf.xlu0
        %v1220 = vpop.trf.xlu0
        %v1221 = vpop.trf.xlu0
        %v1222 = vpop.trf.xlu0
        %v1223 = vpop.trf.xlu0
        %v1224 = vpop.trf.xlu0
        %v1225 = vpop.trf.xlu0
        %v1226 = vpop.trf.xlu0
        %1227 = vxpose.xlu0.b32.start [1/16] %v822, 128
        %1228 = vxpose.xlu0.b32.cont [2/16] 0.0, 128
        %1229 = vxpose.xlu0.b32.cont [3/16] 0.0, 128
        %1230 = vxpose.xlu0.b32.cont [4/16] 0.0, 128
        %1231 = vxpose.xlu0.b32.cont [5/16] 0.0, 128
        %1232 = vxpose.xlu0.b32.cont [6/16] 0.0, 128
        %1233 = vxpose.xlu0.b32.cont [7/16] 0.0, 128
        %1234 = vxpose.xlu0.b32.cont [8/16] 0.0, 128
        %1235 = vxpose.xlu0.b32.cont [9/16] 0.0, 128
        %1236 = vxpose.xlu0.b32.cont [10/16] 0.0, 128
        %1237 = vxpose.xlu0.b32.cont [11/16] 0.0, 128
        %1238 = vxpose.xlu0.b32.cont [12/16] 0.0, 128
        %1239 = vxpose.xlu0.b32.cont [13/16] 0.0, 128
        %1240 = vxpose.xlu0.b32.cont [14/16] 0.0, 128
        %1241 = vxpose.xlu0.b32.cont [15/16] 0.0, 128
        %1242 = vxpose.xlu0.b32.end [16/16] 0.0, 128
        %v1243 = vpop.trf.xlu0
        %v1244 = vpop.trf.xlu0
        %v1245 = vpop.trf.xlu0
        %v1246 = vpop.trf.xlu0
        %v1247 = vpop.trf.xlu0
        %v1248 = vpop.trf.xlu0
        %v1249 = vpop.trf.xlu0
        %v1250 = vpop.trf.xlu0
        %v1251 = vpop.trf.xlu0
        %v1252 = vpop.trf.xlu0
        %v1253 = vpop.trf.xlu0
        %v1254 = vpop.trf.xlu0
        %v1255 = vpop.trf.xlu0
        %v1256 = vpop.trf.xlu0
        %v1257 = vpop.trf.xlu0
        %v1258 = vpop.trf.xlu0
        %1259 = vxpose.xlu0.b32.start [1/16] %v823, 128
        %1260 = vxpose.xlu0.b32.cont [2/16] 0.0, 128
        %1261 = vxpose.xlu0.b32.cont [3/16] 0.0, 128
        %1262 = vxpose.xlu0.b32.cont [4/16] 0.0, 128
        %1263 = vxpose.xlu0.b32.cont [5/16] 0.0, 128
        %1264 = vxpose.xlu0.b32.cont [6/16] 0.0, 128
        %1265 = vxpose.xlu0.b32.cont [7/16] 0.0, 128
        %1266 = vxpose.xlu0.b32.cont [8/16] 0.0, 128
        %1267 = vxpose.xlu0.b32.cont [9/16] 0.0, 128
        %1268 = vxpose.xlu0.b32.cont [10/16] 0.0, 128
        %1269 = vxpose.xlu0.b32.cont [11/16] 0.0, 128
        %1270 = vxpose.xlu0.b32.cont [12/16] 0.0, 128
        %1271 = vxpose.xlu0.b32.cont [13/16] 0.0, 128
        %1272 = vxpose.xlu0.b32.cont [14/16] 0.0, 128
        %1273 = vxpose.xlu0.b32.cont [15/16] 0.0, 128
        %1274 = vxpose.xlu0.b32.end [16/16] 0.0, 128
        %v1275 = vpop.trf.xlu0
        %v1276 = vpop.trf.xlu0
        %v1277 = vpop.trf.xlu0
        %v1278 = vpop.trf.xlu0
        %v1279 = vpop.trf.xlu0
        %v1280 = vpop.trf.xlu0
        %v1281 = vpop.trf.xlu0
        %v1282 = vpop.trf.xlu0
        %v1283 = vpop.trf.xlu0
        %v1284 = vpop.trf.xlu0
        %v1285 = vpop.trf.xlu0
        %v1286 = vpop.trf.xlu0
        %v1287 = vpop.trf.xlu0
        %v1288 = vpop.trf.xlu0
        %v1289 = vpop.trf.xlu0
        %v1290 = vpop.trf.xlu0
        %1291 = vxpose.xlu0.b32.start [1/16] %v824, 128
        %1292 = vxpose.xlu0.b32.cont [2/16] 0.0, 128
        %1293 = vxpose.xlu0.b32.cont [3/16] 0.0, 128
        %1294 = vxpose.xlu0.b32.cont [4/16] 0.0, 128
        %1295 = vxpose.xlu0.b32.cont [5/16] 0.0, 128
        %1296 = vxpose.xlu0.b32.cont [6/16] 0.0, 128
        %1297 = vxpose.xlu0.b32.cont [7/16] 0.0, 128
        %1298 = vxpose.xlu0.b32.cont [8/16] 0.0, 128
        %1299 = vxpose.xlu0.b32.cont [9/16] 0.0, 128
        %1300 = vxpose.xlu0.b32.cont [10/16] 0.0, 128
        %1301 = vxpose.xlu0.b32.cont [11/16] 0.0, 128
        %1302 = vxpose.xlu0.b32.cont [12/16] 0.0, 128
        %1303 = vxpose.xlu0.b32.cont [13/16] 0.0, 128
        %1304 = vxpose.xlu0.b32.cont [14/16] 0.0, 128
        %1305 = vxpose.xlu0.b32.cont [15/16] 0.0, 128
        %1306 = vxpose.xlu0.b32.end [16/16] 0.0, 128
        %v1307 = vpop.trf.xlu0
        %v1308 = vpop.trf.xlu0
        %v1309 = vpop.trf.xlu0
        %v1310 = vpop.trf.xlu0
        %v1311 = vpop.trf.xlu0
        %v1312 = vpop.trf.xlu0
        %v1313 = vpop.trf.xlu0
        %v1314 = vpop.trf.xlu0
        %v1315 = vpop.trf.xlu0
        %v1316 = vpop.trf.xlu0
        %v1317 = vpop.trf.xlu0
        %v1318 = vpop.trf.xlu0
        %v1319 = vpop.trf.xlu0
        %v1320 = vpop.trf.xlu0
        %v1321 = vpop.trf.xlu0
        %v1322 = vpop.trf.xlu0
        %1323 = vxpose.xlu0.b32.start [1/16] %v825, 128
        %1324 = vxpose.xlu0.b32.cont [2/16] 0.0, 128
        %1325 = vxpose.xlu0.b32.cont [3/16] 0.0, 128
        %1326 = vxpose.xlu0.b32.cont [4/16] 0.0, 128
        %1327 = vxpose.xlu0.b32.cont [5/16] 0.0, 128
        %1328 = vxpose.xlu0.b32.cont [6/16] 0.0, 128
        %1329 = vxpose.xlu0.b32.cont [7/16] 0.0, 128
        %1330 = vxpose.xlu0.b32.cont [8/16] 0.0, 128
        %1331 = vxpose.xlu0.b32.cont [9/16] 0.0, 128
        %1332 = vxpose.xlu0.b32.cont [10/16] 0.0, 128
        %1333 = vxpose.xlu0.b32.cont [11/16] 0.0, 128
        %1334 = vxpose.xlu0.b32.cont [12/16] 0.0, 128
        %1335 = vxpose.xlu0.b32.cont [13/16] 0.0, 128
        %1336 = vxpose.xlu0.b32.cont [14/16] 0.0, 128
        %1337 = vxpose.xlu0.b32.cont [15/16] 0.0, 128
        %1338 = vxpose.xlu0.b32.end [16/16] 0.0, 128
        %v1339 = vpop.trf.xlu0
        %v1340 = vpop.trf.xlu0
        %v1341 = vpop.trf.xlu0
        %v1342 = vpop.trf.xlu0
        %v1343 = vpop.trf.xlu0
        %v1344 = vpop.trf.xlu0
        %v1345 = vpop.trf.xlu0
        %v1346 = vpop.trf.xlu0
        %v1347 = vpop.trf.xlu0
        %v1348 = vpop.trf.xlu0
        %v1349 = vpop.trf.xlu0
        %v1350 = vpop.trf.xlu0
        %v1351 = vpop.trf.xlu0
        %v1352 = vpop.trf.xlu0
        %v1353 = vpop.trf.xlu0
        %v1354 = vpop.trf.xlu0
        %1355 = vxpose.xlu0.b32.start [1/16] %v826, 128
        %1356 = vxpose.xlu0.b32.cont [2/16] 0.0, 128
        %1357 = vxpose.xlu0.b32.cont [3/16] 0.0, 128
        %1358 = vxpose.xlu0.b32.cont [4/16] 0.0, 128
        %1359 = vxpose.xlu0.b32.cont [5/16] 0.0, 128
        %1360 = vxpose.xlu0.b32.cont [6/16] 0.0, 128
        %1361 = vxpose.xlu0.b32.cont [7/16] 0.0, 128
        %1362 = vxpose.xlu0.b32.cont [8/16] 0.0, 128
        %1363 = vxpose.xlu0.b32.cont [9/16] 0.0, 128
        %1364 = vxpose.xlu0.b32.cont [10/16] 0.0, 128
        %1365 = vxpose.xlu0.b32.cont [11/16] 0.0, 128
        %1366 = vxpose.xlu0.b32.cont [12/16] 0.0, 128
        %1367 = vxpose.xlu0.b32.cont [13/16] 0.0, 128
        %1368 = vxpose.xlu0.b32.cont [14/16] 0.0, 128
        %1369 = vxpose.xlu0.b32.cont [15/16] 0.0, 128
        %1370 = vxpose.xlu0.b32.end [16/16] 0.0, 128
        %v1371 = vpop.trf.xlu0
        %v1372 = vpop.trf.xlu0
        %v1373 = vpop.trf.xlu0
        %v1374 = vpop.trf.xlu0
        %v1375 = vpop.trf.xlu0
        %v1376 = vpop.trf.xlu0
        %v1377 = vpop.trf.xlu0
        %v1378 = vpop.trf.xlu0
        %v1379 = vpop.trf.xlu0
        %v1380 = vpop.trf.xlu0
        %v1381 = vpop.trf.xlu0
        %v1382 = vpop.trf.xlu0
        %v1383 = vpop.trf.xlu0
        %v1384 = vpop.trf.xlu0
        %v1385 = vpop.trf.xlu0
        %v1386 = vpop.trf.xlu0
        %v1387 = vpack.c.bf16 %v891, %v891
        %v1388 = vpack.c.bf16 %v892, %v892
        %v1389 = vpack.c.bf16 %v893, %v893
        %v1390 = vpack.c.bf16 %v923, %v923
        %v1391 = vpack.c.bf16 %v924, %v924
        %v1392 = vpack.c.bf16 %v925, %v925
        %v1393 = vpack.c.bf16 %v955, %v955
        %v1394 = vpack.c.bf16 %v956, %v956
        %v1395 = vpack.c.bf16 %v957, %v957
        %v1396 = vpack.c.bf16 %v987, %v987
        %v1397 = vpack.c.bf16 %v988, %v988
        %v1398 = vpack.c.bf16 %v989, %v989
        %v1399 = vpack.c.bf16 %v1019, %v1019
        %v1400 = vpack.c.bf16 %v1020, %v1020
        %v1401 = vpack.c.bf16 %v1021, %v1021
        %v1402 = vpack.c.bf16 %v1051, %v1051
        %v1403 = vpack.c.bf16 %v1052, %v1052
        %v1404 = vpack.c.bf16 %v1053, %v1053
        %v1405 = vpack.c.bf16 %v1083, %v1083
        %v1406 = vpack.c.bf16 %v1084, %v1084
        %v1407 = vpack.c.bf16 %v1085, %v1085
        %v1408 = vpack.c.bf16 %v1115, %v1115
        %v1409 = vpack.c.bf16 %v1116, %v1116
        %v1410 = vpack.c.bf16 %v1117, %v1117
        %v1411 = vpack.c.bf16 %v1147, %v1147
        %v1412 = vpack.c.bf16 %v1148, %v1148
        %v1413 = vpack.c.bf16 %v1149, %v1149
        %v1414 = vpack.c.bf16 %v1179, %v1179
        %v1415 = vpack.c.bf16 %v1180, %v1180
        %v1416 = vpack.c.bf16 %v1181, %v1181
        %v1417 = vpack.c.bf16 %v1211, %v1211
        %v1418 = vpack.c.bf16 %v1212, %v1212
        %v1419 = vpack.c.bf16 %v1213, %v1213
        %v1420 = vpack.c.bf16 %v1243, %v1243
        %v1421 = vpack.c.bf16 %v1244, %v1244
        %v1422 = vpack.c.bf16 %v1245, %v1245
        %v1423 = vpack.c.bf16 %v1275, %v1275
        %v1424 = vpack.c.bf16 %v1276, %v1276
        %v1425 = vpack.c.bf16 %v1277, %v1277
        %v1426 = vpack.c.bf16 %v1307, %v1307
        %v1427 = vpack.c.bf16 %v1308, %v1308
        %v1428 = vpack.c.bf16 %v1309, %v1309
        %v1429 = vpack.c.bf16 %v1339, %v1339
        %v1430 = vpack.c.bf16 %v1340, %v1340
        %v1431 = vpack.c.bf16 %v1341, %v1341
        %v1432 = vpack.c.bf16 %v1371, %v1371
        %v1433 = vpack.c.bf16 %v1372, %v1372
        %v1434 = vpack.c.bf16 %v1373, %v1373
        %v1435 = vpack.c.bf16 %v843, %v843
        %v1436 = vpack.c.bf16 %v844, %v844
        %v1437 = vpack.c.bf16 %v845, %v845
        %v1438 = vpack.c.bf16 %v846, %v846
        %v1439 = vpack.c.bf16 %v847, %v847
        %v1440 = vpack.c.bf16 %v848, %v848
        %v1441 = vpack.c.bf16 %v849, %v849
        %v1442 = vpack.c.bf16 %v850, %v850
        %v1443 = vpack.c.bf16 %v851, %v851
        %v1444 = vpack.c.bf16 %v852, %v852
        %v1445 = vpack.c.bf16 %v853, %v853
        %v1446 = vpack.c.bf16 %v854, %v854
        %v1447 = vpack.c.bf16 %v855, %v855
        %v1448 = vpack.c.bf16 %v856, %v856
        %v1449 = vpack.c.bf16 %v857, %v857
        %v1450 = vpack.c.bf16 %v858, %v858
        %v1454 = vunpack.c.l.b16 %v1387
        %v1455 = vunpack.c.l.b16 %v1388
        %v1456 = vunpack.c.l.b16 %v1389
        %v1457 = vpack.c.b16 %v1455, %v1454
        %v1458 = vpack.c.b16 %v1456, %v1456
        %vm1459 = vcmask 64512
        %v1461 = vsel %vm1459, %v1457, 0
        %v1464 = vsel %vm1459, %v1458, 0
        %vm1466 = vcmask 1043456
        %v1468 = vsel %vm1466, %v859, 0
        %1470 = vmatpush.bf16.msra.mxu0 0
        %1471 = vmatpush.bf16.msra.mxu0 0
        %1472 = vmatpush.bf16.msra.mxu0 0
        %1473 = vmatpush.bf16.msra.mxu0 0
        %1474 = vmatpush.bf16.msra.mxu0 0
        %1475 = vmatpush.bf16.msra.mxu0 0
        %1476 = vmatpush.bf16.msra.mxu0 0
        %1477 = vmatpush.bf16.msra.mxu0 %v1468
        %1478 = vmatmul.bf16.gmra.mxu0 %v1461
        %v1479 = vpop.f32.mrf.mxu0
        %v1480 = vadd.f32 0.0, %v1479
        %v1481 = vpop.f32.mrf.mxu0
        %v1482 = vadd.f32 0.0, %v1481
        %1483 = vmatmul.bf16.gmra.mxu0 %v1464
        %v1484 = vpop.f32.mrf.mxu0
        %v1485 = vadd.f32 0.0, %v1484
        %v1486 = vpop.f32.mrf.mxu0
        %1487 = vdwg.mxu0
        %v1491 = vunpack.c.l.b16 %v1390
        %v1492 = vunpack.c.l.b16 %v1391
        %v1493 = vunpack.c.l.b16 %v1392
        %v1494 = vpack.c.b16 %v1492, %v1491
        %v1495 = vpack.c.b16 %v1493, %v1493
        %v1497 = vsel %vm1459, %v1494, 0
        %v1500 = vsel %vm1459, %v1495, 0
        %v1503 = vsel %vm1466, %v860, 0
        %1505 = vmatpush.bf16.msra.mxu0 0
        %1506 = vmatpush.bf16.msra.mxu0 0
        %1507 = vmatpush.bf16.msra.mxu0 0
        %1508 = vmatpush.bf16.msra.mxu0 0
        %1509 = vmatpush.bf16.msra.mxu0 0
        %1510 = vmatpush.bf16.msra.mxu0 0
        %1511 = vmatpush.bf16.msra.mxu0 0
        %1512 = vmatpush.bf16.msra.mxu0 %v1503
        %1513 = vmatmul.bf16.gmra.mxu0 %v1497
        %v1514 = vpop.f32.mrf.mxu0
        %v1515 = vadd.f32 0.0, %v1514
        %v1516 = vpop.f32.mrf.mxu0
        %v1517 = vadd.f32 0.0, %v1516
        %1518 = vmatmul.bf16.gmra.mxu0 %v1500
        %v1519 = vpop.f32.mrf.mxu0
        %v1520 = vadd.f32 0.0, %v1519
        %v1521 = vpop.f32.mrf.mxu0
        %1522 = vdwg.mxu0
        %v1526 = vunpack.c.l.b16 %v1393
        %v1527 = vunpack.c.l.b16 %v1394
        %v1528 = vunpack.c.l.b16 %v1395
        %v1529 = vpack.c.b16 %v1527, %v1526
        %v1530 = vpack.c.b16 %v1528, %v1528
        %v1532 = vsel %vm1459, %v1529, 0
        %v1535 = vsel %vm1459, %v1530, 0
        %v1538 = vsel %vm1466, %v861, 0
        %1540 = vmatpush.bf16.msra.mxu0 0
        %1541 = vmatpush.bf16.msra.mxu0 0
        %1542 = vmatpush.bf16.msra.mxu0 0
        %1543 = vmatpush.bf16.msra.mxu0 0
        %1544 = vmatpush.bf16.msra.mxu0 0
        %1545 = vmatpush.bf16.msra.mxu0 0
        %1546 = vmatpush.bf16.msra.mxu0 0
        %1547 = vmatpush.bf16.msra.mxu0 %v1538
        %1548 = vmatmul.bf16.gmra.mxu0 %v1532
        %v1549 = vpop.f32.mrf.mxu0
        %v1550 = vadd.f32 0.0, %v1549
        %v1551 = vpop.f32.mrf.mxu0
        %v1552 = vadd.f32 0.0, %v1551
        %1553 = vmatmul.bf16.gmra.mxu0 %v1535
        %v1554 = vpop.f32.mrf.mxu0
        %v1555 = vadd.f32 0.0, %v1554
        %v1556 = vpop.f32.mrf.mxu0
        %1557 = vdwg.mxu0
        %v1561 = vunpack.c.l.b16 %v1396
        %v1562 = vunpack.c.l.b16 %v1397
        %v1563 = vunpack.c.l.b16 %v1398
        %v1564 = vpack.c.b16 %v1562, %v1561
        %v1565 = vpack.c.b16 %v1563, %v1563
        %v1567 = vsel %vm1459, %v1564, 0
        %v1570 = vsel %vm1459, %v1565, 0
        %v1573 = vsel %vm1466, %v862, 0
        %1575 = vmatpush.bf16.msra.mxu0 0
        %1576 = vmatpush.bf16.msra.mxu0 0
        %1577 = vmatpush.bf16.msra.mxu0 0
        %1578 = vmatpush.bf16.msra.mxu0 0
        %1579 = vmatpush.bf16.msra.mxu0 0
        %1580 = vmatpush.bf16.msra.mxu0 0
        %1581 = vmatpush.bf16.msra.mxu0 0
        %1582 = vmatpush.bf16.msra.mxu0 %v1573
        %1583 = vmatmul.bf16.gmra.mxu0 %v1567
        %v1584 = vpop.f32.mrf.mxu0
        %v1585 = vadd.f32 0.0, %v1584
        %v1586 = vpop.f32.mrf.mxu0
        %v1587 = vadd.f32 0.0, %v1586
        %1588 = vmatmul.bf16.gmra.mxu0 %v1570
        %v1589 = vpop.f32.mrf.mxu0
        %v1590 = vadd.f32 0.0, %v1589
        %v1591 = vpop.f32.mrf.mxu0
        %1592 = vdwg.mxu0
        %v1596 = vunpack.c.l.b16 %v1399
        %v1597 = vunpack.c.l.b16 %v1400
        %v1598 = vunpack.c.l.b16 %v1401
        %v1599 = vpack.c.b16 %v1597, %v1596
        %v1600 = vpack.c.b16 %v1598, %v1598
        %v1602 = vsel %vm1459, %v1599, 0
        %v1605 = vsel %vm1459, %v1600, 0
        %v1608 = vsel %vm1466, %v863, 0
        %1610 = vmatpush.bf16.msra.mxu0 0
        %1611 = vmatpush.bf16.msra.mxu0 0
        %1612 = vmatpush.bf16.msra.mxu0 0
        %1613 = vmatpush.bf16.msra.mxu0 0
        %1614 = vmatpush.bf16.msra.mxu0 0
        %1615 = vmatpush.bf16.msra.mxu0 0
        %1616 = vmatpush.bf16.msra.mxu0 0
        %1617 = vmatpush.bf16.msra.mxu0 %v1608
        %1618 = vmatmul.bf16.gmra.mxu0 %v1602
        %v1619 = vpop.f32.mrf.mxu0
        %v1620 = vadd.f32 0.0, %v1619
        %v1621 = vpop.f32.mrf.mxu0
        %v1622 = vadd.f32 0.0, %v1621
        %1623 = vmatmul.bf16.gmra.mxu0 %v1605
        %v1624 = vpop.f32.mrf.mxu0
        %v1625 = vadd.f32 0.0, %v1624
        %v1626 = vpop.f32.mrf.mxu0
        %1627 = vdwg.mxu0
        %v1631 = vunpack.c.l.b16 %v1402
        %v1632 = vunpack.c.l.b16 %v1403
        %v1633 = vunpack.c.l.b16 %v1404
        %v1634 = vpack.c.b16 %v1632, %v1631
        %v1635 = vpack.c.b16 %v1633, %v1633
        %v1637 = vsel %vm1459, %v1634, 0
        %v1640 = vsel %vm1459, %v1635, 0
        %v1643 = vsel %vm1466, %v864, 0
        %1645 = vmatpush.bf16.msra.mxu0 0
        %1646 = vmatpush.bf16.msra.mxu0 0
        %1647 = vmatpush.bf16.msra.mxu0 0
        %1648 = vmatpush.bf16.msra.mxu0 0
        %1649 = vmatpush.bf16.msra.mxu0 0
        %1650 = vmatpush.bf16.msra.mxu0 0
        %1651 = vmatpush.bf16.msra.mxu0 0
        %1652 = vmatpush.bf16.msra.mxu0 %v1643
        %1653 = vmatmul.bf16.gmra.mxu0 %v1637
        %v1654 = vpop.f32.mrf.mxu0
        %v1655 = vadd.f32 0.0, %v1654
        %v1656 = vpop.f32.mrf.mxu0
        %v1657 = vadd.f32 0.0, %v1656
        %1658 = vmatmul.bf16.gmra.mxu0 %v1640
        %v1659 = vpop.f32.mrf.mxu0
        %v1660 = vadd.f32 0.0, %v1659
        %v1661 = vpop.f32.mrf.mxu0
        %1662 = vdwg.mxu0
        %v1666 = vunpack.c.l.b16 %v1405
        %v1667 = vunpack.c.l.b16 %v1406
        %v1668 = vunpack.c.l.b16 %v1407
        %v1669 = vpack.c.b16 %v1667, %v1666
        %v1670 = vpack.c.b16 %v1668, %v1668
        %v1672 = vsel %vm1459, %v1669, 0
        %v1675 = vsel %vm1459, %v1670, 0
        %v1678 = vsel %vm1466, %v865, 0
        %1680 = vmatpush.bf16.msra.mxu0 0
        %1681 = vmatpush.bf16.msra.mxu0 0
        %1682 = vmatpush.bf16.msra.mxu0 0
        %1683 = vmatpush.bf16.msra.mxu0 0
        %1684 = vmatpush.bf16.msra.mxu0 0
        %1685 = vmatpush.bf16.msra.mxu0 0
        %1686 = vmatpush.bf16.msra.mxu0 0
        %1687 = vmatpush.bf16.msra.mxu0 %v1678
        %1688 = vmatmul.bf16.gmra.mxu0 %v1672
        %v1689 = vpop.f32.mrf.mxu0
        %v1690 = vadd.f32 0.0, %v1689
        %v1691 = vpop.f32.mrf.mxu0
        %v1692 = vadd.f32 0.0, %v1691
        %1693 = vmatmul.bf16.gmra.mxu0 %v1675
        %v1694 = vpop.f32.mrf.mxu0
        %v1695 = vadd.f32 0.0, %v1694
        %v1696 = vpop.f32.mrf.mxu0
        %1697 = vdwg.mxu0
        %v1701 = vunpack.c.l.b16 %v1408
        %v1702 = vunpack.c.l.b16 %v1409
        %v1703 = vunpack.c.l.b16 %v1410
        %v1704 = vpack.c.b16 %v1702, %v1701
        %v1705 = vpack.c.b16 %v1703, %v1703
        %v1707 = vsel %vm1459, %v1704, 0
        %v1710 = vsel %vm1459, %v1705, 0
        %v1713 = vsel %vm1466, %v866, 0
        %1715 = vmatpush.bf16.msra.mxu0 0
        %1716 = vmatpush.bf16.msra.mxu0 0
        %1717 = vmatpush.bf16.msra.mxu0 0
        %1718 = vmatpush.bf16.msra.mxu0 0
        %1719 = vmatpush.bf16.msra.mxu0 0
        %1720 = vmatpush.bf16.msra.mxu0 0
        %1721 = vmatpush.bf16.msra.mxu0 0
        %1722 = vmatpush.bf16.msra.mxu0 %v1713
        %1723 = vmatmul.bf16.gmra.mxu0 %v1707
        %v1724 = vpop.f32.mrf.mxu0
        %v1725 = vadd.f32 0.0, %v1724
        %v1726 = vpop.f32.mrf.mxu0
        %v1727 = vadd.f32 0.0, %v1726
        %1728 = vmatmul.bf16.gmra.mxu0 %v1710
        %v1729 = vpop.f32.mrf.mxu0
        %v1730 = vadd.f32 0.0, %v1729
        %v1731 = vpop.f32.mrf.mxu0
        %1732 = vdwg.mxu0
        %v1736 = vunpack.c.l.b16 %v1411
        %v1737 = vunpack.c.l.b16 %v1412
        %v1738 = vunpack.c.l.b16 %v1413
        %v1739 = vpack.c.b16 %v1737, %v1736
        %v1740 = vpack.c.b16 %v1738, %v1738
        %v1742 = vsel %vm1459, %v1739, 0
        %v1745 = vsel %vm1459, %v1740, 0
        %v1748 = vsel %vm1466, %v867, 0
        %1750 = vmatpush.bf16.msra.mxu0 0
        %1751 = vmatpush.bf16.msra.mxu0 0
        %1752 = vmatpush.bf16.msra.mxu0 0
        %1753 = vmatpush.bf16.msra.mxu0 0
        %1754 = vmatpush.bf16.msra.mxu0 0
        %1755 = vmatpush.bf16.msra.mxu0 0
        %1756 = vmatpush.bf16.msra.mxu0 0
        %1757 = vmatpush.bf16.msra.mxu0 %v1748
        %1758 = vmatmul.bf16.gmra.mxu0 %v1742
        %v1759 = vpop.f32.mrf.mxu0
        %v1760 = vadd.f32 0.0, %v1759
        %v1761 = vpop.f32.mrf.mxu0
        %v1762 = vadd.f32 0.0, %v1761
        %1763 = vmatmul.bf16.gmra.mxu0 %v1745
        %v1764 = vpop.f32.mrf.mxu0
        %v1765 = vadd.f32 0.0, %v1764
        %v1766 = vpop.f32.mrf.mxu0
        %1767 = vdwg.mxu0
        %v1771 = vunpack.c.l.b16 %v1414
        %v1772 = vunpack.c.l.b16 %v1415
        %v1773 = vunpack.c.l.b16 %v1416
        %v1774 = vpack.c.b16 %v1772, %v1771
        %v1775 = vpack.c.b16 %v1773, %v1773
        %v1777 = vsel %vm1459, %v1774, 0
        %v1780 = vsel %vm1459, %v1775, 0
        %v1783 = vsel %vm1466, %v868, 0
        %1785 = vmatpush.bf16.msra.mxu0 0
        %1786 = vmatpush.bf16.msra.mxu0 0
        %1787 = vmatpush.bf16.msra.mxu0 0
        %1788 = vmatpush.bf16.msra.mxu0 0
        %1789 = vmatpush.bf16.msra.mxu0 0
        %1790 = vmatpush.bf16.msra.mxu0 0
        %1791 = vmatpush.bf16.msra.mxu0 0
        %1792 = vmatpush.bf16.msra.mxu0 %v1783
        %1793 = vmatmul.bf16.gmra.mxu0 %v1777
        %v1794 = vpop.f32.mrf.mxu0
        %v1795 = vadd.f32 0.0, %v1794
        %v1796 = vpop.f32.mrf.mxu0
        %v1797 = vadd.f32 0.0, %v1796
        %1798 = vmatmul.bf16.gmra.mxu0 %v1780
        %v1799 = vpop.f32.mrf.mxu0
        %v1800 = vadd.f32 0.0, %v1799
        %v1801 = vpop.f32.mrf.mxu0
        %1802 = vdwg.mxu0
        %v1806 = vunpack.c.l.b16 %v1417
        %v1807 = vunpack.c.l.b16 %v1418
        %v1808 = vunpack.c.l.b16 %v1419
        %v1809 = vpack.c.b16 %v1807, %v1806
        %v1810 = vpack.c.b16 %v1808, %v1808
        %v1812 = vsel %vm1459, %v1809, 0
        %v1815 = vsel %vm1459, %v1810, 0
        %v1818 = vsel %vm1466, %v869, 0
        %1820 = vmatpush.bf16.msra.mxu0 0
        %1821 = vmatpush.bf16.msra.mxu0 0
        %1822 = vmatpush.bf16.msra.mxu0 0
        %1823 = vmatpush.bf16.msra.mxu0 0
        %1824 = vmatpush.bf16.msra.mxu0 0
        %1825 = vmatpush.bf16.msra.mxu0 0
        %1826 = vmatpush.bf16.msra.mxu0 0
        %1827 = vmatpush.bf16.msra.mxu0 %v1818
        %1828 = vmatmul.bf16.gmra.mxu0 %v1812
        %v1829 = vpop.f32.mrf.mxu0
        %v1830 = vadd.f32 0.0, %v1829
        %v1831 = vpop.f32.mrf.mxu0
        %v1832 = vadd.f32 0.0, %v1831
        %1833 = vmatmul.bf16.gmra.mxu0 %v1815
        %v1834 = vpop.f32.mrf.mxu0
        %v1835 = vadd.f32 0.0, %v1834
        %v1836 = vpop.f32.mrf.mxu0
        %1837 = vdwg.mxu0
        %v1841 = vunpack.c.l.b16 %v1420
        %v1842 = vunpack.c.l.b16 %v1421
        %v1843 = vunpack.c.l.b16 %v1422
        %v1844 = vpack.c.b16 %v1842, %v1841
        %v1845 = vpack.c.b16 %v1843, %v1843
        %v1847 = vsel %vm1459, %v1844, 0
        %v1850 = vsel %vm1459, %v1845, 0
        %v1853 = vsel %vm1466, %v870, 0
        %1855 = vmatpush.bf16.msra.mxu0 0
        %1856 = vmatpush.bf16.msra.mxu0 0
        %1857 = vmatpush.bf16.msra.mxu0 0
        %1858 = vmatpush.bf16.msra.mxu0 0
        %1859 = vmatpush.bf16.msra.mxu0 0
        %1860 = vmatpush.bf16.msra.mxu0 0
        %1861 = vmatpush.bf16.msra.mxu0 0
        %1862 = vmatpush.bf16.msra.mxu0 %v1853
        %1863 = vmatmul.bf16.gmra.mxu0 %v1847
        %v1864 = vpop.f32.mrf.mxu0
        %v1865 = vadd.f32 0.0, %v1864
        %v1866 = vpop.f32.mrf.mxu0
        %v1867 = vadd.f32 0.0, %v1866
        %1868 = vmatmul.bf16.gmra.mxu0 %v1850
        %v1869 = vpop.f32.mrf.mxu0
        %v1870 = vadd.f32 0.0, %v1869
        %v1871 = vpop.f32.mrf.mxu0
        %1872 = vdwg.mxu0
        %v1876 = vunpack.c.l.b16 %v1423
        %v1877 = vunpack.c.l.b16 %v1424
        %v1878 = vunpack.c.l.b16 %v1425
        %v1879 = vpack.c.b16 %v1877, %v1876
        %v1880 = vpack.c.b16 %v1878, %v1878
        %v1882 = vsel %vm1459, %v1879, 0
        %v1885 = vsel %vm1459, %v1880, 0
        %v1888 = vsel %vm1466, %v871, 0
        %1890 = vmatpush.bf16.msra.mxu0 0
        %1891 = vmatpush.bf16.msra.mxu0 0
        %1892 = vmatpush.bf16.msra.mxu0 0
        %1893 = vmatpush.bf16.msra.mxu0 0
        %1894 = vmatpush.bf16.msra.mxu0 0
        %1895 = vmatpush.bf16.msra.mxu0 0
        %1896 = vmatpush.bf16.msra.mxu0 0
        %1897 = vmatpush.bf16.msra.mxu0 %v1888
        %1898 = vmatmul.bf16.gmra.mxu0 %v1882
        %v1899 = vpop.f32.mrf.mxu0
        %v1900 = vadd.f32 0.0, %v1899
        %v1901 = vpop.f32.mrf.mxu0
        %v1902 = vadd.f32 0.0, %v1901
        %1903 = vmatmul.bf16.gmra.mxu0 %v1885
        %v1904 = vpop.f32.mrf.mxu0
        %v1905 = vadd.f32 0.0, %v1904
        %v1906 = vpop.f32.mrf.mxu0
        %1907 = vdwg.mxu0
        %v1911 = vunpack.c.l.b16 %v1426
        %v1912 = vunpack.c.l.b16 %v1427
        %v1913 = vunpack.c.l.b16 %v1428
        %v1914 = vpack.c.b16 %v1912, %v1911
        %v1915 = vpack.c.b16 %v1913, %v1913
        %v1917 = vsel %vm1459, %v1914, 0
        %v1920 = vsel %vm1459, %v1915, 0
        %v1923 = vsel %vm1466, %v872, 0
        %1925 = vmatpush.bf16.msra.mxu0 0
        %1926 = vmatpush.bf16.msra.mxu0 0
        %1927 = vmatpush.bf16.msra.mxu0 0
        %1928 = vmatpush.bf16.msra.mxu0 0
        %1929 = vmatpush.bf16.msra.mxu0 0
        %1930 = vmatpush.bf16.msra.mxu0 0
        %1931 = vmatpush.bf16.msra.mxu0 0
        %1932 = vmatpush.bf16.msra.mxu0 %v1923
        %1933 = vmatmul.bf16.gmra.mxu0 %v1917
        %v1934 = vpop.f32.mrf.mxu0
        %v1935 = vadd.f32 0.0, %v1934
        %v1936 = vpop.f32.mrf.mxu0
        %v1937 = vadd.f32 0.0, %v1936
        %1938 = vmatmul.bf16.gmra.mxu0 %v1920
        %v1939 = vpop.f32.mrf.mxu0
        %v1940 = vadd.f32 0.0, %v1939
        %v1941 = vpop.f32.mrf.mxu0
        %1942 = vdwg.mxu0
        %v1946 = vunpack.c.l.b16 %v1429
        %v1947 = vunpack.c.l.b16 %v1430
        %v1948 = vunpack.c.l.b16 %v1431
        %v1949 = vpack.c.b16 %v1947, %v1946
        %v1950 = vpack.c.b16 %v1948, %v1948
        %v1952 = vsel %vm1459, %v1949, 0
        %v1955 = vsel %vm1459, %v1950, 0
        %v1958 = vsel %vm1466, %v873, 0
        %1960 = vmatpush.bf16.msra.mxu0 0
        %1961 = vmatpush.bf16.msra.mxu0 0
        %1962 = vmatpush.bf16.msra.mxu0 0
        %1963 = vmatpush.bf16.msra.mxu0 0
        %1964 = vmatpush.bf16.msra.mxu0 0
        %1965 = vmatpush.bf16.msra.mxu0 0
        %1966 = vmatpush.bf16.msra.mxu0 0
        %1967 = vmatpush.bf16.msra.mxu0 %v1958
        %1968 = vmatmul.bf16.gmra.mxu0 %v1952
        %v1969 = vpop.f32.mrf.mxu0
        %v1970 = vadd.f32 0.0, %v1969
        %v1971 = vpop.f32.mrf.mxu0
        %v1972 = vadd.f32 0.0, %v1971
        %1973 = vmatmul.bf16.gmra.mxu0 %v1955
        %v1974 = vpop.f32.mrf.mxu0
        %v1975 = vadd.f32 0.0, %v1974
        %v1976 = vpop.f32.mrf.mxu0
        %1977 = vdwg.mxu0
        %v1981 = vunpack.c.l.b16 %v1432
        %v1982 = vunpack.c.l.b16 %v1433
        %v1983 = vunpack.c.l.b16 %v1434
        %v1984 = vpack.c.b16 %v1982, %v1981
        %v1985 = vpack.c.b16 %v1983, %v1983
        %v1987 = vsel %vm1459, %v1984, 0
        %v1990 = vsel %vm1459, %v1985, 0
        %v1993 = vsel %vm1466, %v874, 0
        %1995 = vmatpush.bf16.msra.mxu0 0
        %1996 = vmatpush.bf16.msra.mxu0 0
        %1997 = vmatpush.bf16.msra.mxu0 0
        %1998 = vmatpush.bf16.msra.mxu0 0
        %1999 = vmatpush.bf16.msra.mxu0 0
        %2000 = vmatpush.bf16.msra.mxu0 0
        %2001 = vmatpush.bf16.msra.mxu0 0
        %2002 = vmatpush.bf16.msra.mxu0 %v1993
        %2003 = vmatmul.bf16.gmra.mxu0 %v1987
        %v2004 = vpop.f32.mrf.mxu0
        %v2005 = vadd.f32 0.0, %v2004
        %v2006 = vpop.f32.mrf.mxu0
        %v2007 = vadd.f32 0.0, %v2006
        %2008 = vmatmul.bf16.gmra.mxu0 %v1990
        %v2009 = vpop.f32.mrf.mxu0
        %v2010 = vadd.f32 0.0, %v2009
        %v2011 = vpop.f32.mrf.mxu0
        %2012 = vdwg.mxu0
        %vm2013 = vcmask 138240
        %v2014 = vsel %vm2013, %v1480, -inf
        %2015 = vmax.xlane.f32.xlu0 %v2014
        %v2016 = vpop.xlane.xlu0 %2015
        %v2017 = vsel %vm2013, %v1482, -inf
        %2018 = vmax.xlane.f32.xlu0 %v2017
        %v2019 = vpop.xlane.xlu0 %2018
        %vm2020 = vcmask 131072
        %v2021 = vsel %vm2020, %v1485, -inf
        %2022 = vmax.xlane.f32.xlu0 %v2021
        %v2023 = vpop.xlane.xlu0 %2022
        %v2024 = vsel %vm2013, %v1515, -inf
        %2025 = vmax.xlane.f32.xlu0 %v2024
        %v2026 = vpop.xlane.xlu0 %2025
        %v2027 = vsel %vm2013, %v1517, -inf
        %2028 = vmax.xlane.f32.xlu0 %v2027
        %v2029 = vpop.xlane.xlu0 %2028
        %v2030 = vsel %vm2020, %v1520, -inf
        %2031 = vmax.xlane.f32.xlu0 %v2030
        %v2032 = vpop.xlane.xlu0 %2031
        %v2033 = vsel %vm2013, %v1550, -inf
        %2034 = vmax.xlane.f32.xlu0 %v2033
        %v2035 = vpop.xlane.xlu0 %2034
        %v2036 = vsel %vm2013, %v1552, -inf
        %2037 = vmax.xlane.f32.xlu0 %v2036
        %v2038 = vpop.xlane.xlu0 %2037
        %v2039 = vsel %vm2020, %v1555, -inf
        %2040 = vmax.xlane.f32.xlu0 %v2039
        %v2041 = vpop.xlane.xlu0 %2040
        %v2042 = vsel %vm2013, %v1585, -inf
        %2043 = vmax.xlane.f32.xlu0 %v2042
        %v2044 = vpop.xlane.xlu0 %2043
        %v2045 = vsel %vm2013, %v1587, -inf
        %2046 = vmax.xlane.f32.xlu0 %v2045
        %v2047 = vpop.xlane.xlu0 %2046
        %v2048 = vsel %vm2020, %v1590, -inf
        %2049 = vmax.xlane.f32.xlu0 %v2048
        %v2050 = vpop.xlane.xlu0 %2049
        %v2051 = vsel %vm2013, %v1620, -inf
        %2052 = vmax.xlane.f32.xlu0 %v2051
        %v2053 = vpop.xlane.xlu0 %2052
        %v2054 = vsel %vm2013, %v1622, -inf
        %2055 = vmax.xlane.f32.xlu0 %v2054
        %v2056 = vpop.xlane.xlu0 %2055
        %v2057 = vsel %vm2020, %v1625, -inf
        %2058 = vmax.xlane.f32.xlu0 %v2057
        %v2059 = vpop.xlane.xlu0 %2058
        %v2060 = vsel %vm2013, %v1655, -inf
        %2061 = vmax.xlane.f32.xlu0 %v2060
        %v2062 = vpop.xlane.xlu0 %2061
        %v2063 = vsel %vm2013, %v1657, -inf
        %2064 = vmax.xlane.f32.xlu0 %v2063
        %v2065 = vpop.xlane.xlu0 %2064
        %v2066 = vsel %vm2020, %v1660, -inf
        %2067 = vmax.xlane.f32.xlu0 %v2066
        %v2068 = vpop.xlane.xlu0 %2067
        %v2069 = vsel %vm2013, %v1690, -inf
        %2070 = vmax.xlane.f32.xlu0 %v2069
        %v2071 = vpop.xlane.xlu0 %2070
        %v2072 = vsel %vm2013, %v1692, -inf
        %2073 = vmax.xlane.f32.xlu0 %v2072
        %v2074 = vpop.xlane.xlu0 %2073
        %v2075 = vsel %vm2020, %v1695, -inf
        %2076 = vmax.xlane.f32.xlu0 %v2075
        %v2077 = vpop.xlane.xlu0 %2076
        %v2078 = vsel %vm2013, %v1725, -inf
        %2079 = vmax.xlane.f32.xlu0 %v2078
        %v2080 = vpop.xlane.xlu0 %2079
        %v2081 = vsel %vm2013, %v1727, -inf
        %2082 = vmax.xlane.f32.xlu0 %v2081
        %v2083 = vpop.xlane.xlu0 %2082
        %v2084 = vsel %vm2020, %v1730, -inf
        %2085 = vmax.xlane.f32.xlu0 %v2084
        %v2086 = vpop.xlane.xlu0 %2085
        %v2087 = vsel %vm2013, %v1760, -inf
        %2088 = vmax.xlane.f32.xlu0 %v2087
        %v2089 = vpop.xlane.xlu0 %2088
        %v2090 = vsel %vm2013, %v1762, -inf
        %2091 = vmax.xlane.f32.xlu0 %v2090
        %v2092 = vpop.xlane.xlu0 %2091
        %v2093 = vsel %vm2020, %v1765, -inf
        %2094 = vmax.xlane.f32.xlu0 %v2093
        %v2095 = vpop.xlane.xlu0 %2094
        %v2096 = vsel %vm2013, %v1795, -inf
        %2097 = vmax.xlane.f32.xlu0 %v2096
        %v2098 = vpop.xlane.xlu0 %2097
        %v2099 = vsel %vm2013, %v1797, -inf
        %2100 = vmax.xlane.f32.xlu0 %v2099
        %v2101 = vpop.xlane.xlu0 %2100
        %v2102 = vsel %vm2020, %v1800, -inf
        %2103 = vmax.xlane.f32.xlu0 %v2102
        %v2104 = vpop.xlane.xlu0 %2103
        %v2105 = vsel %vm2013, %v1830, -inf
        %2106 = vmax.xlane.f32.xlu0 %v2105
        %v2107 = vpop.xlane.xlu0 %2106
        %v2108 = vsel %vm2013, %v1832, -inf
        %2109 = vmax.xlane.f32.xlu0 %v2108
        %v2110 = vpop.xlane.xlu0 %2109
        %v2111 = vsel %vm2020, %v1835, -inf
        %2112 = vmax.xlane.f32.xlu0 %v2111
        %v2113 = vpop.xlane.xlu0 %2112
        %v2114 = vsel %vm2013, %v1865, -inf
        %2115 = vmax.xlane.f32.xlu0 %v2114
        %v2116 = vpop.xlane.xlu0 %2115
        %v2117 = vsel %vm2013, %v1867, -inf
        %2118 = vmax.xlane.f32.xlu0 %v2117
        %v2119 = vpop.xlane.xlu0 %2118
        %v2120 = vsel %vm2020, %v1870, -inf
        %2121 = vmax.xlane.f32.xlu0 %v2120
        %v2122 = vpop.xlane.xlu0 %2121
        %v2123 = vsel %vm2013, %v1900, -inf
        %2124 = vmax.xlane.f32.xlu0 %v2123
        %v2125 = vpop.xlane.xlu0 %2124
        %v2126 = vsel %vm2013, %v1902, -inf
        %2127 = vmax.xlane.f32.xlu0 %v2126
        %v2128 = vpop.xlane.xlu0 %2127
        %v2129 = vsel %vm2020, %v1905, -inf
        %2130 = vmax.xlane.f32.xlu0 %v2129
        %v2131 = vpop.xlane.xlu0 %2130
        %v2132 = vsel %vm2013, %v1935, -inf
        %2133 = vmax.xlane.f32.xlu0 %v2132
        %v2134 = vpop.xlane.xlu0 %2133
        %v2135 = vsel %vm2013, %v1937, -inf
        %2136 = vmax.xlane.f32.xlu0 %v2135
        %v2137 = vpop.xlane.xlu0 %2136
        %v2138 = vsel %vm2020, %v1940, -inf
        %2139 = vmax.xlane.f32.xlu0 %v2138
        %v2140 = vpop.xlane.xlu0 %2139
        %v2141 = vsel %vm2013, %v1970, -inf
        %2142 = vmax.xlane.f32.xlu0 %v2141
        %v2143 = vpop.xlane.xlu0 %2142
        %v2144 = vsel %vm2013, %v1972, -inf
        %2145 = vmax.xlane.f32.xlu0 %v2144
        %v2146 = vpop.xlane.xlu0 %2145
        %v2147 = vsel %vm2020, %v1975, -inf
        %2148 = vmax.xlane.f32.xlu0 %v2147
        %v2149 = vpop.xlane.xlu0 %2148
        %v2150 = vsel %vm2013, %v2005, -inf
        %2151 = vmax.xlane.f32.xlu0 %v2150
        %v2152 = vpop.xlane.xlu0 %2151
        %v2153 = vsel %vm2013, %v2007, -inf
        %2154 = vmax.xlane.f32.xlu0 %v2153
        %v2155 = vpop.xlane.xlu0 %2154
        %v2156 = vsel %vm2020, %v2010, -inf
        %2157 = vmax.xlane.f32.xlu0 %v2156
        %v2158 = vpop.xlane.xlu0 %2157
        %v2159 = vsub.f32 %v1480, %v2016
        %v2160 = vsub.f32 %v1482, %v2019
        %v2161 = vsub.f32 %v1485, %v2023
        %v2162 = vsub.f32 %v1515, %v2026
        %v2163 = vsub.f32 %v1517, %v2029
        %v2164 = vsub.f32 %v1520, %v2032
        %v2165 = vsub.f32 %v1550, %v2035
        %v2166 = vsub.f32 %v1552, %v2038
        %v2167 = vsub.f32 %v1555, %v2041
        %v2168 = vsub.f32 %v1585, %v2044
        %v2169 = vsub.f32 %v1587, %v2047
        %v2170 = vsub.f32 %v1590, %v2050
        %v2171 = vsub.f32 %v1620, %v2053
        %v2172 = vsub.f32 %v1622, %v2056
        %v2173 = vsub.f32 %v1625, %v2059
        %v2174 = vsub.f32 %v1655, %v2062
        %v2175 = vsub.f32 %v1657, %v2065
        %v2176 = vsub.f32 %v1660, %v2068
        %v2177 = vsub.f32 %v1690, %v2071
        %v2178 = vsub.f32 %v1692, %v2074
        %v2179 = vsub.f32 %v1695, %v2077
        %v2180 = vsub.f32 %v1725, %v2080
        %v2181 = vsub.f32 %v1727, %v2083
        %v2182 = vsub.f32 %v1730, %v2086
        %v2183 = vsub.f32 %v1760, %v2089
        %v2184 = vsub.f32 %v1762, %v2092
        %v2185 = vsub.f32 %v1765, %v2095
        %v2186 = vsub.f32 %v1795, %v2098
        %v2187 = vsub.f32 %v1797, %v2101
        %v2188 = vsub.f32 %v1800, %v2104
        %v2189 = vsub.f32 %v1830, %v2107
        %v2190 = vsub.f32 %v1832, %v2110
        %v2191 = vsub.f32 %v1835, %v2113
        %v2192 = vsub.f32 %v1865, %v2116
        %v2193 = vsub.f32 %v1867, %v2119
        %v2194 = vsub.f32 %v1870, %v2122
        %v2195 = vsub.f32 %v1900, %v2125
        %v2196 = vsub.f32 %v1902, %v2128
        %v2197 = vsub.f32 %v1905, %v2131
        %v2198 = vsub.f32 %v1935, %v2134
        %v2199 = vsub.f32 %v1937, %v2137
        %v2200 = vsub.f32 %v1940, %v2140
        %v2201 = vsub.f32 %v1970, %v2143
        %v2202 = vsub.f32 %v1972, %v2146
        %v2203 = vsub.f32 %v1975, %v2149
        %v2204 = vsub.f32 %v2005, %v2152
        %v2205 = vsub.f32 %v2007, %v2155
        %v2206 = vsub.f32 %v2010, %v2158
        %v2207 = vmul.f32 %v2159, 1.442695
        %v2208 = vpow.pop %v2207
        %v2209 = vmul.f32 %v2160, 1.442695
        %v2210 = vpow.pop %v2209
        %v2211 = vmul.f32 %v2161, 1.442695
        %v2212 = vpow.pop %v2211
        %v2213 = vmul.f32 %v2162, 1.442695
        %v2214 = vpow.pop %v2213
        %v2215 = vmul.f32 %v2163, 1.442695
        %v2216 = vpow.pop %v2215
        %v2217 = vmul.f32 %v2164, 1.442695
        %v2218 = vpow.pop %v2217
        %v2219 = vmul.f32 %v2165, 1.442695
        %v2220 = vpow.pop %v2219
        %v2221 = vmul.f32 %v2166, 1.442695
        %v2222 = vpow.pop %v2221
        %v2223 = vmul.f32 %v2167, 1.442695
        %v2224 = vpow.pop %v2223
        %v2225 = vmul.f32 %v2168, 1.442695
        %v2226 = vpow.pop %v2225
        %v2227 = vmul.f32 %v2169, 1.442695
        %v2228 = vpow.pop %v2227
        %v2229 = vmul.f32 %v2170, 1.442695
        %v2230 = vpow.pop %v2229
        %v2231 = vmul.f32 %v2171, 1.442695
        %v2232 = vpow.pop %v2231
        %v2233 = vmul.f32 %v2172, 1.442695
        %v2234 = vpow.pop %v2233
        %v2235 = vmul.f32 %v2173, 1.442695
        %v2236 = vpow.pop %v2235
        %v2237 = vmul.f32 %v2174, 1.442695
        %v2238 = vpow.pop %v2237
        %v2239 = vmul.f32 %v2175, 1.442695
        %v2240 = vpow.pop %v2239
        %v2241 = vmul.f32 %v2176, 1.442695
        %v2242 = vpow.pop %v2241
        %v2243 = vmul.f32 %v2177, 1.442695
        %v2244 = vpow.pop %v2243
        %v2245 = vmul.f32 %v2178, 1.442695
        %v2246 = vpow.pop %v2245
        %v2247 = vmul.f32 %v2179, 1.442695
        %v2248 = vpow.pop %v2247
        %v2249 = vmul.f32 %v2180, 1.442695
        %v2250 = vpow.pop %v2249
        %v2251 = vmul.f32 %v2181, 1.442695
        %v2252 = vpow.pop %v2251
        %v2253 = vmul.f32 %v2182, 1.442695
        %v2254 = vpow.pop %v2253
        %v2255 = vmul.f32 %v2183, 1.442695
        %v2256 = vpow.pop %v2255
        %v2257 = vmul.f32 %v2184, 1.442695
        %v2258 = vpow.pop %v2257
        %v2259 = vmul.f32 %v2185, 1.442695
        %v2260 = vpow.pop %v2259
        %v2261 = vmul.f32 %v2186, 1.442695
        %v2262 = vpow.pop %v2261
        %v2263 = vmul.f32 %v2187, 1.442695
        %v2264 = vpow.pop %v2263
        %v2265 = vmul.f32 %v2188, 1.442695
        %v2266 = vpow.pop %v2265
        %v2267 = vmul.f32 %v2189, 1.442695
        %v2268 = vpow.pop %v2267
        %v2269 = vmul.f32 %v2190, 1.442695
        %v2270 = vpow.pop %v2269
        %v2271 = vmul.f32 %v2191, 1.442695
        %v2272 = vpow.pop %v2271
        %v2273 = vmul.f32 %v2192, 1.442695
        %v2274 = vpow.pop %v2273
        %v2275 = vmul.f32 %v2193, 1.442695
        %v2276 = vpow.pop %v2275
        %v2277 = vmul.f32 %v2194, 1.442695
        %v2278 = vpow.pop %v2277
        %v2279 = vmul.f32 %v2195, 1.442695
        %v2280 = vpow.pop %v2279
        %v2281 = vmul.f32 %v2196, 1.442695
        %v2282 = vpow.pop %v2281
        %v2283 = vmul.f32 %v2197, 1.442695
        %v2284 = vpow.pop %v2283
        %v2285 = vmul.f32 %v2198, 1.442695
        %v2286 = vpow.pop %v2285
        %v2287 = vmul.f32 %v2199, 1.442695
        %v2288 = vpow.pop %v2287
        %v2289 = vmul.f32 %v2200, 1.442695
        %v2290 = vpow.pop %v2289
        %v2291 = vmul.f32 %v2201, 1.442695
        %v2292 = vpow.pop %v2291
        %v2293 = vmul.f32 %v2202, 1.442695
        %v2294 = vpow.pop %v2293
        %v2295 = vmul.f32 %v2203, 1.442695
        %v2296 = vpow.pop %v2295
        %v2297 = vmul.f32 %v2204, 1.442695
        %v2298 = vpow.pop %v2297
        %v2299 = vmul.f32 %v2205, 1.442695
        %v2300 = vpow.pop %v2299
        %v2301 = vmul.f32 %v2206, 1.442695
        %v2302 = vpow.pop %v2301
        %v2303 = vsel %vm2013, %v2208, 0.0
        %2304 = vadd.xlane.f32.xlu0 %v2303
        %v2305 = vpop.xlane.xlu0 %2304
        %v2306 = vsel %vm2013, %v2210, 0.0
        %2307 = vadd.xlane.f32.xlu0 %v2306
        %v2308 = vpop.xlane.xlu0 %2307
        %v2309 = vsel %vm2020, %v2212, 0.0
        %2310 = vadd.xlane.f32.xlu0 %v2309
        %v2311 = vpop.xlane.xlu0 %2310
        %v2312 = vsel %vm2013, %v2214, 0.0
        %2313 = vadd.xlane.f32.xlu0 %v2312
        %v2314 = vpop.xlane.xlu0 %2313
        %v2315 = vsel %vm2013, %v2216, 0.0
        %2316 = vadd.xlane.f32.xlu0 %v2315
        %v2317 = vpop.xlane.xlu0 %2316
        %v2318 = vsel %vm2020, %v2218, 0.0
        %2319 = vadd.xlane.f32.xlu0 %v2318
        %v2320 = vpop.xlane.xlu0 %2319
        %v2321 = vsel %vm2013, %v2220, 0.0
        %2322 = vadd.xlane.f32.xlu0 %v2321
        %v2323 = vpop.xlane.xlu0 %2322
        %v2324 = vsel %vm2013, %v2222, 0.0
        %2325 = vadd.xlane.f32.xlu0 %v2324
        %v2326 = vpop.xlane.xlu0 %2325
        %v2327 = vsel %vm2020, %v2224, 0.0
        %2328 = vadd.xlane.f32.xlu0 %v2327
        %v2329 = vpop.xlane.xlu0 %2328
        %v2330 = vsel %vm2013, %v2226, 0.0
        %2331 = vadd.xlane.f32.xlu0 %v2330
        %v2332 = vpop.xlane.xlu0 %2331
        %v2333 = vsel %vm2013, %v2228, 0.0
        %2334 = vadd.xlane.f32.xlu0 %v2333
        %v2335 = vpop.xlane.xlu0 %2334
        %v2336 = vsel %vm2020, %v2230, 0.0
        %2337 = vadd.xlane.f32.xlu0 %v2336
        %v2338 = vpop.xlane.xlu0 %2337
        %v2339 = vsel %vm2013, %v2232, 0.0
        %2340 = vadd.xlane.f32.xlu0 %v2339
        %v2341 = vpop.xlane.xlu0 %2340
        %v2342 = vsel %vm2013, %v2234, 0.0
        %2343 = vadd.xlane.f32.xlu0 %v2342
        %v2344 = vpop.xlane.xlu0 %2343
        %v2345 = vsel %vm2020, %v2236, 0.0
        %2346 = vadd.xlane.f32.xlu0 %v2345
        %v2347 = vpop.xlane.xlu0 %2346
        %v2348 = vsel %vm2013, %v2238, 0.0
        %2349 = vadd.xlane.f32.xlu0 %v2348
        %v2350 = vpop.xlane.xlu0 %2349
        %v2351 = vsel %vm2013, %v2240, 0.0
        %2352 = vadd.xlane.f32.xlu0 %v2351
        %v2353 = vpop.xlane.xlu0 %2352
        %v2354 = vsel %vm2020, %v2242, 0.0
        %2355 = vadd.xlane.f32.xlu0 %v2354
        %v2356 = vpop.xlane.xlu0 %2355
        %v2357 = vsel %vm2013, %v2244, 0.0
        %2358 = vadd.xlane.f32.xlu0 %v2357
        %v2359 = vpop.xlane.xlu0 %2358
        %v2360 = vsel %vm2013, %v2246, 0.0
        %2361 = vadd.xlane.f32.xlu0 %v2360
        %v2362 = vpop.xlane.xlu0 %2361
        %v2363 = vsel %vm2020, %v2248, 0.0
        %2364 = vadd.xlane.f32.xlu0 %v2363
        %v2365 = vpop.xlane.xlu0 %2364
        %v2366 = vsel %vm2013, %v2250, 0.0
        %2367 = vadd.xlane.f32.xlu0 %v2366
        %v2368 = vpop.xlane.xlu0 %2367
        %v2369 = vsel %vm2013, %v2252, 0.0
        %2370 = vadd.xlane.f32.xlu0 %v2369
        %v2371 = vpop.xlane.xlu0 %2370
        %v2372 = vsel %vm2020, %v2254, 0.0
        %2373 = vadd.xlane.f32.xlu0 %v2372
        %v2374 = vpop.xlane.xlu0 %2373
        %v2375 = vsel %vm2013, %v2256, 0.0
        %2376 = vadd.xlane.f32.xlu0 %v2375
        %v2377 = vpop.xlane.xlu0 %2376
        %v2378 = vsel %vm2013, %v2258, 0.0
        %2379 = vadd.xlane.f32.xlu0 %v2378
        %v2380 = vpop.xlane.xlu0 %2379
        %v2381 = vsel %vm2020, %v2260, 0.0
        %2382 = vadd.xlane.f32.xlu0 %v2381
        %v2383 = vpop.xlane.xlu0 %2382
        %v2384 = vsel %vm2013, %v2262, 0.0
        %2385 = vadd.xlane.f32.xlu0 %v2384
        %v2386 = vpop.xlane.xlu0 %2385
        %v2387 = vsel %vm2013, %v2264, 0.0
        %2388 = vadd.xlane.f32.xlu0 %v2387
        %v2389 = vpop.xlane.xlu0 %2388
        %v2390 = vsel %vm2020, %v2266, 0.0
        %2391 = vadd.xlane.f32.xlu0 %v2390
        %v2392 = vpop.xlane.xlu0 %2391
        %v2393 = vsel %vm2013, %v2268, 0.0
        %2394 = vadd.xlane.f32.xlu0 %v2393
        %v2395 = vpop.xlane.xlu0 %2394
        %v2396 = vsel %vm2013, %v2270, 0.0
        %2397 = vadd.xlane.f32.xlu0 %v2396
        %v2398 = vpop.xlane.xlu0 %2397
        %v2399 = vsel %vm2020, %v2272, 0.0
        %2400 = vadd.xlane.f32.xlu0 %v2399
        %v2401 = vpop.xlane.xlu0 %2400
        %v2402 = vsel %vm2013, %v2274, 0.0
        %2403 = vadd.xlane.f32.xlu0 %v2402
        %v2404 = vpop.xlane.xlu0 %2403
        %v2405 = vsel %vm2013, %v2276, 0.0
        %2406 = vadd.xlane.f32.xlu0 %v2405
        %v2407 = vpop.xlane.xlu0 %2406
        %v2408 = vsel %vm2020, %v2278, 0.0
        %2409 = vadd.xlane.f32.xlu0 %v2408
        %v2410 = vpop.xlane.xlu0 %2409
        %v2411 = vsel %vm2013, %v2280, 0.0
        %2412 = vadd.xlane.f32.xlu0 %v2411
        %v2413 = vpop.xlane.xlu0 %2412
        %v2414 = vsel %vm2013, %v2282, 0.0
        %2415 = vadd.xlane.f32.xlu0 %v2414
        %v2416 = vpop.xlane.xlu0 %2415
        %v2417 = vsel %vm2020, %v2284, 0.0
        %2418 = vadd.xlane.f32.xlu0 %v2417
        %v2419 = vpop.xlane.xlu0 %2418
        %v2420 = vsel %vm2013, %v2286, 0.0
        %2421 = vadd.xlane.f32.xlu0 %v2420
        %v2422 = vpop.xlane.xlu0 %2421
        %v2423 = vsel %vm2013, %v2288, 0.0
        %2424 = vadd.xlane.f32.xlu0 %v2423
        %v2425 = vpop.xlane.xlu0 %2424
        %v2426 = vsel %vm2020, %v2290, 0.0
        %2427 = vadd.xlane.f32.xlu0 %v2426
        %v2428 = vpop.xlane.xlu0 %2427
        %v2429 = vsel %vm2013, %v2292, 0.0
        %2430 = vadd.xlane.f32.xlu0 %v2429
        %v2431 = vpop.xlane.xlu0 %2430
        %v2432 = vsel %vm2013, %v2294, 0.0
        %2433 = vadd.xlane.f32.xlu0 %v2432
        %v2434 = vpop.xlane.xlu0 %2433
        %v2435 = vsel %vm2020, %v2296, 0.0
        %2436 = vadd.xlane.f32.xlu0 %v2435
        %v2437 = vpop.xlane.xlu0 %2436
        %v2438 = vsel %vm2013, %v2298, 0.0
        %2439 = vadd.xlane.f32.xlu0 %v2438
        %v2440 = vpop.xlane.xlu0 %2439
        %v2441 = vsel %vm2013, %v2300, 0.0
        %2442 = vadd.xlane.f32.xlu0 %v2441
        %v2443 = vpop.xlane.xlu0 %2442
        %v2444 = vsel %vm2020, %v2302, 0.0
        %2445 = vadd.xlane.f32.xlu0 %v2444
        %v2446 = vpop.xlane.xlu0 %2445
        %v2447 = vrcp.pop %v2305
        %v2448 = vrcp.pop %v2308
        %v2449 = vrcp.pop %v2311
        %v2450 = vrcp.pop %v2314
        %v2451 = vrcp.pop %v2317
        %v2452 = vrcp.pop %v2320
        %v2453 = vrcp.pop %v2323
        %v2454 = vrcp.pop %v2326
        %v2455 = vrcp.pop %v2329
        %v2456 = vrcp.pop %v2332
        %v2457 = vrcp.pop %v2335
        %v2458 = vrcp.pop %v2338
        %v2459 = vrcp.pop %v2341
        %v2460 = vrcp.pop %v2344
        %v2461 = vrcp.pop %v2347
        %v2462 = vrcp.pop %v2350
        %v2463 = vrcp.pop %v2353
        %v2464 = vrcp.pop %v2356
        %v2465 = vrcp.pop %v2359
        %v2466 = vrcp.pop %v2362
        %v2467 = vrcp.pop %v2365
        %v2468 = vrcp.pop %v2368
        %v2469 = vrcp.pop %v2371
        %v2470 = vrcp.pop %v2374
        %v2471 = vrcp.pop %v2377
        %v2472 = vrcp.pop %v2380
        %v2473 = vrcp.pop %v2383
        %v2474 = vrcp.pop %v2386
        %v2475 = vrcp.pop %v2389
        %v2476 = vrcp.pop %v2392
        %v2477 = vrcp.pop %v2395
        %v2478 = vrcp.pop %v2398
        %v2479 = vrcp.pop %v2401
        %v2480 = vrcp.pop %v2404
        %v2481 = vrcp.pop %v2407
        %v2482 = vrcp.pop %v2410
        %v2483 = vrcp.pop %v2413
        %v2484 = vrcp.pop %v2416
        %v2485 = vrcp.pop %v2419
        %v2486 = vrcp.pop %v2422
        %v2487 = vrcp.pop %v2425
        %v2488 = vrcp.pop %v2428
        %v2489 = vrcp.pop %v2431
        %v2490 = vrcp.pop %v2434
        %v2491 = vrcp.pop %v2437
        %v2492 = vrcp.pop %v2440
        %v2493 = vrcp.pop %v2443
        %v2494 = vrcp.pop %v2446
        %v2495 = vmul.f32 %v2208, %v2447
        %v2496 = vmul.f32 %v2210, %v2448
        %v2497 = vmul.f32 %v2212, %v2449
        %v2498 = vmul.f32 %v2214, %v2450
        %v2499 = vmul.f32 %v2216, %v2451
        %v2500 = vmul.f32 %v2218, %v2452
        %v2501 = vmul.f32 %v2220, %v2453
        %v2502 = vmul.f32 %v2222, %v2454
        %v2503 = vmul.f32 %v2224, %v2455
        %v2504 = vmul.f32 %v2226, %v2456
        %v2505 = vmul.f32 %v2228, %v2457
        %v2506 = vmul.f32 %v2230, %v2458
        %v2507 = vmul.f32 %v2232, %v2459
        %v2508 = vmul.f32 %v2234, %v2460
        %v2509 = vmul.f32 %v2236, %v2461
        %v2510 = vmul.f32 %v2238, %v2462
        %v2511 = vmul.f32 %v2240, %v2463
        %v2512 = vmul.f32 %v2242, %v2464
        %v2513 = vmul.f32 %v2244, %v2465
        %v2514 = vmul.f32 %v2246, %v2466
        %v2515 = vmul.f32 %v2248, %v2467
        %v2516 = vmul.f32 %v2250, %v2468
        %v2517 = vmul.f32 %v2252, %v2469
        %v2518 = vmul.f32 %v2254, %v2470
        %v2519 = vmul.f32 %v2256, %v2471
        %v2520 = vmul.f32 %v2258, %v2472
        %v2521 = vmul.f32 %v2260, %v2473
        %v2522 = vmul.f32 %v2262, %v2474
        %v2523 = vmul.f32 %v2264, %v2475
        %v2524 = vmul.f32 %v2266, %v2476
        %v2525 = vmul.f32 %v2268, %v2477
        %v2526 = vmul.f32 %v2270, %v2478
        %v2527 = vmul.f32 %v2272, %v2479
        %v2528 = vmul.f32 %v2274, %v2480
        %v2529 = vmul.f32 %v2276, %v2481
        %v2530 = vmul.f32 %v2278, %v2482
        %v2531 = vmul.f32 %v2280, %v2483
        %v2532 = vmul.f32 %v2282, %v2484
        %v2533 = vmul.f32 %v2284, %v2485
        %v2534 = vmul.f32 %v2286, %v2486
        %v2535 = vmul.f32 %v2288, %v2487
        %v2536 = vmul.f32 %v2290, %v2488
        %v2537 = vmul.f32 %v2292, %v2489
        %v2538 = vmul.f32 %v2294, %v2490
        %v2539 = vmul.f32 %v2296, %v2491
        %v2540 = vmul.f32 %v2298, %v2492
        %v2541 = vmul.f32 %v2300, %v2493
        %v2542 = vmul.f32 %v2302, %v2494
        %v2543 = vpack.c.bf16 %v2495, %v2495
        %v2544 = vpack.c.bf16 %v2496, %v2496
        %v2545 = vpack.c.bf16 %v2497, %v2497
        %v2546 = vpack.c.bf16 %v2498, %v2498
        %v2547 = vpack.c.bf16 %v2499, %v2499
        %v2548 = vpack.c.bf16 %v2500, %v2500
        %v2549 = vpack.c.bf16 %v2501, %v2501
        %v2550 = vpack.c.bf16 %v2502, %v2502
        %v2551 = vpack.c.bf16 %v2503, %v2503
        %v2552 = vpack.c.bf16 %v2504, %v2504
        %v2553 = vpack.c.bf16 %v2505, %v2505
        %v2554 = vpack.c.bf16 %v2506, %v2506
        %v2555 = vpack.c.bf16 %v2507, %v2507
        %v2556 = vpack.c.bf16 %v2508, %v2508
        %v2557 = vpack.c.bf16 %v2509, %v2509
        %v2558 = vpack.c.bf16 %v2510, %v2510
        %v2559 = vpack.c.bf16 %v2511, %v2511
        %v2560 = vpack.c.bf16 %v2512, %v2512
        %v2561 = vpack.c.bf16 %v2513, %v2513
        %v2562 = vpack.c.bf16 %v2514, %v2514
        %v2563 = vpack.c.bf16 %v2515, %v2515
        %v2564 = vpack.c.bf16 %v2516, %v2516
        %v2565 = vpack.c.bf16 %v2517, %v2517
        %v2566 = vpack.c.bf16 %v2518, %v2518
        %v2567 = vpack.c.bf16 %v2519, %v2519
        %v2568 = vpack.c.bf16 %v2520, %v2520
        %v2569 = vpack.c.bf16 %v2521, %v2521
        %v2570 = vpack.c.bf16 %v2522, %v2522
        %v2571 = vpack.c.bf16 %v2523, %v2523
        %v2572 = vpack.c.bf16 %v2524, %v2524
        %v2573 = vpack.c.bf16 %v2525, %v2525
        %v2574 = vpack.c.bf16 %v2526, %v2526
        %v2575 = vpack.c.bf16 %v2527, %v2527
        %v2576 = vpack.c.bf16 %v2528, %v2528
        %v2577 = vpack.c.bf16 %v2529, %v2529
        %v2578 = vpack.c.bf16 %v2530, %v2530
        %v2579 = vpack.c.bf16 %v2531, %v2531
        %v2580 = vpack.c.bf16 %v2532, %v2532
        %v2581 = vpack.c.bf16 %v2533, %v2533
        %v2582 = vpack.c.bf16 %v2534, %v2534
        %v2583 = vpack.c.bf16 %v2535, %v2535
        %v2584 = vpack.c.bf16 %v2536, %v2536
        %v2585 = vpack.c.bf16 %v2537, %v2537
        %v2586 = vpack.c.bf16 %v2538, %v2538
        %v2587 = vpack.c.bf16 %v2539, %v2539
        %v2588 = vpack.c.bf16 %v2540, %v2540
        %v2589 = vpack.c.bf16 %v2541, %v2541
        %v2590 = vpack.c.bf16 %v2542, %v2542
        %v2594 = vunpack.c.l.b16 %v2543
        %v2595 = vunpack.c.l.b16 %v2544
        %v2596 = vunpack.c.l.b16 %v2545
        %v2597 = vpack.c.b16 %v2595, %v2594
        %v2598 = vpack.c.b16 %v2596, %v2596
        %v2600 = vsel %vm2013, %v1435, 0
        %v2603 = vsel %vm2013, %v2597, 0
        %v2606 = vsel %vm2013, %v2598, 0
        %2608 = vmatpush.bf16.xpose.msra.mxu0 0
        %2609 = vmatpush.bf16.xpose.msra.mxu0 0
        %2610 = vmatpush.bf16.xpose.msra.mxu0 0
        %2611 = vmatpush.bf16.xpose.msra.mxu0 0
        %2612 = vmatpush.bf16.xpose.msra.mxu0 0
        %2613 = vmatpush.bf16.xpose.msra.mxu0 0
        %2614 = vmatpush.bf16.xpose.msra.mxu0 %v2606
        %2615 = vmatpush.bf16.xpose.msra.mxu0 %v2603
        %2616 = vmatmul.bf16.gmra.mxu0 %v2600
        %v2617 = vpop.f32.mrf.mxu0
        %v2618 = vadd.f32 0.0, %v2617
        %v2619 = vpop.f32.mrf.mxu0
        %2620 = vdwg.mxu0
        %v2624 = vunpack.c.l.b16 %v2546
        %v2625 = vunpack.c.l.b16 %v2547
        %v2626 = vunpack.c.l.b16 %v2548
        %v2627 = vpack.c.b16 %v2625, %v2624
        %v2628 = vpack.c.b16 %v2626, %v2626
        %v2630 = vsel %vm2013, %v1436, 0
        %v2633 = vsel %vm2013, %v2627, 0
        %v2636 = vsel %vm2013, %v2628, 0
        %2638 = vmatpush.bf16.xpose.msra.mxu0 0
        %2639 = vmatpush.bf16.xpose.msra.mxu0 0
        %2640 = vmatpush.bf16.xpose.msra.mxu0 0
        %2641 = vmatpush.bf16.xpose.msra.mxu0 0
        %2642 = vmatpush.bf16.xpose.msra.mxu0 0
        %2643 = vmatpush.bf16.xpose.msra.mxu0 0
        %2644 = vmatpush.bf16.xpose.msra.mxu0 %v2636
        %2645 = vmatpush.bf16.xpose.msra.mxu0 %v2633
        %2646 = vmatmul.bf16.gmra.mxu0 %v2630
        %v2647 = vpop.f32.mrf.mxu0
        %v2648 = vadd.f32 0.0, %v2647
        %v2649 = vpop.f32.mrf.mxu0
        %2650 = vdwg.mxu0
        %v2654 = vunpack.c.l.b16 %v2549
        %v2655 = vunpack.c.l.b16 %v2550
        %v2656 = vunpack.c.l.b16 %v2551
        %v2657 = vpack.c.b16 %v2655, %v2654
        %v2658 = vpack.c.b16 %v2656, %v2656
        %v2660 = vsel %vm2013, %v1437, 0
        %v2663 = vsel %vm2013, %v2657, 0
        %v2666 = vsel %vm2013, %v2658, 0
        %2668 = vmatpush.bf16.xpose.msra.mxu0 0
        %2669 = vmatpush.bf16.xpose.msra.mxu0 0
        %2670 = vmatpush.bf16.xpose.msra.mxu0 0
        %2671 = vmatpush.bf16.xpose.msra.mxu0 0
        %2672 = vmatpush.bf16.xpose.msra.mxu0 0
        %2673 = vmatpush.bf16.xpose.msra.mxu0 0
        %2674 = vmatpush.bf16.xpose.msra.mxu0 %v2666
        %2675 = vmatpush.bf16.xpose.msra.mxu0 %v2663
        %2676 = vmatmul.bf16.gmra.mxu0 %v2660
        %v2677 = vpop.f32.mrf.mxu0
        %v2678 = vadd.f32 0.0, %v2677
        %v2679 = vpop.f32.mrf.mxu0
        %2680 = vdwg.mxu0
        %v2684 = vunpack.c.l.b16 %v2552
        %v2685 = vunpack.c.l.b16 %v2553
        %v2686 = vunpack.c.l.b16 %v2554
        %v2687 = vpack.c.b16 %v2685, %v2684
        %v2688 = vpack.c.b16 %v2686, %v2686
        %v2690 = vsel %vm2013, %v1438, 0
        %v2693 = vsel %vm2013, %v2687, 0
        %v2696 = vsel %vm2013, %v2688, 0
        %2698 = vmatpush.bf16.xpose.msra.mxu0 0
        %2699 = vmatpush.bf16.xpose.msra.mxu0 0
        %2700 = vmatpush.bf16.xpose.msra.mxu0 0
        %2701 = vmatpush.bf16.xpose.msra.mxu0 0
        %2702 = vmatpush.bf16.xpose.msra.mxu0 0
        %2703 = vmatpush.bf16.xpose.msra.mxu0 0
        %2704 = vmatpush.bf16.xpose.msra.mxu0 %v2696
        %2705 = vmatpush.bf16.xpose.msra.mxu0 %v2693
        %2706 = vmatmul.bf16.gmra.mxu0 %v2690
        %v2707 = vpop.f32.mrf.mxu0
        %v2708 = vadd.f32 0.0, %v2707
        %v2709 = vpop.f32.mrf.mxu0
        %2710 = vdwg.mxu0
        %v2714 = vunpack.c.l.b16 %v2555
        %v2715 = vunpack.c.l.b16 %v2556
        %v2716 = vunpack.c.l.b16 %v2557
        %v2717 = vpack.c.b16 %v2715, %v2714
        %v2718 = vpack.c.b16 %v2716, %v2716
        %v2720 = vsel %vm2013, %v1439, 0
        %v2723 = vsel %vm2013, %v2717, 0
        %v2726 = vsel %vm2013, %v2718, 0
        %2728 = vmatpush.bf16.xpose.msra.mxu0 0
        %2729 = vmatpush.bf16.xpose.msra.mxu0 0
        %2730 = vmatpush.bf16.xpose.msra.mxu0 0
        %2731 = vmatpush.bf16.xpose.msra.mxu0 0
        %2732 = vmatpush.bf16.xpose.msra.mxu0 0
        %2733 = vmatpush.bf16.xpose.msra.mxu0 0
        %2734 = vmatpush.bf16.xpose.msra.mxu0 %v2726
        %2735 = vmatpush.bf16.xpose.msra.mxu0 %v2723
        %2736 = vmatmul.bf16.gmra.mxu0 %v2720
        %v2737 = vpop.f32.mrf.mxu0
        %v2738 = vadd.f32 0.0, %v2737
        %v2739 = vpop.f32.mrf.mxu0
        %2740 = vdwg.mxu0
        %v2744 = vunpack.c.l.b16 %v2558
        %v2745 = vunpack.c.l.b16 %v2559
        %v2746 = vunpack.c.l.b16 %v2560
        %v2747 = vpack.c.b16 %v2745, %v2744
        %v2748 = vpack.c.b16 %v2746, %v2746
        %v2750 = vsel %vm2013, %v1440, 0
        %v2753 = vsel %vm2013, %v2747, 0
        %v2756 = vsel %vm2013, %v2748, 0
        %2758 = vmatpush.bf16.xpose.msra.mxu0 0
        %2759 = vmatpush.bf16.xpose.msra.mxu0 0
        %2760 = vmatpush.bf16.xpose.msra.mxu0 0
        %2761 = vmatpush.bf16.xpose.msra.mxu0 0
        %2762 = vmatpush.bf16.xpose.msra.mxu0 0
        %2763 = vmatpush.bf16.xpose.msra.mxu0 0
        %2764 = vmatpush.bf16.xpose.msra.mxu0 %v2756
        %2765 = vmatpush.bf16.xpose.msra.mxu0 %v2753
        %2766 = vmatmul.bf16.gmra.mxu0 %v2750
        %v2767 = vpop.f32.mrf.mxu0
        %v2768 = vadd.f32 0.0, %v2767
        %v2769 = vpop.f32.mrf.mxu0
        %2770 = vdwg.mxu0
        %v2774 = vunpack.c.l.b16 %v2561
        %v2775 = vunpack.c.l.b16 %v2562
        %v2776 = vunpack.c.l.b16 %v2563
        %v2777 = vpack.c.b16 %v2775, %v2774
        %v2778 = vpack.c.b16 %v2776, %v2776
        %v2780 = vsel %vm2013, %v1441, 0
        %v2783 = vsel %vm2013, %v2777, 0
        %v2786 = vsel %vm2013, %v2778, 0
        %2788 = vmatpush.bf16.xpose.msra.mxu0 0
        %2789 = vmatpush.bf16.xpose.msra.mxu0 0
        %2790 = vmatpush.bf16.xpose.msra.mxu0 0
        %2791 = vmatpush.bf16.xpose.msra.mxu0 0
        %2792 = vmatpush.bf16.xpose.msra.mxu0 0
        %2793 = vmatpush.bf16.xpose.msra.mxu0 0
        %2794 = vmatpush.bf16.xpose.msra.mxu0 %v2786
        %2795 = vmatpush.bf16.xpose.msra.mxu0 %v2783
        %2796 = vmatmul.bf16.gmra.mxu0 %v2780
        %v2797 = vpop.f32.mrf.mxu0
        %v2798 = vadd.f32 0.0, %v2797
        %v2799 = vpop.f32.mrf.mxu0
        %2800 = vdwg.mxu0
        %v2804 = vunpack.c.l.b16 %v2564
        %v2805 = vunpack.c.l.b16 %v2565
        %v2806 = vunpack.c.l.b16 %v2566
        %v2807 = vpack.c.b16 %v2805, %v2804
        %v2808 = vpack.c.b16 %v2806, %v2806
        %v2810 = vsel %vm2013, %v1442, 0
        %v2813 = vsel %vm2013, %v2807, 0
        %v2816 = vsel %vm2013, %v2808, 0
        %2818 = vmatpush.bf16.xpose.msra.mxu0 0
        %2819 = vmatpush.bf16.xpose.msra.mxu0 0
        %2820 = vmatpush.bf16.xpose.msra.mxu0 0
        %2821 = vmatpush.bf16.xpose.msra.mxu0 0
        %2822 = vmatpush.bf16.xpose.msra.mxu0 0
        %2823 = vmatpush.bf16.xpose.msra.mxu0 0
        %2824 = vmatpush.bf16.xpose.msra.mxu0 %v2816
        %2825 = vmatpush.bf16.xpose.msra.mxu0 %v2813
        %2826 = vmatmul.bf16.gmra.mxu0 %v2810
        %v2827 = vpop.f32.mrf.mxu0
        %v2828 = vadd.f32 0.0, %v2827
        %v2829 = vpop.f32.mrf.mxu0
        %2830 = vdwg.mxu0
        %v2834 = vunpack.c.l.b16 %v2567
        %v2835 = vunpack.c.l.b16 %v2568
        %v2836 = vunpack.c.l.b16 %v2569
        %v2837 = vpack.c.b16 %v2835, %v2834
        %v2838 = vpack.c.b16 %v2836, %v2836
        %v2840 = vsel %vm2013, %v1443, 0
        %v2843 = vsel %vm2013, %v2837, 0
        %v2846 = vsel %vm2013, %v2838, 0
        %2848 = vmatpush.bf16.xpose.msra.mxu0 0
        %2849 = vmatpush.bf16.xpose.msra.mxu0 0
        %2850 = vmatpush.bf16.xpose.msra.mxu0 0
        %2851 = vmatpush.bf16.xpose.msra.mxu0 0
        %2852 = vmatpush.bf16.xpose.msra.mxu0 0
        %2853 = vmatpush.bf16.xpose.msra.mxu0 0
        %2854 = vmatpush.bf16.xpose.msra.mxu0 %v2846
        %2855 = vmatpush.bf16.xpose.msra.mxu0 %v2843
        %2856 = vmatmul.bf16.gmra.mxu0 %v2840
        %v2857 = vpop.f32.mrf.mxu0
        %v2858 = vadd.f32 0.0, %v2857
        %v2859 = vpop.f32.mrf.mxu0
        %2860 = vdwg.mxu0
        %v2864 = vunpack.c.l.b16 %v2570
        %v2865 = vunpack.c.l.b16 %v2571
        %v2866 = vunpack.c.l.b16 %v2572
        %v2867 = vpack.c.b16 %v2865, %v2864
        %v2868 = vpack.c.b16 %v2866, %v2866
        %v2870 = vsel %vm2013, %v1444, 0
        %v2873 = vsel %vm2013, %v2867, 0
        %v2876 = vsel %vm2013, %v2868, 0
        %2878 = vmatpush.bf16.xpose.msra.mxu0 0
        %2879 = vmatpush.bf16.xpose.msra.mxu0 0
        %2880 = vmatpush.bf16.xpose.msra.mxu0 0
        %2881 = vmatpush.bf16.xpose.msra.mxu0 0
        %2882 = vmatpush.bf16.xpose.msra.mxu0 0
        %2883 = vmatpush.bf16.xpose.msra.mxu0 0
        %2884 = vmatpush.bf16.xpose.msra.mxu0 %v2876
        %2885 = vmatpush.bf16.xpose.msra.mxu0 %v2873
        %2886 = vmatmul.bf16.gmra.mxu0 %v2870
        %v2887 = vpop.f32.mrf.mxu0
        %v2888 = vadd.f32 0.0, %v2887
        %v2889 = vpop.f32.mrf.mxu0
        %2890 = vdwg.mxu0
        %v2894 = vunpack.c.l.b16 %v2573
        %v2895 = vunpack.c.l.b16 %v2574
        %v2896 = vunpack.c.l.b16 %v2575
        %v2897 = vpack.c.b16 %v2895, %v2894
        %v2898 = vpack.c.b16 %v2896, %v2896
        %v2900 = vsel %vm2013, %v1445, 0
        %v2903 = vsel %vm2013, %v2897, 0
        %v2906 = vsel %vm2013, %v2898, 0
        %2908 = vmatpush.bf16.xpose.msra.mxu0 0
        %2909 = vmatpush.bf16.xpose.msra.mxu0 0
        %2910 = vmatpush.bf16.xpose.msra.mxu0 0
        %2911 = vmatpush.bf16.xpose.msra.mxu0 0
        %2912 = vmatpush.bf16.xpose.msra.mxu0 0
        %2913 = vmatpush.bf16.xpose.msra.mxu0 0
        %2914 = vmatpush.bf16.xpose.msra.mxu0 %v2906
        %2915 = vmatpush.bf16.xpose.msra.mxu0 %v2903
        %2916 = vmatmul.bf16.gmra.mxu0 %v2900
        %v2917 = vpop.f32.mrf.mxu0
        %v2918 = vadd.f32 0.0, %v2917
        %v2919 = vpop.f32.mrf.mxu0
        %2920 = vdwg.mxu0
        %v2924 = vunpack.c.l.b16 %v2576
        %v2925 = vunpack.c.l.b16 %v2577
        %v2926 = vunpack.c.l.b16 %v2578
        %v2927 = vpack.c.b16 %v2925, %v2924
        %v2928 = vpack.c.b16 %v2926, %v2926
        %v2930 = vsel %vm2013, %v1446, 0
        %v2933 = vsel %vm2013, %v2927, 0
        %v2936 = vsel %vm2013, %v2928, 0
        %2938 = vmatpush.bf16.xpose.msra.mxu0 0
        %2939 = vmatpush.bf16.xpose.msra.mxu0 0
        %2940 = vmatpush.bf16.xpose.msra.mxu0 0
        %2941 = vmatpush.bf16.xpose.msra.mxu0 0
        %2942 = vmatpush.bf16.xpose.msra.mxu0 0
        %2943 = vmatpush.bf16.xpose.msra.mxu0 0
        %2944 = vmatpush.bf16.xpose.msra.mxu0 %v2936
        %2945 = vmatpush.bf16.xpose.msra.mxu0 %v2933
        %2946 = vmatmul.bf16.gmra.mxu0 %v2930
        %v2947 = vpop.f32.mrf.mxu0
        %v2948 = vadd.f32 0.0, %v2947
        %v2949 = vpop.f32.mrf.mxu0
        %2950 = vdwg.mxu0
        %v2954 = vunpack.c.l.b16 %v2579
        %v2955 = vunpack.c.l.b16 %v2580
        %v2956 = vunpack.c.l.b16 %v2581
        %v2957 = vpack.c.b16 %v2955, %v2954
        %v2958 = vpack.c.b16 %v2956, %v2956
        %v2960 = vsel %vm2013, %v1447, 0
        %v2963 = vsel %vm2013, %v2957, 0
        %v2966 = vsel %vm2013, %v2958, 0
        %2968 = vmatpush.bf16.xpose.msra.mxu0 0
        %2969 = vmatpush.bf16.xpose.msra.mxu0 0
        %2970 = vmatpush.bf16.xpose.msra.mxu0 0
        %2971 = vmatpush.bf16.xpose.msra.mxu0 0
        %2972 = vmatpush.bf16.xpose.msra.mxu0 0
        %2973 = vmatpush.bf16.xpose.msra.mxu0 0
        %2974 = vmatpush.bf16.xpose.msra.mxu0 %v2966
        %2975 = vmatpush.bf16.xpose.msra.mxu0 %v2963
        %2976 = vmatmul.bf16.gmra.mxu0 %v2960
        %v2977 = vpop.f32.mrf.mxu0
        %v2978 = vadd.f32 0.0, %v2977
        %v2979 = vpop.f32.mrf.mxu0
        %2980 = vdwg.mxu0
        %v2984 = vunpack.c.l.b16 %v2582
        %v2985 = vunpack.c.l.b16 %v2583
        %v2986 = vunpack.c.l.b16 %v2584
        %v2987 = vpack.c.b16 %v2985, %v2984
        %v2988 = vpack.c.b16 %v2986, %v2986
        %v2990 = vsel %vm2013, %v1448, 0
        %v2993 = vsel %vm2013, %v2987, 0
        %v2996 = vsel %vm2013, %v2988, 0
        %2998 = vmatpush.bf16.xpose.msra.mxu0 0
        %2999 = vmatpush.bf16.xpose.msra.mxu0 0
        %3000 = vmatpush.bf16.xpose.msra.mxu0 0
        %3001 = vmatpush.bf16.xpose.msra.mxu0 0
        %3002 = vmatpush.bf16.xpose.msra.mxu0 0
        %3003 = vmatpush.bf16.xpose.msra.mxu0 0
        %3004 = vmatpush.bf16.xpose.msra.mxu0 %v2996
        %3005 = vmatpush.bf16.xpose.msra.mxu0 %v2993
        %3006 = vmatmul.bf16.gmra.mxu0 %v2990
        %v3007 = vpop.f32.mrf.mxu0
        %v3008 = vadd.f32 0.0, %v3007
        %v3009 = vpop.f32.mrf.mxu0
        %3010 = vdwg.mxu0
        %v3014 = vunpack.c.l.b16 %v2585
        %v3015 = vunpack.c.l.b16 %v2586
        %v3016 = vunpack.c.l.b16 %v2587
        %v3017 = vpack.c.b16 %v3015, %v3014
        %v3018 = vpack.c.b16 %v3016, %v3016
        %v3020 = vsel %vm2013, %v1449, 0
        %v3023 = vsel %vm2013, %v3017, 0
        %v3026 = vsel %vm2013, %v3018, 0
        %3028 = vmatpush.bf16.xpose.msra.mxu0 0
        %3029 = vmatpush.bf16.xpose.msra.mxu0 0
        %3030 = vmatpush.bf16.xpose.msra.mxu0 0
        %3031 = vmatpush.bf16.xpose.msra.mxu0 0
        %3032 = vmatpush.bf16.xpose.msra.mxu0 0
        %3033 = vmatpush.bf16.xpose.msra.mxu0 0
        %3034 = vmatpush.bf16.xpose.msra.mxu0 %v3026
        %3035 = vmatpush.bf16.xpose.msra.mxu0 %v3023
        %3036 = vmatmul.bf16.gmra.mxu0 %v3020
        %v3037 = vpop.f32.mrf.mxu0
        %v3038 = vadd.f32 0.0, %v3037
        %v3039 = vpop.f32.mrf.mxu0
        %3040 = vdwg.mxu0
        %v3044 = vunpack.c.l.b16 %v2588
        %v3045 = vunpack.c.l.b16 %v2589
        %v3046 = vunpack.c.l.b16 %v2590
        %v3047 = vpack.c.b16 %v3045, %v3044
        %v3048 = vpack.c.b16 %v3046, %v3046
        %v3050 = vsel %vm2013, %v1450, 0
        %v3053 = vsel %vm2013, %v3047, 0
        %v3056 = vsel %vm2013, %v3048, 0
        %3058 = vmatpush.bf16.xpose.msra.mxu0 0
        %3059 = vmatpush.bf16.xpose.msra.mxu0 0
        %3060 = vmatpush.bf16.xpose.msra.mxu0 0
        %3061 = vmatpush.bf16.xpose.msra.mxu0 0
        %3062 = vmatpush.bf16.xpose.msra.mxu0 0
        %3063 = vmatpush.bf16.xpose.msra.mxu0 0
        %3064 = vmatpush.bf16.xpose.msra.mxu0 %v3056
        %3065 = vmatpush.bf16.xpose.msra.mxu0 %v3053
        %3066 = vmatmul.bf16.gmra.mxu0 %v3050
        %v3067 = vpop.f32.mrf.mxu0
        %v3068 = vadd.f32 0.0, %v3067
        %v3069 = vpop.f32.mrf.mxu0
        %3070 = vdwg.mxu0
        %3071 = vxpose.xlu0.b32.start [1/16] %v2618, 128
        %3072 = vxpose.xlu0.b32.cont [2/16] %v2648, 128
        %3073 = vxpose.xlu0.b32.cont [3/16] %v2678, 128
        %3074 = vxpose.xlu0.b32.cont [4/16] %v2708, 128
        %3075 = vxpose.xlu0.b32.cont [5/16] %v2738, 128
        %3076 = vxpose.xlu0.b32.cont [6/16] %v2768, 128
        %3077 = vxpose.xlu0.b32.cont [7/16] %v2798, 128
        %3078 = vxpose.xlu0.b32.cont [8/16] %v2828, 128
        %3079 = vxpose.xlu0.b32.cont [9/16] %v2858, 128
        %3080 = vxpose.xlu0.b32.cont [10/16] %v2888, 128
        %3081 = vxpose.xlu0.b32.cont [11/16] %v2918, 128
        %3082 = vxpose.xlu0.b32.cont [12/16] %v2948, 128
        %3083 = vxpose.xlu0.b32.cont [13/16] %v2978, 128
        %3084 = vxpose.xlu0.b32.cont [14/16] %v3008, 128
        %3085 = vxpose.xlu0.b32.cont [15/16] %v3038, 128
        %3086 = vxpose.xlu0.b32.end [16/16] %v3068, 128
        %v3087 = vpop.trf.xlu0
        %v3088 = vpop.trf.xlu0
        %v3089 = vpop.trf.xlu0
        %v3090 = vpop.trf.xlu0
        %v3091 = vpop.trf.xlu0
        %v3092 = vpop.trf.xlu0
        %v3093 = vpop.trf.xlu0
        %v3094 = vpop.trf.xlu0
        %v3095 = vpop.trf.xlu0
        %v3096 = vpop.trf.xlu0
        %v3097 = vpop.trf.xlu0
        %v3098 = vpop.trf.xlu0
        %v3099 = vpop.trf.xlu0
        %v3100 = vpop.trf.xlu0
        %v3101 = vpop.trf.xlu0
        %v3102 = vpop.trf.xlu0
        %v3103 = vpack.c.bf16 %v3088, %v3087
        %v3104 = vpack.c.bf16 %v3089, %v3089
        %v3105 = vld [vmem:[%s5] sm:$0xf]
        %v3106 = vld [vmem:[%s5 + $0x4] sm:$0xf]
        %v3107 = vld [vmem:[%s5 + $0x8] sm:$0xf]
        %v3108 = vld [vmem:[%s5 + $0xc] sm:$0xf]
        %v3109 = vld [vmem:[%s5 + $0x10] sm:$0xf]
        %v3110 = vld [vmem:[%s5 + $0x14] sm:$0xf]
        %v3111 = vld [vmem:[%s5 + $0x18] sm:$0xf]
        %v3112 = vld [vmem:[%s5 + $0x1c] sm:$0xf]
        %v3113 = vld [vmem:[%s5 + $0x20] sm:$0xf]
        %v3114 = vld [vmem:[%s5 + $0x24] sm:$0xf]
        %v3115 = vld [vmem:[%s5 + $0x28] sm:$0xf]
        %v3116 = vld [vmem:[%s5 + $0x2c] sm:$0xf]
        %v3117 = vld [vmem:[%s5 + $0x30] sm:$0xf]
        %v3118 = vld [vmem:[%s5 + $0x34] sm:$0xf]
        %v3119 = vld [vmem:[%s5 + $0x38] sm:$0xf]
        %v3120 = vld [vmem:[%s5 + $0x3c] sm:$0xf]
        %v3121 = vld [vmem:[%s6] sm:$0x1]
        %v3123 = vperm.slane %v3121, 0
        %v3141 = vunpack.c.l.b16 %v3105
        %v3142 = vunpack.c.l.b16 %v3106
        %v3143 = vunpack.c.l.b16 %v3107
        %v3144 = vunpack.c.l.b16 %v3108
        %v3145 = vunpack.c.l.b16 %v3109
        %v3146 = vunpack.c.l.b16 %v3110
        %v3147 = vunpack.c.l.b16 %v3111
        %v3148 = vunpack.c.l.b16 %v3112
        %v3149 = vunpack.c.l.b16 %v3113
        %v3150 = vunpack.c.l.b16 %v3114
        %v3151 = vunpack.c.l.b16 %v3115
        %v3152 = vunpack.c.l.b16 %v3116
        %v3153 = vunpack.c.l.b16 %v3117
        %v3154 = vunpack.c.l.b16 %v3118
        %v3155 = vunpack.c.l.b16 %v3119
        %v3156 = vunpack.c.l.b16 %v3120
        %v3157 = vpack.c.b16 %v3142, %v3141
        %v3158 = vpack.c.b16 %v3144, %v3143
        %v3159 = vpack.c.b16 %v3146, %v3145
        %v3160 = vpack.c.b16 %v3148, %v3147
        %v3161 = vpack.c.b16 %v3150, %v3149
        %v3162 = vpack.c.b16 %v3152, %v3151
        %v3163 = vpack.c.b16 %v3154, %v3153
        %v3164 = vpack.c.b16 %v3156, %v3155
        %3173 = vmatpush.bf16.msra.mxu0 %v3164
        %3174 = vmatpush.bf16.msra.mxu0 %v3163
        %3175 = vmatpush.bf16.msra.mxu0 %v3162
        %3176 = vmatpush.bf16.msra.mxu0 %v3161
        %3177 = vmatpush.bf16.msra.mxu0 %v3160
        %3178 = vmatpush.bf16.msra.mxu0 %v3159
        %3179 = vmatpush.bf16.msra.mxu0 %v3158
        %3180 = vmatpush.bf16.msra.mxu0 %v3157
        %3181 = vmatmul.bf16.gmra.mxu0 %v3103
        %v3182 = vpop.f32.mrf.mxu0
        %v3183 = vadd.f32 %v3123, %v3182
        %v3184 = vpop.f32.mrf.mxu0
        %v3185 = vadd.f32 %v3123, %v3184
        %3186 = vmatmul.bf16.gmra.mxu0 %v3104
        %v3187 = vpop.f32.mrf.mxu0
        %v3188 = vadd.f32 %v3123, %v3187
        %v3189 = vpop.f32.mrf.mxu0
        %3190 = vdwg.mxu0
        %v3191 = vadd.f32 %v3183, %v471
        %v3192 = vadd.f32 %v3185, %v472
        %v3193 = vadd.f32 %v3188, %v473
        %v3194 = vadd.f32 %v3191, %v3192
        %v3195 = vsel %vm475, %v3193, 0.0
        %v3196 = vadd.f32 %v3194, %v3195
        %3197 = vadd.xlane.f32.xlu0 %v3196
        %v3198 = vpop.xlane.xlu0 %3197
        %v3199 = vrot.slane %v3198, 4
        %v3200 = vadd.f32 %v3198, %v3199
        %v3201 = vrot.slane %v3200, 2
        %v3202 = vadd.f32 %v3200, %v3201
        %v3203 = vrot.slane %v3202, 1
        %v3204 = vadd.f32 %v3202, %v3203
        %s3205 = vtos %v3204
        %v3206 = vmul.f32 %v3191, %v3191
        %v3207 = vmul.f32 %v3192, %v3192
        %v3208 = vmul.f32 %v3193, %v3193
        %v3209 = vadd.f32 %v3206, %v3207
        %v3210 = vsel %vm475, %v3208, 0.0
        %v3211 = vadd.f32 %v3209, %v3210
        %3212 = vadd.xlane.f32.xlu0 %v3211
        %v3213 = vpop.xlane.xlu0 %3212
        %v3214 = vrot.slane %v3213, 4
        %v3215 = vadd.f32 %v3213, %v3214
        %v3216 = vrot.slane %v3215, 2
        %v3217 = vadd.f32 %v3215, %v3216
        %v3218 = vrot.slane %v3217, 1
        %v3219 = vadd.f32 %v3217, %v3218
        %s3220 = vtos %v3219
        %s3221 = smul.f32 %s3205, 0.0006127451
        %s3222 = smul.f32 %s3220, 0.0006127451
        %s3223 = smul.f32 %s3221, %s3221
        %s3224 = ssub.f32 %s3222, %s3223
        %v3225 = vstv %s3221
        %v3226 = vsub.f32 %v3191, %v3225
        %v3227 = vsub.f32 %v3192, %v3225
        %v3228 = vsub.f32 %v3193, %v3225
        %s3229 = sadd.f32 %s3224, 1e-05
        %v3230 = vstv %s3229
        %v3231 = vrsqrt.pop %v3230
        %v3232 = vmul.f32 %v3231, %v3230
        %v3233 = vmul.f32 %v3232, %v3231
        %v3234 = vmul.f32 0.5, %v3233
        %v3235 = vsub.f32 1.5, %v3234
        %v3236 = vmul.f32 %v3231, %v3235
        %vm3237 = vweird.f32 %v3230
        %vm3238 = vweird.f32 %v3231
        %vm3239 = vmor %vm3237, %vm3238
        %v3240 = vsel %vm3239, %v3231, %v3236
        %s3241 = vtos %v3240
        %v3242 = vstv %s3241
        %v3243 = vmul.f32 %v3226, %v3242
        %v3244 = vmul.f32 %v3227, %v3242
        %v3245 = vmul.f32 %v3228, %v3242
        %v3246 = vld [vmem:[#allocation2] sm:$0xff]
        %v3247 = vld [vmem:[#allocation2 + $0x8] sm:$0xff]
        %v3248 = vld [vmem:[#allocation2 + $0x10] sm:$0x1]
        %v3249 = vmul.f32 %v3243, %v3246
        %v3250 = vmul.f32 %v3244, %v3247
        %v3251 = vmul.f32 %v3245, %v3248
        %v3252 = vld [vmem:[#allocation4] sm:$0xff]
        %v3253 = vld [vmem:[#allocation4 + $0x8] sm:$0xff]
        %v3254 = vld [vmem:[#allocation4 + $0x10] sm:$0x1]
        %v3255 = vadd.f32 %v3249, %v3252
        %v3256 = vadd.f32 %v3250, %v3253
        %v3257 = vadd.f32 %v3251, %v3254
        %v3258 = vpack.c.bf16 %v3256, %v3255
        %v3259 = vpack.c.bf16 %v3257, %v3257
        %v3260 = vld [vmem:[#allocation7] sm:$0xff]
        %v3261 = vld [vmem:[#allocation7 + $0x8] sm:$0xf]
        %v3262 = vld [vmem:[#allocation7 + $0xc] sm:$0xff]
        %v3263 = vld [vmem:[#allocation7 + $0x14] sm:$0xf]
        %v3264 = vld [vmem:[#allocation7 + $0x18] sm:$0xff]
        %v3265 = vld [vmem:[#allocation7 + $0x20] sm:$0xf]
        %v3266 = vld [vmem:[#allocation7 + $0x24] sm:$0xff]
        %v3267 = vld [vmem:[#allocation7 + $0x2c] sm:$0xf]
        %v3268 = vld [vmem:[#allocation7 + $0x30] sm:$0xff]
        %v3269 = vld [vmem:[#allocation7 + $0x38] sm:$0xf]
        %v3270 = vld [vmem:[#allocation7 + $0x3c] sm:$0xff]
        %v3271 = vld [vmem:[#allocation7 + $0x44] sm:$0xf]
        %v3272 = vld [vmem:[#allocation7 + $0x48] sm:$0xff]
        %v3273 = vld [vmem:[#allocation7 + $0x50] sm:$0xf]
        %v3274 = vld [vmem:[#allocation7 + $0x54] sm:$0xff]
        %v3275 = vld [vmem:[#allocation7 + $0x5c] sm:$0xf]
        %v3276 = vld [vmem:[#allocation7 + $0x60] sm:$0xff]
        %v3277 = vld [vmem:[#allocation7 + $0x68] sm:$0xf]
        %v3278 = vld [vmem:[#allocation7 + $0x6c] sm:$0xff]
        %v3279 = vld [vmem:[#allocation7 + $0x74] sm:$0xf]
        %v3280 = vld [vmem:[#allocation7 + $0x78] sm:$0xff]
        %v3281 = vld [vmem:[#allocation7 + $0x80] sm:$0xf]
        %v3282 = vld [vmem:[#allocation7 + $0x84] sm:$0xff]
        %v3283 = vld [vmem:[#allocation7 + $0x8c] sm:$0xf]
        %v3284 = vld [vmem:[#allocation7 + $0x90] sm:$0xff]
        %v3285 = vld [vmem:[#allocation7 + $0x98] sm:$0xf]
        %v3286 = vld [vmem:[#allocation7 + $0x9c] sm:$0xff]
        %v3287 = vld [vmem:[#allocation7 + $0xa4] sm:$0xf]
        %v3288 = vld [vmem:[#allocation7 + $0xa8] sm:$0xff]
        %v3289 = vld [vmem:[#allocation7 + $0xb0] sm:$0xf]
        %v3290 = vld [vmem:[#allocation7 + $0xb4] sm:$0xff]
        %v3291 = vld [vmem:[#allocation7 + $0xbc] sm:$0xf]
        %v3292 = vld [vmem:[%s8] sm:$0x7]
        %v3294 = vperm.slane %v3292, 0
        %v3295 = vperm.slane %v3292, 1
        %v3296 = vperm.slane %v3292, 2
        %v3332 = vunpack.c.l.b16 %v3260
        %v3333 = vunpack.c.h.b16 %v3260
        %v3334 = vunpack.c.l.b16 %v3261
        %v3335 = vunpack.c.l.b16 %v3262
        %v3336 = vunpack.c.h.b16 %v3262
        %v3337 = vunpack.c.l.b16 %v3263
        %v3338 = vunpack.c.l.b16 %v3264
        %v3339 = vunpack.c.h.b16 %v3264
        %v3340 = vunpack.c.l.b16 %v3265
        %v3341 = vunpack.c.l.b16 %v3266
        %v3342 = vunpack.c.h.b16 %v3266
        %v3343 = vunpack.c.l.b16 %v3267
        %v3344 = vunpack.c.l.b16 %v3268
        %v3345 = vunpack.c.h.b16 %v3268
        %v3346 = vunpack.c.l.b16 %v3269
        %v3347 = vunpack.c.l.b16 %v3270
        %v3348 = vunpack.c.h.b16 %v3270
        %v3349 = vunpack.c.l.b16 %v3271
        %v3350 = vunpack.c.l.b16 %v3272
        %v3351 = vunpack.c.h.b16 %v3272
        %v3352 = vunpack.c.l.b16 %v3273
        %v3353 = vunpack.c.l.b16 %v3274
        %v3354 = vunpack.c.h.b16 %v3274
        %v3355 = vunpack.c.l.b16 %v3275
        %v3356 = vunpack.c.l.b16 %v3276
        %v3357 = vunpack.c.h.b16 %v3276
        %v3358 = vunpack.c.l.b16 %v3277
        %v3359 = vunpack.c.l.b16 %v3278
        %v3360 = vunpack.c.h.b16 %v3278
        %v3361 = vunpack.c.l.b16 %v3279
        %v3362 = vunpack.c.l.b16 %v3280
        %v3363 = vunpack.c.h.b16 %v3280
        %v3364 = vunpack.c.l.b16 %v3281
        %v3365 = vunpack.c.l.b16 %v3282
        %v3366 = vunpack.c.h.b16 %v3282
        %v3367 = vunpack.c.l.b16 %v3283
        %v3368 = vunpack.c.l.b16 %v3284
        %v3369 = vunpack.c.h.b16 %v3284
        %v3370 = vunpack.c.l.b16 %v3285
        %v3371 = vunpack.c.l.b16 %v3286
        %v3372 = vunpack.c.h.b16 %v3286
        %v3373 = vunpack.c.l.b16 %v3287
        %v3374 = vunpack.c.l.b16 %v3288
        %v3375 = vunpack.c.h.b16 %v3288
        %v3376 = vunpack.c.l.b16 %v3289
        %v3377 = vunpack.c.l.b16 %v3290
        %v3378 = vunpack.c.h.b16 %v3290
        %v3379 = vunpack.c.l.b16 %v3291
        %v3380 = vpack.c.b16 %v3335, %v3332
        %v3381 = vpack.c.b16 %v3336, %v3333
        %v3382 = vpack.c.b16 %v3337, %v3334
        %v3383 = vpack.c.b16 %v3341, %v3338
        %v3384 = vpack.c.b16 %v3342, %v3339
        %v3385 = vpack.c.b16 %v3343, %v3340
        %v3386 = vpack.c.b16 %v3347, %v3344
        %v3387 = vpack.c.b16 %v3348, %v3345
        %v3388 = vpack.c.b16 %v3349, %v3346
        %v3389 = vpack.c.b16 %v3353, %v3350
        %v3390 = vpack.c.b16 %v3354, %v3351
        %v3391 = vpack.c.b16 %v3355, %v3352
        %v3392 = vpack.c.b16 %v3359, %v3356
        %v3393 = vpack.c.b16 %v3360, %v3357
        %v3394 = vpack.c.b16 %v3361, %v3358
        %v3395 = vpack.c.b16 %v3365, %v3362
        %v3396 = vpack.c.b16 %v3366, %v3363
        %v3397 = vpack.c.b16 %v3367, %v3364
        %v3398 = vpack.c.b16 %v3371, %v3368
        %v3399 = vpack.c.b16 %v3372, %v3369
        %v3400 = vpack.c.b16 %v3373, %v3370
        %v3401 = vpack.c.b16 %v3377, %v3374
        %v3402 = vpack.c.b16 %v3378, %v3375
        %v3403 = vpack.c.b16 %v3379, %v3376
        %3428 = vmatpush.bf16.msra.mxu0 %v3401
        %3429 = vmatpush.bf16.msra.mxu0 %v3398
        %3430 = vmatpush.bf16.msra.mxu0 %v3395
        %3431 = vmatpush.bf16.msra.mxu0 %v3392
        %3432 = vmatpush.bf16.msra.mxu0 %v3389
        %3433 = vmatpush.bf16.msra.mxu0 %v3386
        %3434 = vmatpush.bf16.msra.mxu0 %v3383
        %3435 = vmatpush.bf16.msra.mxu0 %v3380
        %3436 = vmatmul.bf16.gmra.mxu0 %v3258
        %v3437 = vpop.f32.mrf.mxu0
        %v3438 = vadd.f32 %v3294, %v3437
        %v3439 = vpop.f32.mrf.mxu0
        %v3440 = vadd.f32 %v3294, %v3439
        %3441 = vmatmul.bf16.gmra.mxu0 %v3259
        %v3442 = vpop.f32.mrf.mxu0
        %v3443 = vadd.f32 %v3294, %v3442
        %v3444 = vpop.f32.mrf.mxu0
        %3445 = vdwg.mxu0
        %3446 = vmatpush.bf16.msra.mxu0 %v3402
        %3447 = vmatpush.bf16.msra.mxu0 %v3399
        %3448 = vmatpush.bf16.msra.mxu0 %v3396
        %3449 = vmatpush.bf16.msra.mxu0 %v3393
        %3450 = vmatpush.bf16.msra.mxu0 %v3390
        %3451 = vmatpush.bf16.msra.mxu0 %v3387
        %3452 = vmatpush.bf16.msra.mxu0 %v3384
        %3453 = vmatpush.bf16.msra.mxu0 %v3381
        %3454 = vmatmul.bf16.gmra.mxu0 %v3258
        %v3455 = vpop.f32.mrf.mxu0
        %v3456 = vadd.f32 %v3295, %v3455
        %v3457 = vpop.f32.mrf.mxu0
        %v3458 = vadd.f32 %v3295, %v3457
        %3459 = vmatmul.bf16.gmra.mxu0 %v3259
        %v3460 = vpop.f32.mrf.mxu0
        %v3461 = vadd.f32 %v3295, %v3460
        %v3462 = vpop.f32.mrf.mxu0
        %3463 = vdwg.mxu0
        %3464 = vmatpush.bf16.msra.mxu0 %v3403
        %3465 = vmatpush.bf16.msra.mxu0 %v3400
        %3466 = vmatpush.bf16.msra.mxu0 %v3397
        %3467 = vmatpush.bf16.msra.mxu0 %v3394
        %3468 = vmatpush.bf16.msra.mxu0 %v3391
        %3469 = vmatpush.bf16.msra.mxu0 %v3388
        %3470 = vmatpush.bf16.msra.mxu0 %v3385
        %3471 = vmatpush.bf16.msra.mxu0 %v3382
        %3472 = vmatmul.bf16.gmra.mxu0 %v3258
        %v3473 = vpop.f32.mrf.mxu0
        %v3474 = vadd.f32 %v3296, %v3473
        %v3475 = vpop.f32.mrf.mxu0
        %v3476 = vadd.f32 %v3296, %v3475
        %3477 = vmatmul.bf16.gmra.mxu0 %v3259
        %v3478 = vpop.f32.mrf.mxu0
        %v3479 = vadd.f32 %v3296, %v3478
        %v3480 = vpop.f32.mrf.mxu0
        %3481 = vdwg.mxu0
        %v3482 = vmax.f32 %v3438, 0.0
        %v3483 = vmax.f32 %v3456, 0.0
        %v3484 = vmax.f32 %v3474, 0.0
        %v3485 = vmax.f32 %v3440, 0.0
        %v3486 = vmax.f32 %v3458, 0.0
        %v3487 = vmax.f32 %v3476, 0.0
        %v3488 = vmax.f32 %v3443, 0.0
        %v3489 = vmax.f32 %v3461, 0.0
        %v3490 = vmax.f32 %v3479, 0.0
        %v3491 = vpack.c.bf16 %v3485, %v3482
        %v3492 = vpack.c.bf16 %v3486, %v3483
        %v3493 = vpack.c.bf16 %v3487, %v3484
        %v3494 = vpack.c.bf16 %v3488, %v3488
        %v3495 = vpack.c.bf16 %v3489, %v3489
        %v3496 = vpack.c.bf16 %v3490, %v3490
        %v3497 = vld [vmem:[#allocation9] sm:$0xf]
        %v3498 = vld [vmem:[#allocation9 + $0x4] sm:$0xf]
        %v3499 = vld [vmem:[#allocation9 + $0x8] sm:$0xf]
        %v3500 = vld [vmem:[#allocation9 + $0xc] sm:$0xf]
        %v3501 = vld [vmem:[#allocation9 + $0x10] sm:$0xf]
        %v3502 = vld [vmem:[#allocation9 + $0x14] sm:$0xf]
        %v3503 = vld [vmem:[#allocation9 + $0x18] sm:$0xf]
        %v3504 = vld [vmem:[#allocation9 + $0x1c] sm:$0xf]
        %v3505 = vld [vmem:[#allocation9 + $0x20] sm:$0xf]
        %v3506 = vld [vmem:[#allocation9 + $0x24] sm:$0xf]
        %v3507 = vld [vmem:[#allocation9 + $0x28] sm:$0xf]
        %v3508 = vld [vmem:[#allocation9 + $0x2c] sm:$0xf]
        %v3509 = vld [vmem:[#allocation9 + $0x30] sm:$0xf]
        %v3510 = vld [vmem:[#allocation9 + $0x34] sm:$0xf]
        %v3511 = vld [vmem:[#allocation9 + $0x38] sm:$0xf]
        %v3512 = vld [vmem:[#allocation9 + $0x3c] sm:$0xf]
        %v3513 = vld [vmem:[#allocation9 + $0x40] sm:$0xf]
        %v3514 = vld [vmem:[#allocation9 + $0x44] sm:$0xf]
        %v3515 = vld [vmem:[#allocation9 + $0x48] sm:$0xf]
        %v3516 = vld [vmem:[#allocation9 + $0x4c] sm:$0xf]
        %v3517 = vld [vmem:[#allocation9 + $0x50] sm:$0xf]
        %v3518 = vld [vmem:[#allocation9 + $0x54] sm:$0xf]
        %v3519 = vld [vmem:[#allocation9 + $0x58] sm:$0xf]
        %v3520 = vld [vmem:[#allocation9 + $0x5c] sm:$0xf]
        %v3521 = vld [vmem:[#allocation9 + $0x60] sm:$0xf]
        %v3522 = vld [vmem:[#allocation9 + $0x64] sm:$0xf]
        %v3523 = vld [vmem:[#allocation9 + $0x68] sm:$0xf]
        %v3524 = vld [vmem:[#allocation9 + $0x6c] sm:$0xf]
        %v3525 = vld [vmem:[#allocation9 + $0x70] sm:$0xf]
        %v3526 = vld [vmem:[#allocation9 + $0x74] sm:$0xf]
        %v3527 = vld [vmem:[#allocation9 + $0x78] sm:$0xf]
        %v3528 = vld [vmem:[#allocation9 + $0x7c] sm:$0xf]
        %v3529 = vld [vmem:[#allocation9 + $0x80] sm:$0xf]
        %v3530 = vld [vmem:[#allocation9 + $0x84] sm:$0xf]
        %v3531 = vld [vmem:[#allocation9 + $0x88] sm:$0xf]
        %v3532 = vld [vmem:[#allocation9 + $0x8c] sm:$0xf]
        %v3533 = vld [vmem:[#allocation9 + $0x90] sm:$0xf]
        %v3534 = vld [vmem:[#allocation9 + $0x94] sm:$0xf]
        %v3535 = vld [vmem:[#allocation9 + $0x98] sm:$0xf]
        %v3536 = vld [vmem:[#allocation9 + $0x9c] sm:$0xf]
        %v3537 = vld [vmem:[#allocation9 + $0xa0] sm:$0xf]
        %v3538 = vld [vmem:[#allocation9 + $0xa4] sm:$0xf]
        %v3539 = vld [vmem:[#allocation9 + $0xa8] sm:$0xf]
        %v3540 = vld [vmem:[#allocation9 + $0xac] sm:$0xf]
        %v3541 = vld [vmem:[#allocation9 + $0xb0] sm:$0xf]
        %v3542 = vld [vmem:[#allocation9 + $0xb4] sm:$0xf]
        %v3543 = vld [vmem:[#allocation9 + $0xb8] sm:$0xf]
        %v3544 = vld [vmem:[#allocation9 + $0xbc] sm:$0xf]
        %v3545 = vld [vmem:[%s10] sm:$0x1]
        %v3547 = vperm.slane %v3545, 0
        %v3597 = vunpack.c.l.b16 %v3497
        %v3598 = vunpack.c.l.b16 %v3498
        %v3599 = vunpack.c.l.b16 %v3499
        %v3600 = vunpack.c.l.b16 %v3500
        %v3601 = vunpack.c.l.b16 %v3501
        %v3602 = vunpack.c.l.b16 %v3502
        %v3603 = vunpack.c.l.b16 %v3503
        %v3604 = vunpack.c.l.b16 %v3504
        %v3605 = vunpack.c.l.b16 %v3505
        %v3606 = vunpack.c.l.b16 %v3506
        %v3607 = vunpack.c.l.b16 %v3507
        %v3608 = vunpack.c.l.b16 %v3508
        %v3609 = vunpack.c.l.b16 %v3509
        %v3610 = vunpack.c.l.b16 %v3510
        %v3611 = vunpack.c.l.b16 %v3511
        %v3612 = vunpack.c.l.b16 %v3512
        %v3613 = vunpack.c.l.b16 %v3513
        %v3614 = vunpack.c.l.b16 %v3514
        %v3615 = vunpack.c.l.b16 %v3515
        %v3616 = vunpack.c.l.b16 %v3516
        %v3617 = vunpack.c.l.b16 %v3517
        %v3618 = vunpack.c.l.b16 %v3518
        %v3619 = vunpack.c.l.b16 %v3519
        %v3620 = vunpack.c.l.b16 %v3520
        %v3621 = vunpack.c.l.b16 %v3521
        %v3622 = vunpack.c.l.b16 %v3522
        %v3623 = vunpack.c.l.b16 %v3523
        %v3624 = vunpack.c.l.b16 %v3524
        %v3625 = vunpack.c.l.b16 %v3525
        %v3626 = vunpack.c.l.b16 %v3526
        %v3627 = vunpack.c.l.b16 %v3527
        %v3628 = vunpack.c.l.b16 %v3528
        %v3629 = vunpack.c.l.b16 %v3529
        %v3630 = vunpack.c.l.b16 %v3530
        %v3631 = vunpack.c.l.b16 %v3531
        %v3632 = vunpack.c.l.b16 %v3532
        %v3633 = vunpack.c.l.b16 %v3533
        %v3634 = vunpack.c.l.b16 %v3534
        %v3635 = vunpack.c.l.b16 %v3535
        %v3636 = vunpack.c.l.b16 %v3536
        %v3637 = vunpack.c.l.b16 %v3537
        %v3638 = vunpack.c.l.b16 %v3538
        %v3639 = vunpack.c.l.b16 %v3539
        %v3640 = vunpack.c.l.b16 %v3540
        %v3641 = vunpack.c.l.b16 %v3541
        %v3642 = vunpack.c.l.b16 %v3542
        %v3643 = vunpack.c.l.b16 %v3543
        %v3644 = vunpack.c.l.b16 %v3544
        %v3645 = vpack.c.b16 %v3598, %v3597
        %v3646 = vpack.c.b16 %v3600, %v3599
        %v3647 = vpack.c.b16 %v3602, %v3601
        %v3648 = vpack.c.b16 %v3604, %v3603
        %v3649 = vpack.c.b16 %v3606, %v3605
        %v3650 = vpack.c.b16 %v3608, %v3607
        %v3651 = vpack.c.b16 %v3610, %v3609
        %v3652 = vpack.c.b16 %v3612, %v3611
        %v3653 = vpack.c.b16 %v3614, %v3613
        %v3654 = vpack.c.b16 %v3616, %v3615
        %v3655 = vpack.c.b16 %v3618, %v3617
        %v3656 = vpack.c.b16 %v3620, %v3619
        %v3657 = vpack.c.b16 %v3622, %v3621
        %v3658 = vpack.c.b16 %v3624, %v3623
        %v3659 = vpack.c.b16 %v3626, %v3625
        %v3660 = vpack.c.b16 %v3628, %v3627
        %v3661 = vpack.c.b16 %v3630, %v3629
        %v3662 = vpack.c.b16 %v3632, %v3631
        %v3663 = vpack.c.b16 %v3634, %v3633
        %v3664 = vpack.c.b16 %v3636, %v3635
        %v3665 = vpack.c.b16 %v3638, %v3637
        %v3666 = vpack.c.b16 %v3640, %v3639
        %v3667 = vpack.c.b16 %v3642, %v3641
        %v3668 = vpack.c.b16 %v3644, %v3643
        %3693 = vmatpush.bf16.msra.mxu0 %v3652
        %3694 = vmatpush.bf16.msra.mxu0 %v3651
        %3695 = vmatpush.bf16.msra.mxu0 %v3650
        %3696 = vmatpush.bf16.msra.mxu0 %v3649
        %3697 = vmatpush.bf16.msra.mxu0 %v3648
        %3698 = vmatpush.bf16.msra.mxu0 %v3647
        %3699 = vmatpush.bf16.msra.mxu0 %v3646
        %3700 = vmatpush.bf16.msra.mxu0 %v3645
        %3701 = vmatmul.bf16.gmra.mxu0 %v3491
        %v3702 = vpop.f32.mrf.mxu0
        %v3703 = vadd.f32 %v3547, %v3702
        %v3704 = vpop.f32.mrf.mxu0
        %v3705 = vadd.f32 %v3547, %v3704
        %3706 = vmatmul.bf16.gmra.mxu0 %v3494
        %v3707 = vpop.f32.mrf.mxu0
        %v3708 = vadd.f32 %v3547, %v3707
        %v3709 = vpop.f32.mrf.mxu0
        %3710 = vdwg.mxu0
        %3711 = vmatpush.bf16.msra.mxu0 %v3660
        %3712 = vmatpush.bf16.msra.mxu0 %v3659
        %3713 = vmatpush.bf16.msra.mxu0 %v3658
        %3714 = vmatpush.bf16.msra.mxu0 %v3657
        %3715 = vmatpush.bf16.msra.mxu0 %v3656
        %3716 = vmatpush.bf16.msra.mxu0 %v3655
        %3717 = vmatpush.bf16.msra.mxu0 %v3654
        %3718 = vmatpush.bf16.msra.mxu0 %v3653
        %3719 = vmatmul.bf16.gmra.mxu0 %v3492
        %v3720 = vpop.f32.mrf.mxu0
        %v3721 = vadd.f32 %v3703, %v3720
        %v3722 = vpop.f32.mrf.mxu0
        %v3723 = vadd.f32 %v3705, %v3722
        %3724 = vmatmul.bf16.gmra.mxu0 %v3495
        %v3725 = vpop.f32.mrf.mxu0
        %v3726 = vadd.f32 %v3708, %v3725
        %v3727 = vpop.f32.mrf.mxu0
        %3728 = vdwg.mxu0
        %3729 = vmatpush.bf16.msra.mxu0 %v3668
        %3730 = vmatpush.bf16.msra.mxu0 %v3667
        %3731 = vmatpush.bf16.msra.mxu0 %v3666
        %3732 = vmatpush.bf16.msra.mxu0 %v3665
        %3733 = vmatpush.bf16.msra.mxu0 %v3664
        %3734 = vmatpush.bf16.msra.mxu0 %v3663
        %3735 = vmatpush.bf16.msra.mxu0 %v3662
        %3736 = vmatpush.bf16.msra.mxu0 %v3661
        %3737 = vmatmul.bf16.gmra.mxu0 %v3493
        %v3738 = vpop.f32.mrf.mxu0
        %v3739 = vadd.f32 %v3721, %v3738
        %v3740 = vpop.f32.mrf.mxu0
        %v3741 = vadd.f32 %v3723, %v3740
        %3742 = vmatmul.bf16.gmra.mxu0 %v3496
        %v3743 = vpop.f32.mrf.mxu0
        %v3744 = vadd.f32 %v3726, %v3743
        %v3745 = vpop.f32.mrf.mxu0
        %3746 = vdwg.mxu0
        %v3747 = vmax.f32 %v3739, 0.0
        %v3748 = vmax.f32 %v3741, 0.0
        %v3749 = vmax.f32 %v3744, 0.0
        %v3750 = vadd.f32 %v3747, %v3191
        %v3751 = vadd.f32 %v3748, %v3192
        %v3752 = vadd.f32 %v3749, %v3193
        %3753 = vst [vmem:[%s469] sm:$0xff] %v3750
        %3754 = vst [vmem:[%s469 + $0x8] sm:$0xff] %v3751
        %3755 = vst [vmem:[%s469 + $0x10] sm:$0x1] %v3752
        %p3756 = scmp.lt.s32.totalorder %s25, 1
        %s3757 = scalar_select %p3756, %s25, 1
        %s3758 = smul.addr %s3757, 3
        %s3759 = smul.addr %s3758, 8
        %s3760 = scalar_lea.vmem %s11, %s3759
        // Predicated region
        $region85: #{tpu_custom_call.1} parent=63 // pred_check
          %p3761 = pneg %p279
        $region86: #{tpu_custom_call.1} parent=63 // pred_check_branch
          %3763 = sbr.rel (%p3761) target = $region88
        $region87: #{tpu_custom_call.1} parent=63 // pred_region
          _
        $region88: #{tpu_custom_call.1} parent=63 // pred_fallthru
          _
      $region64: #{tpu_custom_call.1} parent=5 // pred_fallthru
        _
      %p3764 = scmp.le.s32.totalorder 2, %s20
      // Predicated region
      $region89: #{tpu_custom_call.1} parent=5 // pred_check
        %p3765 = pneg %p3764
      $region90: #{tpu_custom_call.1} parent=5 // pred_check_branch
        %3767 = sbr.rel (%p3765) target = $region92
      $region91: #{tpu_custom_call.1} parent=5 // pred_region
        %s3768 = ssub.s32 %s20, 2
        // Predicated region
        $region93: #{tpu_custom_call.1} parent=91 // pred_check
          %p3769 = pneg %p285
        $region94: #{tpu_custom_call.1} parent=91 // pred_check_branch
          %3771 = sbr.rel (%p3769) target = $region96
        $region95: #{tpu_custom_call.1} parent=91 // pred_region
          %p3772 = scmp.lt.s32.totalorder %s26, 1
          %s3773 = scalar_select %p3772, %s26, 1
          %s3774 = smul.addr %s3773, 3
          %s3775 = smul.addr %s3774, 8
          %s3776 = scalar_lea.vmem %s11, %s3775
        $region96: #{tpu_custom_call.1} parent=91 // pred_fallthru
          _
      $region92: #{tpu_custom_call.1} parent=5 // pred_fallthru
        _
    $region6: #{tpu_custom_call.1} parent=1 // loop_footer
      %s24 = sadd.s32 1, %s20
    $region7: #{tpu_custom_call.1} parent=1 // loop_footer_branch
      %19 = sbr.rel target = $region3
    $region8: #{tpu_custom_call.1} parent=1 // loop_exit
      _
    %3777 = vsyncpa [#allocation3], 1
    %s3778 = scalar_lea.sflag [#allocation3], 1
    %3779 = vsyncpa %s3778, 1
    %3780 = vsyncpa [#allocation5], 1
    %3781 = vsyncpa [#allocation8], 1

</llo_original>
